<compile_context>
chip_gen: v7x
topology: tpu7x:2x2x1
jax: 0.10.0
libtpu: 0.0.40
codegen_flags: <defaults>
</compile_context>

<pallas_src>
import functools

import numpy as np

import jax
import jax.numpy as jnp
from jax import lax
from jax.experimental import pallas as pl
from jax.experimental.pallas import tpu as pltpu


# Channel widths of the stand-in submodules.
C_IN, C0, C1, C2, C3 = 3, 8, 16, 32, 64   # image, f_in, x1, x2, x3 / f_out
N_OUT = 4                                  # number of kernel outputs


# ----------------------------------------------------------------------------
# Shared math: traced inside the Pallas kernel AND used as the pure-JAX reference
# ----------------------------------------------------------------------------

def _dot(a, b):
    return jnp.dot(a, b, preferred_element_type=jnp.float32)


def _normalize(x):
    # torch F.normalize(p=2, dim=channels, eps=1e-12): x / max(|x|_2, eps)
    #   == x * rsqrt(max(|x|^2, eps^2));  rsqrt runs on the otherwise-idle EUP.
    s = jnp.sum(x * x, axis=0, keepdims=True)          # channel (sublane) reduction
    return x * lax.rsqrt(jnp.maximum(s, 1e-24))


def _diff(fs, ft):
    d = _normalize(fs) - _normalize(ft)
    return d * d                                        # MSELoss(reduction='none')


def _forward_math(
    img0, img1, img2, img3,
    wfe0, bfe0, wfe1, bfe1, wfe2, bfe2, wfe3, bfe3, wfe4, bfe4,
    wbn1, wbn2, wbn3, bbn,
    wde1, bde1, wde2, bde2, wde3, bde3,
    wh_fout, wh_fin, wh_d1, wh_d2, wh_d3,
    pb1, pb2, up1, up2,
):
    """All tensors channel-major: (channels, N*H*W) with the spatial dim on lanes."""
    def conv(w, b, x):                                  # 1x1 conv + ReLU on the MXU
        return jnp.maximum(_dot(w, x) + b, 0.0)

    # ---- feature_extractor(normal_img) ----
    # TODO(synk): pretrained backbone is unspecified; stand-in is a multi-scale pyramid of
    # 1x1 convs applied to a pre-pooled image pyramid (pooling done in the XLA prologue).
    f_in  = conv(wfe0, bfe0, img0)                      # (8,  N*32*32)
    x1    = conv(wfe1, bfe1, img1)                      # (16, N*16*16)
    x2    = conv(wfe2, bfe2, img2)                      # (32, N*8*8)
    x3    = conv(wfe3, bfe3, img3)                      # (64, N*4*4)
    f_out = conv(wfe4, bfe4, x3)                        # (64, N*4*4)

    # ---- RD4AD_bn(x1, x2, x3) ----
    # TODO(synk): real BN_layer unspecified; stand-in per-image global-average-pools x1/x2
    # (one matmul against a block mean+broadcast matrix) and fuses with x3 channels.
    g1 = _dot(x1, pb1)                                  # (16, N*4*4)
    g2 = _dot(x2, pb2)                                  # (32, N*4*4)
    output1 = jnp.maximum(
        _dot(wbn1, g1) + _dot(wbn2, g2) + _dot(wbn3, x3) + bbn, 0.0)   # (64, N*4*4)

    # ---- RD4AD_decoder(output1) ----
    # TODO(synk): real de_resnet unspecified; stand-in is upsample + 1x1 conv, computed as
    # conv-at-coarse-resolution followed by nearest upsample (the two commute exactly).
    ft1 = _dot(_dot(wde1, output1) + bde1, up1)         # (16, N*16*16)
    ft2 = _dot(_dot(wde2, output1) + bde2, up2)         # (32, N*8*8)
    ft3 = _dot(wde3, output1) + bde3                    # (64, N*4*4)

    # ---- diffmap(fs_list=[x1,x2,x3], ft_list=[ft1,ft2,ft3]) ----  (exact semantics)
    d1 = _diff(x1, ft1)
    d2 = _diff(x2, ft2)
    d3 = _diff(x3, ft3)

    # ---- Decoder(encoder_output=f_out, concat_features=[f_in, d1, d2, d3]) ----
    # TODO(synk): real Decoder unspecified; stand-in fuses everything with a 1x1 conv into a
    # 1-channel mask.  concat->conv == sum of per-group convs; each group conv runs at its
    # native resolution (conv commutes with the nearest upsample applied in the epilogue).
    h_fin    = _dot(wh_fin, f_in)                       # (1, N*32*32)
    h_d1     = _dot(wh_d1, d1)                          # (1, N*16*16)
    h_d2     = _dot(wh_d2, d2)                          # (1, N*8*8)
    h_coarse = _dot(wh_fout, f_out) + _dot(wh_d3, d3)   # (1, N*4*4)
    return h_fin, h_d1, h_d2, h_coarse


# ----------------------------------------------------------------------------
# Pallas kernel: the whole forward, fused, gridless (single block, all in VMEM)
# ----------------------------------------------------------------------------

def _fused_kernel(*refs):
    in_refs, out_refs = refs[:-N_OUT], refs[-N_OUT:]
    outs = _forward_math(*(r[...] for r in in_refs))
    for o_ref, val in zip(out_refs, outs):
        o_ref[...] = val.astype(o_ref.dtype)


# ----------------------------------------------------------------------------
# Host-side helpers (layout conversion, image pyramid, constant matrices)
# ----------------------------------------------------------------------------

def _to_channel_major(x_nchw):
    n, c, h, w = x_nchw.shape
    return jnp.transpose(x_nchw, (1, 0, 2, 3)).reshape(c, n * h * w)


def _avgpool_nchw(x, k):
    n, c, h, w = x.shape
    return x.reshape(n, c, h // k, k, w // k, k).mean(axis=(3, 5))


def _upsample_nearest_nchw(x, k):
    return jnp.repeat(jnp.repeat(x, k, axis=2), k, axis=3)


def _gap_broadcast_matrix(n, hw_src, hw_dst):
    # (n*hw_src, n*hw_dst): per-image spatial mean broadcast onto the coarse grid.
    # Built with numpy -> baked into the executable as a constant (no runtime kron).
    block = np.full((hw_src, hw_dst), 1.0 / hw_src, np.float32)
    return np.kron(np.eye(n, dtype=np.float32), block)


def _upsample_matrix(n, h, w, k):
    # (n*h*w, n*h*k*w*k): 0/1 nearest-neighbour replication on flattened (n, h, w) indices.
    def rep(m):
        return np.kron(np.eye(m, dtype=np.float32), np.ones((1, k), np.float32))
    return np.kron(np.eye(n, dtype=np.float32), np.kron(rep(h), rep(w)))


# ----------------------------------------------------------------------------
# Deterministic parameter construction (channel-major weights: (C_out, C_in))
# ----------------------------------------------------------------------------

def _lin(key, cout, cin):
    w = jax.random.normal(key, (cout, cin), jnp.float32) * (1.0 / float(cin) ** 0.5)
    b = jnp.zeros((cout, 1), jnp.float32)
    return w, b


def make_params(key):
    ks = jax.random.split(key, 10)
    return {
        "fe0": _lin(ks[0], C0, C_IN),        # -> f_in   (N,  8, 32, 32)
        "fe1": _lin(ks[1], C1, C_IN),        # -> x1     (N, 16, 16, 16)
        "fe2": _lin(ks[2], C2, C_IN),        # -> x2     (N, 32,  8,  8)
        "fe3": _lin(ks[3], C3, C_IN),        # -> x3     (N, 64,  4,  4)
        "fe4": _lin(ks[4], C3, C3),          # -> f_out  (N, 64,  4,  4)
        "bn":  _lin(ks[5], C3, C1 + C2 + C3),
        "de1": _lin(ks[6], C1, C3),
        "de2": _lin(ks[7], C2, C3),
        "de3": _lin(ks[8], C3, C3),
        "head": _lin(ks[9], 1, C3 + C0 + C1 + C2 + C3),
    }


# ----------------------------------------------------------------------------
# Forward pass (mirrors Unsupervised_for_test.forward)
# ----------------------------------------------------------------------------

def unsupervised_for_test_forward(params, normal_img, *, use_pallas=True):
    n, c, h, w = normal_img.shape
    assert c == C_IN and h % 8 == 0 and w % 8 == 0

    # --- XLA prologue: image pyramid + ONE layout conversion to channel-major slabs ---
    p1 = _avgpool_nchw(normal_img, 2)
    p2 = _avgpool_nchw(p1, 2)
    p3 = _avgpool_nchw(p2, 2)
    img0, img1, img2, img3 = (_to_channel_major(x) for x in (normal_img, p1, p2, p3))

    wbn, bbn = params["bn"]
    whead, bhead = params["head"]
    inputs = (
        img0, img1, img2, img3,
        *params["fe0"], *params["fe1"], *params["fe2"], *params["fe3"], *params["fe4"],
        wbn[:, :C1], wbn[:, C1:C1 + C2], wbn[:, C1 + C2:], bbn,
        *params["de1"], *params["de2"], *params["de3"],
        whead[:, :C3],                                   # f_out group
        whead[:, C3:C3 + C0],                            # f_in group
        whead[:, C3 + C0:C3 + C0 + C1],                  # diff-1 group
        whead[:, C3 + C0 + C1:C3 + C0 + C1 + C2],        # diff-2 group
        whead[:, C3 + C0 + C1 + C2:],                    # diff-3 group
        _gap_broadcast_matrix(n, (h // 2) * (w // 2), (h // 8) * (w // 8)),
        _gap_broadcast_matrix(n, (h // 4) * (w // 4), (h // 8) * (w // 8)),
        _upsample_matrix(n, h // 8, w // 8, 4),
        _upsample_matrix(n, h // 8, w // 8, 2),
    )

    out_shape = (
        jax.ShapeDtypeStruct((1, n * h * w), jnp.float32),
        jax.ShapeDtypeStruct((1, n * (h // 2) * (w // 2)), jnp.float32),
        jax.ShapeDtypeStruct((1, n * (h // 4) * (w // 4)), jnp.float32),
        jax.ShapeDtypeStruct((1, n * (h // 8) * (w // 8)), jnp.float32),
    )

    if use_pallas:
        vmem = pl.BlockSpec(memory_space=pltpu.MemorySpace.VMEM)
        h_fin, h_d1, h_d2, h_coarse = pl.pallas_call(
            _fused_kernel,
            out_shape=out_shape,
            in_specs=[vmem] * len(inputs),
            out_specs=tuple(pl.BlockSpec(memory_space=pltpu.MemorySpace.VMEM)
                            for _ in out_shape),
        )(*inputs)
    else:
        h_fin, h_d1, h_d2, h_coarse = _forward_math(*inputs)   # pure-JAX reference path

    # --- XLA epilogue: nearest-upsample the tiny 1-channel contributions, sum, add bias ---
    def to_map(row, hh, ww):
        return jnp.transpose(row.reshape(1, n, hh, ww), (1, 0, 2, 3))

    predicted_mask = (
        to_map(h_fin, h, w)
        + _upsample_nearest_nchw(to_map(h_d1, h // 2, w // 2), 2)
        + _upsample_nearest_nchw(to_map(h_d2, h // 4, w // 4), 4)
        + _upsample_nearest_nchw(to_map(h_coarse, h // 8, w // 8), 8)
        + bhead[0, 0]
    )
    return predicted_mask                                # (N, 1, H, W)


# ----------------------------------------------------------------------------

if __name__ == "__main__":
    key = jax.random.PRNGKey(0)
    k_param, k_img = jax.random.split(key)

    params = make_params(k_param)
    normal_img = jax.random.normal(k_img, (2, 3, 32, 32), jnp.float32)   # NCHW

    fwd = jax.jit(functools.partial(unsupervised_for_test_forward, use_pallas=True))
    mask = jax.block_until_ready(fwd(params, normal_img))

    assert mask.shape == (2, 1, 32, 32), mask.shape
    assert bool(jnp.all(jnp.isfinite(mask)))

    # Pure-JAX reference of the identical stand-in math; loose tolerance covers only
    # MXU-vs-XLA f32 matmul rounding differences.
    ref_fn = jax.jit(functools.partial(unsupervised_for_test_forward, use_pallas=False))
    ref = jax.block_until_ready(ref_fn(params, normal_img))
    err = float(jnp.max(jnp.abs(mask - ref)))
    assert err < 0.1 * (1.0 + float(jnp.max(jnp.abs(ref)))), err

    print("KERNEL_OK")
</pallas_src>

<mosaic_0001>
module attributes {stable_mosaic.version = 11 : i64} {
  func.func @_fused_kernel(%arg0: memref<3x2048xf32, #tpu.memory_space<vmem>>, %arg1: memref<3x512xf32, #tpu.memory_space<vmem>>, %arg2: memref<3x128xf32, #tpu.memory_space<vmem>>, %arg3: memref<3x32xf32, #tpu.memory_space<vmem>>, %arg4: memref<8x3xf32, #tpu.memory_space<vmem>>, %arg5: memref<8x1xf32, #tpu.memory_space<vmem>>, %arg6: memref<16x3xf32, #tpu.memory_space<vmem>>, %arg7: memref<16x1xf32, #tpu.memory_space<vmem>>, %arg8: memref<32x3xf32, #tpu.memory_space<vmem>>, %arg9: memref<32x1xf32, #tpu.memory_space<vmem>>, %arg10: memref<64x3xf32, #tpu.memory_space<vmem>>, %arg11: memref<64x1xf32, #tpu.memory_space<vmem>>, %arg12: memref<64x64xf32, #tpu.memory_space<vmem>>, %arg13: memref<64x1xf32, #tpu.memory_space<vmem>>, %arg14: memref<64x16xf32, #tpu.memory_space<vmem>>, %arg15: memref<64x32xf32, #tpu.memory_space<vmem>>, %arg16: memref<64x64xf32, #tpu.memory_space<vmem>>, %arg17: memref<64x1xf32, #tpu.memory_space<vmem>>, %arg18: memref<16x64xf32, #tpu.memory_space<vmem>>, %arg19: memref<16x1xf32, #tpu.memory_space<vmem>>, %arg20: memref<32x64xf32, #tpu.memory_space<vmem>>, %arg21: memref<32x1xf32, #tpu.memory_space<vmem>>, %arg22: memref<64x64xf32, #tpu.memory_space<vmem>>, %arg23: memref<64x1xf32, #tpu.memory_space<vmem>>, %arg24: memref<1x64xf32, #tpu.memory_space<vmem>>, %arg25: memref<1x8xf32, #tpu.memory_space<vmem>>, %arg26: memref<1x16xf32, #tpu.memory_space<vmem>>, %arg27: memref<1x32xf32, #tpu.memory_space<vmem>>, %arg28: memref<1x64xf32, #tpu.memory_space<vmem>>, %arg29: memref<512x32xf32, #tpu.memory_space<vmem>>, %arg30: memref<128x32xf32, #tpu.memory_space<vmem>>, %arg31: memref<32x512xf32, #tpu.memory_space<vmem>>, %arg32: memref<32x128xf32, #tpu.memory_space<vmem>>, %arg33: memref<1x2048xf32, #tpu.memory_space<vmem>>, %arg34: memref<1x512xf32, #tpu.memory_space<vmem>>, %arg35: memref<1x128xf32, #tpu.memory_space<vmem>>, %arg36: memref<1x32xf32, #tpu.memory_space<vmem>>) attributes {dimension_semantics = [], scalar_prefetch = 0 : i64, scratch_operands = 0 : i64, tpu.core_type = #tpu.core_type<tc>} {
    %c0 = arith.constant 0 : index
    %c0_0 = arith.constant 0 : index
    %0 = vector.load %arg0[%c0, %c0_0] : memref<3x2048xf32, #tpu.memory_space<vmem>>, vector<3x2048xf32>
    %c0_1 = arith.constant 0 : index
    %c0_2 = arith.constant 0 : index
    %1 = vector.load %arg1[%c0_1, %c0_2] : memref<3x512xf32, #tpu.memory_space<vmem>>, vector<3x512xf32>
    %c0_3 = arith.constant 0 : index
    %c0_4 = arith.constant 0 : index
    %2 = vector.load %arg2[%c0_3, %c0_4] : memref<3x128xf32, #tpu.memory_space<vmem>>, vector<3x128xf32>
    %c0_5 = arith.constant 0 : index
    %c0_6 = arith.constant 0 : index
    %3 = vector.load %arg3[%c0_5, %c0_6] : memref<3x32xf32, #tpu.memory_space<vmem>>, vector<3x32xf32>
    %c0_7 = arith.constant 0 : index
    %c0_8 = arith.constant 0 : index
    %4 = vector.load %arg4[%c0_7, %c0_8] : memref<8x3xf32, #tpu.memory_space<vmem>>, vector<8x3xf32>
    %c0_9 = arith.constant 0 : index
    %c0_10 = arith.constant 0 : index
    %5 = vector.load %arg5[%c0_9, %c0_10] : memref<8x1xf32, #tpu.memory_space<vmem>>, vector<8x1xf32>
    %c0_11 = arith.constant 0 : index
    %c0_12 = arith.constant 0 : index
    %6 = vector.load %arg6[%c0_11, %c0_12] : memref<16x3xf32, #tpu.memory_space<vmem>>, vector<16x3xf32>
    %c0_13 = arith.constant 0 : index
    %c0_14 = arith.constant 0 : index
    %7 = vector.load %arg7[%c0_13, %c0_14] : memref<16x1xf32, #tpu.memory_space<vmem>>, vector<16x1xf32>
    %c0_15 = arith.constant 0 : index
    %c0_16 = arith.constant 0 : index
    %8 = vector.load %arg8[%c0_15, %c0_16] : memref<32x3xf32, #tpu.memory_space<vmem>>, vector<32x3xf32>
    %c0_17 = arith.constant 0 : index
    %c0_18 = arith.constant 0 : index
    %9 = vector.load %arg9[%c0_17, %c0_18] : memref<32x1xf32, #tpu.memory_space<vmem>>, vector<32x1xf32>
    %c0_19 = arith.constant 0 : index
    %c0_20 = arith.constant 0 : index
    %10 = vector.load %arg10[%c0_19, %c0_20] : memref<64x3xf32, #tpu.memory_space<vmem>>, vector<64x3xf32>
    %c0_21 = arith.constant 0 : index
    %c0_22 = arith.constant 0 : index
    %11 = vector.load %arg11[%c0_21, %c0_22] : memref<64x1xf32, #tpu.memory_space<vmem>>, vector<64x1xf32>
    %c0_23 = arith.constant 0 : index
    %c0_24 = arith.constant 0 : index
    %12 = vector.load %arg12[%c0_23, %c0_24] : memref<64x64xf32, #tpu.memory_space<vmem>>, vector<64x64xf32>
    %c0_25 = arith.constant 0 : index
    %c0_26 = arith.constant 0 : index
    %13 = vector.load %arg13[%c0_25, %c0_26] : memref<64x1xf32, #tpu.memory_space<vmem>>, vector<64x1xf32>
    %c0_27 = arith.constant 0 : index
    %c0_28 = arith.constant 0 : index
    %14 = vector.load %arg14[%c0_27, %c0_28] : memref<64x16xf32, #tpu.memory_space<vmem>>, vector<64x16xf32>
    %c0_29 = arith.constant 0 : index
    %c0_30 = arith.constant 0 : index
    %15 = vector.load %arg15[%c0_29, %c0_30] : memref<64x32xf32, #tpu.memory_space<vmem>>, vector<64x32xf32>
    %c0_31 = arith.constant 0 : index
    %c0_32 = arith.constant 0 : index
    %16 = vector.load %arg16[%c0_31, %c0_32] : memref<64x64xf32, #tpu.memory_space<vmem>>, vector<64x64xf32>
    %c0_33 = arith.constant 0 : index
    %c0_34 = arith.constant 0 : index
    %17 = vector.load %arg17[%c0_33, %c0_34] : memref<64x1xf32, #tpu.memory_space<vmem>>, vector<64x1xf32>
    %c0_35 = arith.constant 0 : index
    %c0_36 = arith.constant 0 : index
    %18 = vector.load %arg18[%c0_35, %c0_36] : memref<16x64xf32, #tpu.memory_space<vmem>>, vector<16x64xf32>
    %c0_37 = arith.constant 0 : index
    %c0_38 = arith.constant 0 : index
    %19 = vector.load %arg19[%c0_37, %c0_38] : memref<16x1xf32, #tpu.memory_space<vmem>>, vector<16x1xf32>
    %c0_39 = arith.constant 0 : index
    %c0_40 = arith.constant 0 : index
    %20 = vector.load %arg20[%c0_39, %c0_40] : memref<32x64xf32, #tpu.memory_space<vmem>>, vector<32x64xf32>
    %c0_41 = arith.constant 0 : index
    %c0_42 = arith.constant 0 : index
    %21 = vector.load %arg21[%c0_41, %c0_42] : memref<32x1xf32, #tpu.memory_space<vmem>>, vector<32x1xf32>
    %c0_43 = arith.constant 0 : index
    %c0_44 = arith.constant 0 : index
    %22 = vector.load %arg22[%c0_43, %c0_44] : memref<64x64xf32, #tpu.memory_space<vmem>>, vector<64x64xf32>
    %c0_45 = arith.constant 0 : index
    %c0_46 = arith.constant 0 : index
    %23 = vector.load %arg23[%c0_45, %c0_46] : memref<64x1xf32, #tpu.memory_space<vmem>>, vector<64x1xf32>
    %c0_47 = arith.constant 0 : index
    %c0_48 = arith.constant 0 : index
    %24 = vector.load %arg24[%c0_47, %c0_48] : memref<1x64xf32, #tpu.memory_space<vmem>>, vector<1x64xf32>
    %c0_49 = arith.constant 0 : index
    %c0_50 = arith.constant 0 : index
    %25 = vector.load %arg25[%c0_49, %c0_50] : memref<1x8xf32, #tpu.memory_space<vmem>>, vector<1x8xf32>
    %c0_51 = arith.constant 0 : index
    %c0_52 = arith.constant 0 : index
    %26 = vector.load %arg26[%c0_51, %c0_52] : memref<1x16xf32, #tpu.memory_space<vmem>>, vector<1x16xf32>
    %c0_53 = arith.constant 0 : index
    %c0_54 = arith.constant 0 : index
    %27 = vector.load %arg27[%c0_53, %c0_54] : memref<1x32xf32, #tpu.memory_space<vmem>>, vector<1x32xf32>
    %c0_55 = arith.constant 0 : index
    %c0_56 = arith.constant 0 : index
    %28 = vector.load %arg28[%c0_55, %c0_56] : memref<1x64xf32, #tpu.memory_space<vmem>>, vector<1x64xf32>
    %c0_57 = arith.constant 0 : index
    %c0_58 = arith.constant 0 : index
    %29 = vector.load %arg29[%c0_57, %c0_58] : memref<512x32xf32, #tpu.memory_space<vmem>>, vector<512x32xf32>
    %c0_59 = arith.constant 0 : index
    %c0_60 = arith.constant 0 : index
    %30 = vector.load %arg30[%c0_59, %c0_60] : memref<128x32xf32, #tpu.memory_space<vmem>>, vector<128x32xf32>
    %c0_61 = arith.constant 0 : index
    %c0_62 = arith.constant 0 : index
    %31 = vector.load %arg31[%c0_61, %c0_62] : memref<32x512xf32, #tpu.memory_space<vmem>>, vector<32x512xf32>
    %c0_63 = arith.constant 0 : index
    %c0_64 = arith.constant 0 : index
    %32 = vector.load %arg32[%c0_63, %c0_64] : memref<32x128xf32, #tpu.memory_space<vmem>>, vector<32x128xf32>
    %cst = arith.constant dense<0.000000e+00> : vector<8x2048xf32>
    %33 = tpu.matmul %4, %0, %cst {dimension_numbers = #tpu.dot_dimension_numbers<[1], [0], [0], [1], [0, 0, 1, 1], [], []>} : vector<8x3xf32>, vector<3x2048xf32>, vector<8x2048xf32> -> vector<8x2048xf32>
    %34 = vector.broadcast %5 : vector<8x1xf32> to vector<8x2048xf32>
    %35 = arith.addf %33, %34 : vector<8x2048xf32>
    %cst_65 = arith.constant 0.000000e+00 : f32
    %36 = vector.broadcast %cst_65 : f32 to vector<8x2048xf32>
    %37 = arith.maximumf %35, %36 : vector<8x2048xf32>
    %cst_66 = arith.constant dense<0.000000e+00> : vector<16x512xf32>
    %38 = tpu.matmul %6, %1, %cst_66 {dimension_numbers = #tpu.dot_dimension_numbers<[1], [0], [0], [1], [0, 0, 1, 1], [], []>} : vector<16x3xf32>, vector<3x512xf32>, vector<16x512xf32> -> vector<16x512xf32>
    %39 = vector.broadcast %7 : vector<16x1xf32> to vector<16x512xf32>
    %40 = arith.addf %38, %39 : vector<16x512xf32>
    %cst_67 = arith.constant 0.000000e+00 : f32
    %41 = vector.broadcast %cst_67 : f32 to vector<16x512xf32>
    %42 = arith.maximumf %40, %41 : vector<16x512xf32>
    %cst_68 = arith.constant dense<0.000000e+00> : vector<32x128xf32>
    %43 = tpu.matmul %8, %2, %cst_68 {dimension_numbers = #tpu.dot_dimension_numbers<[1], [0], [0], [1], [0, 0, 1, 1], [], []>} : vector<32x3xf32>, vector<3x128xf32>, vector<32x128xf32> -> vector<32x128xf32>
    %44 = vector.broadcast %9 : vector<32x1xf32> to vector<32x128xf32>
    %45 = arith.addf %43, %44 : vector<32x128xf32>
    %cst_69 = arith.constant 0.000000e+00 : f32
    %46 = vector.broadcast %cst_69 : f32 to vector<32x128xf32>
    %47 = arith.maximumf %45, %46 : vector<32x128xf32>
    %cst_70 = arith.constant dense<0.000000e+00> : vector<64x32xf32>
    %48 = tpu.matmul %10, %3, %cst_70 {dimension_numbers = #tpu.dot_dimension_numbers<[1], [0], [0], [1], [0, 0, 1, 1], [], []>} : vector<64x3xf32>, vector<3x32xf32>, vector<64x32xf32> -> vector<64x32xf32>
    %49 = vector.broadcast %11 : vector<64x1xf32> to vector<64x32xf32>
    %50 = arith.addf %48, %49 : vector<64x32xf32>
    %cst_71 = arith.constant 0.000000e+00 : f32
    %51 = vector.broadcast %cst_71 : f32 to vector<64x32xf32>
    %52 = arith.maximumf %50, %51 : vector<64x32xf32>
    %cst_72 = arith.constant dense<0.000000e+00> : vector<64x32xf32>
    %53 = tpu.matmul %12, %52, %cst_72 {dimension_numbers = #tpu.dot_dimension_numbers<[1], [0], [0], [1], [0, 0, 1, 1], [], []>} : vector<64x64xf32>, vector<64x32xf32>, vector<64x32xf32> -> vector<64x32xf32>
    %54 = vector.broadcast %13 : vector<64x1xf32> to vector<64x32xf32>
    %55 = arith.addf %53, %54 : vector<64x32xf32>
    %cst_73 = arith.constant 0.000000e+00 : f32
    %56 = vector.broadcast %cst_73 : f32 to vector<64x32xf32>
    %57 = arith.maximumf %55, %56 : vector<64x32xf32>
    %cst_74 = arith.constant dense<0.000000e+00> : vector<16x32xf32>
    %58 = tpu.matmul %42, %29, %cst_74 {dimension_numbers = #tpu.dot_dimension_numbers<[1], [0], [0], [1], [0, 0, 1, 1], [], []>} : vector<16x512xf32>, vector<512x32xf32>, vector<16x32xf32> -> vector<16x32xf32>
    %cst_75 = arith.constant dense<0.000000e+00> : vector<32x32xf32>
    %59 = tpu.matmul %47, %30, %cst_75 {dimension_numbers = #tpu.dot_dimension_numbers<[1], [0], [0], [1], [0, 0, 1, 1], [], []>} : vector<32x128xf32>, vector<128x32xf32>, vector<32x32xf32> -> vector<32x32xf32>
    %cst_76 = arith.constant dense<0.000000e+00> : vector<64x32xf32>
    %60 = tpu.matmul %14, %58, %cst_76 {dimension_numbers = #tpu.dot_dimension_numbers<[1], [0], [0], [1], [0, 0, 1, 1], [], []>} : vector<64x16xf32>, vector<16x32xf32>, vector<64x32xf32> -> vector<64x32xf32>
    %cst_77 = arith.constant dense<0.000000e+00> : vector<64x32xf32>
    %61 = tpu.matmul %15, %59, %cst_77 {dimension_numbers = #tpu.dot_dimension_numbers<[1], [0], [0], [1], [0, 0, 1, 1], [], []>} : vector<64x32xf32>, vector<32x32xf32>, vector<64x32xf32> -> vector<64x32xf32>
    %62 = arith.addf %60, %61 : vector<64x32xf32>
    %cst_78 = arith.constant dense<0.000000e+00> : vector<64x32xf32>
    %63 = tpu.matmul %16, %52, %cst_78 {dimension_numbers = #tpu.dot_dimension_numbers<[1], [0], [0], [1], [0, 0, 1, 1], [], []>} : vector<64x64xf32>, vector<64x32xf32>, vector<64x32xf32> -> vector<64x32xf32>
    %64 = arith.addf %62, %63 : vector<64x32xf32>
    %65 = vector.broadcast %17 : vector<64x1xf32> to vector<64x32xf32>
    %66 = arith.addf %64, %65 : vector<64x32xf32>
    %cst_79 = arith.constant 0.000000e+00 : f32
    %67 = vector.broadcast %cst_79 : f32 to vector<64x32xf32>
    %68 = arith.maximumf %66, %67 : vector<64x32xf32>
    %cst_80 = arith.constant dense<0.000000e+00> : vector<16x32xf32>
    %69 = tpu.matmul %18, %68, %cst_80 {dimension_numbers = #tpu.dot_dimension_numbers<[1], [0], [0], [1], [0, 0, 1, 1], [], []>} : vector<16x64xf32>, vector<64x32xf32>, vector<16x32xf32> -> vector<16x32xf32>
    %70 = vector.broadcast %19 : vector<16x1xf32> to vector<16x32xf32>
    %71 = arith.addf %69, %70 : vector<16x32xf32>
    %cst_81 = arith.constant dense<0.000000e+00> : vector<16x512xf32>
    %72 = tpu.matmul %71, %31, %cst_81 {dimension_numbers = #tpu.dot_dimension_numbers<[1], [0], [0], [1], [0, 0, 1, 1], [], []>} : vector<16x32xf32>, vector<32x512xf32>, vector<16x512xf32> -> vector<16x512xf32>
    %cst_82 = arith.constant dense<0.000000e+00> : vector<32x32xf32>
    %73 = tpu.matmul %20, %68, %cst_82 {dimension_numbers = #tpu.dot_dimension_numbers<[1], [0], [0], [1], [0, 0, 1, 1], [], []>} : vector<32x64xf32>, vector<64x32xf32>, vector<32x32xf32> -> vector<32x32xf32>
    %74 = vector.broadcast %21 : vector<32x1xf32> to vector<32x32xf32>
    %75 = arith.addf %73, %74 : vector<32x32xf32>
    %cst_83 = arith.constant dense<0.000000e+00> : vector<32x128xf32>
    %76 = tpu.matmul %75, %32, %cst_83 {dimension_numbers = #tpu.dot_dimension_numbers<[1], [0], [0], [1], [0, 0, 1, 1], [], []>} : vector<32x32xf32>, vector<32x128xf32>, vector<32x128xf32> -> vector<32x128xf32>
    %cst_84 = arith.constant dense<0.000000e+00> : vector<64x32xf32>
    %77 = tpu.matmul %22, %68, %cst_84 {dimension_numbers = #tpu.dot_dimension_numbers<[1], [0], [0], [1], [0, 0, 1, 1], [], []>} : vector<64x64xf32>, vector<64x32xf32>, vector<64x32xf32> -> vector<64x32xf32>
    %78 = vector.broadcast %23 : vector<64x1xf32> to vector<64x32xf32>
    %79 = arith.addf %77, %78 : vector<64x32xf32>
    %80 = arith.mulf %42, %42 : vector<16x512xf32>
    %cst_85 = arith.constant dense<0.000000e+00> : vector<512xf32>
    %81 = vector.multi_reduction <add>, %80, %cst_85 [0] : vector<16x512xf32> to vector<512xf32>
    %82 = vector.shape_cast %81 : vector<512xf32> to vector<1x512xf32>
    %cst_86 = arith.constant 1.000000e-24 : f32
    %83 = vector.broadcast %cst_86 : f32 to vector<1x512xf32>
    %84 = arith.maximumf %82, %83 : vector<1x512xf32>
    %85 = math.rsqrt %84 : vector<1x512xf32>
    %86 = vector.broadcast %85 : vector<1x512xf32> to vector<16x512xf32>
    %87 = arith.mulf %42, %86 : vector<16x512xf32>
    %88 = arith.mulf %72, %72 : vector<16x512xf32>
    %cst_87 = arith.constant dense<0.000000e+00> : vector<512xf32>
    %89 = vector.multi_reduction <add>, %88, %cst_87 [0] : vector<16x512xf32> to vector<512xf32>
    %90 = vector.shape_cast %89 : vector<512xf32> to vector<1x512xf32>
    %cst_88 = arith.constant 1.000000e-24 : f32
    %91 = vector.broadcast %cst_88 : f32 to vector<1x512xf32>
    %92 = arith.maximumf %90, %91 : vector<1x512xf32>
    %93 = math.rsqrt %92 : vector<1x512xf32>
    %94 = vector.broadcast %93 : vector<1x512xf32> to vector<16x512xf32>
    %95 = arith.mulf %72, %94 : vector<16x512xf32>
    %96 = arith.subf %87, %95 : vector<16x512xf32>
    %97 = arith.mulf %96, %96 : vector<16x512xf32>
    %98 = arith.mulf %47, %47 : vector<32x128xf32>
    %cst_89 = arith.constant dense<0.000000e+00> : vector<128xf32>
    %99 = vector.multi_reduction <add>, %98, %cst_89 [0] : vector<32x128xf32> to vector<128xf32>
    %100 = vector.shape_cast %99 : vector<128xf32> to vector<1x128xf32>
    %cst_90 = arith.constant 1.000000e-24 : f32
    %101 = vector.broadcast %cst_90 : f32 to vector<1x128xf32>
    %102 = arith.maximumf %100, %101 : vector<1x128xf32>
    %103 = math.rsqrt %102 : vector<1x128xf32>
    %104 = vector.broadcast %103 : vector<1x128xf32> to vector<32x128xf32>
    %105 = arith.mulf %47, %104 : vector<32x128xf32>
    %106 = arith.mulf %76, %76 : vector<32x128xf32>
    %cst_91 = arith.constant dense<0.000000e+00> : vector<128xf32>
    %107 = vector.multi_reduction <add>, %106, %cst_91 [0] : vector<32x128xf32> to vector<128xf32>
    %108 = vector.shape_cast %107 : vector<128xf32> to vector<1x128xf32>
    %cst_92 = arith.constant 1.000000e-24 : f32
    %109 = vector.broadcast %cst_92 : f32 to vector<1x128xf32>
    %110 = arith.maximumf %108, %109 : vector<1x128xf32>
    %111 = math.rsqrt %110 : vector<1x128xf32>
    %112 = vector.broadcast %111 : vector<1x128xf32> to vector<32x128xf32>
    %113 = arith.mulf %76, %112 : vector<32x128xf32>
    %114 = arith.subf %105, %113 : vector<32x128xf32>
    %115 = arith.mulf %114, %114 : vector<32x128xf32>
    %116 = arith.mulf %52, %52 : vector<64x32xf32>
    %cst_93 = arith.constant dense<0.000000e+00> : vector<32xf32>
    %117 = vector.multi_reduction <add>, %116, %cst_93 [0] : vector<64x32xf32> to vector<32xf32>
    %118 = vector.shape_cast %117 : vector<32xf32> to vector<1x32xf32>
    %cst_94 = arith.constant 1.000000e-24 : f32
    %119 = vector.broadcast %cst_94 : f32 to vector<1x32xf32>
    %120 = arith.maximumf %118, %119 : vector<1x32xf32>
    %121 = math.rsqrt %120 : vector<1x32xf32>
    %122 = vector.broadcast %121 : vector<1x32xf32> to vector<64x32xf32>
    %123 = arith.mulf %52, %122 : vector<64x32xf32>
    %124 = arith.mulf %79, %79 : vector<64x32xf32>
    %cst_95 = arith.constant dense<0.000000e+00> : vector<32xf32>
    %125 = vector.multi_reduction <add>, %124, %cst_95 [0] : vector<64x32xf32> to vector<32xf32>
    %126 = vector.shape_cast %125 : vector<32xf32> to vector<1x32xf32>
    %cst_96 = arith.constant 1.000000e-24 : f32
    %127 = vector.broadcast %cst_96 : f32 to vector<1x32xf32>
    %128 = arith.maximumf %126, %127 : vector<1x32xf32>
    %129 = math.rsqrt %128 : vector<1x32xf32>
    %130 = vector.broadcast %129 : vector<1x32xf32> to vector<64x32xf32>
    %131 = arith.mulf %79, %130 : vector<64x32xf32>
    %132 = arith.subf %123, %131 : vector<64x32xf32>
    %133 = arith.mulf %132, %132 : vector<64x32xf32>
    %cst_97 = arith.constant dense<0.000000e+00> : vector<1x2048xf32>
    %134 = tpu.matmul %25, %37, %cst_97 {dimension_numbers = #tpu.dot_dimension_numbers<[1], [0], [0], [1], [0, 0, 1, 1], [], []>} : vector<1x8xf32>, vector<8x2048xf32>, vector<1x2048xf32> -> vector<1x2048xf32>
    %cst_98 = arith.constant dense<0.000000e+00> : vector<1x512xf32>
    %135 = tpu.matmul %26, %97, %cst_98 {dimension_numbers = #tpu.dot_dimension_numbers<[1], [0], [0], [1], [0, 0, 1, 1], [], []>} : vector<1x16xf32>, vector<16x512xf32>, vector<1x512xf32> -> vector<1x512xf32>
    %cst_99 = arith.constant dense<0.000000e+00> : vector<1x128xf32>
    %136 = tpu.matmul %27, %115, %cst_99 {dimension_numbers = #tpu.dot_dimension_numbers<[1], [0], [0], [1], [0, 0, 1, 1], [], []>} : vector<1x32xf32>, vector<32x128xf32>, vector<1x128xf32> -> vector<1x128xf32>
    %cst_100 = arith.constant dense<0.000000e+00> : vector<1x32xf32>
    %137 = tpu.matmul %24, %57, %cst_100 {dimension_numbers = #tpu.dot_dimension_numbers<[1], [0], [0], [1], [0, 0, 1, 1], [], []>} : vector<1x64xf32>, vector<64x32xf32>, vector<1x32xf32> -> vector<1x32xf32>
    %cst_101 = arith.constant dense<0.000000e+00> : vector<1x32xf32>
    %138 = tpu.matmul %28, %133, %cst_101 {dimension_numbers = #tpu.dot_dimension_numbers<[1], [0], [0], [1], [0, 0, 1, 1], [], []>} : vector<1x64xf32>, vector<64x32xf32>, vector<1x32xf32> -> vector<1x32xf32>
    %139 = arith.addf %137, %138 : vector<1x32xf32>
    %c0_102 = arith.constant 0 : index
    %c0_103 = arith.constant 0 : index
    %140 = vector.load %arg33[%c0_102, %c0_103] : memref<1x2048xf32, #tpu.memory_space<vmem>>, vector<1x2048xf32>
    tpu.vector_store %arg33[%c0_102, %c0_103], %134 {strides = array<i32>} : memref<1x2048xf32, #tpu.memory_space<vmem>>, vector<1x2048xf32>,
    %c0_104 = arith.constant 0 : index
    %c0_105 = arith.constant 0 : index
    %141 = vector.load %arg34[%c0_104, %c0_105] : memref<1x512xf32, #tpu.memory_space<vmem>>, vector<1x512xf32>
    tpu.vector_store %arg34[%c0_104, %c0_105], %135 {strides = array<i32>} : memref<1x512xf32, #tpu.memory_space<vmem>>, vector<1x512xf32>,
    %c0_106 = arith.constant 0 : index
    %c0_107 = arith.constant 0 : index
    %142 = vector.load %arg35[%c0_106, %c0_107] : memref<1x128xf32, #tpu.memory_space<vmem>>, vector<1x128xf32>
    tpu.vector_store %arg35[%c0_106, %c0_107], %136 {strides = array<i32>} : memref<1x128xf32, #tpu.memory_space<vmem>>, vector<1x128xf32>,
    %c0_108 = arith.constant 0 : index
    %c0_109 = arith.constant 0 : index
    %143 = vector.load %arg36[%c0_108, %c0_109] : memref<1x32xf32, #tpu.memory_space<vmem>>, vector<1x32xf32>
    tpu.vector_store %arg36[%c0_108, %c0_109], %139 {strides = array<i32>} : memref<1x32xf32, #tpu.memory_space<vmem>>, vector<1x32xf32>,
    return
  }
}

</mosaic_0001>

<llo_original>
// kernel: unsupervised_for_test_forward.1
$region0: #{unsupervised_for_test_forward.1}
  #allocation0 [shape = 'u32[]', space=smem, size = 0x4, offset = 0x4, fixed_abs, tag = 'smem constant byte address 0x4 - core index']
  #allocation1 [shape = 'u32[144,128]{1,0:T(1,128)}', space=vmem, size = 0x12000, scoped, tag = 'internal scratch']
  %s0 = inlined_call_operand.smem [shape: u32[37], index: -1, kind: input, shape index: {}]
  %s1 = sld [smem:[%s0]]
  %s2 = scalar_lea.smem %s0, 1
  %s3 = sld [smem:[%s2]]
  %s4 = scalar_lea.smem %s0, 2
  %s5 = sld [smem:[%s4]]
  %s6 = scalar_lea.smem %s0, 3
  %s7 = sld [smem:[%s6]]
  %s8 = scalar_lea.smem %s0, 4
  %s9 = sld [smem:[%s8]]
  %s10 = scalar_lea.smem %s0, 5
  %s11 = sld [smem:[%s10]]
  %s12 = scalar_lea.smem %s0, 6
  %s13 = sld [smem:[%s12]]
  %s14 = scalar_lea.smem %s0, 7
  %s15 = sld [smem:[%s14]]
  %s16 = scalar_lea.smem %s0, 8
  %s17 = sld [smem:[%s16]]
  %s18 = scalar_lea.smem %s0, 9
  %s19 = sld [smem:[%s18]]
  %s20 = scalar_lea.smem %s0, 10
  %s21 = sld [smem:[%s20]]
  %s22 = scalar_lea.smem %s0, 11
  %s23 = sld [smem:[%s22]]
  %s24 = scalar_lea.smem %s0, 12
  %s25 = sld [smem:[%s24]]
  %s26 = scalar_lea.smem %s0, 13
  %s27 = sld [smem:[%s26]]
  %s28 = scalar_lea.smem %s0, 14
  %s29 = sld [smem:[%s28]]
  %s30 = scalar_lea.smem %s0, 15
  %s31 = sld [smem:[%s30]]
  %s32 = scalar_lea.smem %s0, 16
  %s33 = sld [smem:[%s32]]
  %s34 = scalar_lea.smem %s0, 17
  %s35 = sld [smem:[%s34]]
  %s36 = scalar_lea.smem %s0, 18
  %s37 = sld [smem:[%s36]]
  %s38 = scalar_lea.smem %s0, 19
  %s39 = sld [smem:[%s38]]
  %s40 = scalar_lea.smem %s0, 20
  %s41 = sld [smem:[%s40]]
  %s42 = scalar_lea.smem %s0, 21
  %s43 = sld [smem:[%s42]]
  %s44 = scalar_lea.smem %s0, 22
  %s45 = sld [smem:[%s44]]
  %s46 = scalar_lea.smem %s0, 23
  %s47 = sld [smem:[%s46]]
  %s48 = scalar_lea.smem %s0, 24
  %s49 = sld [smem:[%s48]]
  %s50 = scalar_lea.smem %s0, 25
  %s51 = sld [smem:[%s50]]
  %s52 = scalar_lea.smem %s0, 26
  %s53 = sld [smem:[%s52]]
  %s54 = scalar_lea.smem %s0, 27
  %s55 = sld [smem:[%s54]]
  %s56 = scalar_lea.smem %s0, 28
  %s57 = sld [smem:[%s56]]
  %s58 = scalar_lea.smem %s0, 29
  %s59 = sld [smem:[%s58]]
  %s60 = scalar_lea.smem %s0, 30
  %s61 = sld [smem:[%s60]]
  %s62 = scalar_lea.smem %s0, 31
  %s63 = sld [smem:[%s62]]
  %s64 = scalar_lea.smem %s0, 32
  %s65 = sld [smem:[%s64]]
  %s66 = scalar_lea.smem %s0, 33
  %s67 = sld [smem:[%s66]]
  %s68 = scalar_lea.smem %s0, 34
  %s69 = sld [smem:[%s68]]
  %s70 = scalar_lea.smem %s0, 35
  %s71 = sld [smem:[%s70]]
  %s72 = scalar_lea.smem %s0, 36
  %s73 = sld [smem:[%s72]]
  %74 = xla_tuple %s67, %s69, %s71, %s73
  %s75 = sld [smem:[#allocation0]]
  $region166: #{unsupervised_for_test_forward.1} parent=0
    _
  %s77 = ssub.s32 1, %s75
  %s78 = scalar_select 0, %s77, %s75
  // Predicated region
  $region2: #{unsupervised_for_test_forward.1} parent=0 // pred_check
    _
  $region3: #{unsupervised_for_test_forward.1} parent=0 // pred_check_branch
    %80 = sbr.rel (0) target = $region5
  $region4: #{unsupervised_for_test_forward.1} parent=0 // pred_region
    _
  $region5: #{unsupervised_for_test_forward.1} parent=0 // pred_fallthru
    _
  // Predicated region
  $region6: #{unsupervised_for_test_forward.1} parent=0 // pred_check
    _
  $region7: #{unsupervised_for_test_forward.1} parent=0 // pred_check_branch
    %82 = sbr.rel (0) target = $region9
  $region8: #{unsupervised_for_test_forward.1} parent=0 // pred_region
    _
  $region9: #{unsupervised_for_test_forward.1} parent=0 // pred_fallthru
    _
  // Predicated region
  $region10: #{unsupervised_for_test_forward.1} parent=0 // pred_check
    _
  $region11: #{unsupervised_for_test_forward.1} parent=0 // pred_check_branch
    %84 = sbr.rel (0) target = $region13
  $region12: #{unsupervised_for_test_forward.1} parent=0 // pred_region
    _
  $region13: #{unsupervised_for_test_forward.1} parent=0 // pred_fallthru
    _
  // Predicated region
  $region14: #{unsupervised_for_test_forward.1} parent=0 // pred_check
    _
  $region15: #{unsupervised_for_test_forward.1} parent=0 // pred_check_branch
    %86 = sbr.rel (0) target = $region17
  $region16: #{unsupervised_for_test_forward.1} parent=0 // pred_region
    _
  $region17: #{unsupervised_for_test_forward.1} parent=0 // pred_fallthru
    _
  // Predicated region
  $region18: #{unsupervised_for_test_forward.1} parent=0 // pred_check
    _
  $region19: #{unsupervised_for_test_forward.1} parent=0 // pred_check_branch
    %88 = sbr.rel (0) target = $region21
  $region20: #{unsupervised_for_test_forward.1} parent=0 // pred_region
    _
  $region21: #{unsupervised_for_test_forward.1} parent=0 // pred_fallthru
    _
  // Predicated region
  $region22: #{unsupervised_for_test_forward.1} parent=0 // pred_check
    _
  $region23: #{unsupervised_for_test_forward.1} parent=0 // pred_check_branch
    %90 = sbr.rel (0) target = $region25
  $region24: #{unsupervised_for_test_forward.1} parent=0 // pred_region
    _
  $region25: #{unsupervised_for_test_forward.1} parent=0 // pred_fallthru
    _
  // Predicated region
  $region26: #{unsupervised_for_test_forward.1} parent=0 // pred_check
    _
  $region27: #{unsupervised_for_test_forward.1} parent=0 // pred_check_branch
    %92 = sbr.rel (0) target = $region29
  $region28: #{unsupervised_for_test_forward.1} parent=0 // pred_region
    _
  $region29: #{unsupervised_for_test_forward.1} parent=0 // pred_fallthru
    _
  // Predicated region
  $region30: #{unsupervised_for_test_forward.1} parent=0 // pred_check
    _
  $region31: #{unsupervised_for_test_forward.1} parent=0 // pred_check_branch
    %94 = sbr.rel (0) target = $region33
  $region32: #{unsupervised_for_test_forward.1} parent=0 // pred_region
    _
  $region33: #{unsupervised_for_test_forward.1} parent=0 // pred_fallthru
    _
  // Predicated region
  $region34: #{unsupervised_for_test_forward.1} parent=0 // pred_check
    _
  $region35: #{unsupervised_for_test_forward.1} parent=0 // pred_check_branch
    %96 = sbr.rel (0) target = $region37
  $region36: #{unsupervised_for_test_forward.1} parent=0 // pred_region
    _
  $region37: #{unsupervised_for_test_forward.1} parent=0 // pred_fallthru
    _
  // Predicated region
  $region38: #{unsupervised_for_test_forward.1} parent=0 // pred_check
    _
  $region39: #{unsupervised_for_test_forward.1} parent=0 // pred_check_branch
    %98 = sbr.rel (0) target = $region41
  $region40: #{unsupervised_for_test_forward.1} parent=0 // pred_region
    _
  $region41: #{unsupervised_for_test_forward.1} parent=0 // pred_fallthru
    _
  // Predicated region
  $region42: #{unsupervised_for_test_forward.1} parent=0 // pred_check
    _
  $region43: #{unsupervised_for_test_forward.1} parent=0 // pred_check_branch
    %100 = sbr.rel (0) target = $region45
  $region44: #{unsupervised_for_test_forward.1} parent=0 // pred_region
    _
  $region45: #{unsupervised_for_test_forward.1} parent=0 // pred_fallthru
    _
  // Predicated region
  $region46: #{unsupervised_for_test_forward.1} parent=0 // pred_check
    _
  $region47: #{unsupervised_for_test_forward.1} parent=0 // pred_check_branch
    %102 = sbr.rel (0) target = $region49
  $region48: #{unsupervised_for_test_forward.1} parent=0 // pred_region
    _
  $region49: #{unsupervised_for_test_forward.1} parent=0 // pred_fallthru
    _
  // Predicated region
  $region50: #{unsupervised_for_test_forward.1} parent=0 // pred_check
    _
  $region51: #{unsupervised_for_test_forward.1} parent=0 // pred_check_branch
    %104 = sbr.rel (0) target = $region53
  $region52: #{unsupervised_for_test_forward.1} parent=0 // pred_region
    _
  $region53: #{unsupervised_for_test_forward.1} parent=0 // pred_fallthru
    _
  // Predicated region
  $region54: #{unsupervised_for_test_forward.1} parent=0 // pred_check
    _
  $region55: #{unsupervised_for_test_forward.1} parent=0 // pred_check_branch
    %106 = sbr.rel (0) target = $region57
  $region56: #{unsupervised_for_test_forward.1} parent=0 // pred_region
    _
  $region57: #{unsupervised_for_test_forward.1} parent=0 // pred_fallthru
    _
  // Predicated region
  $region58: #{unsupervised_for_test_forward.1} parent=0 // pred_check
    _
  $region59: #{unsupervised_for_test_forward.1} parent=0 // pred_check_branch
    %108 = sbr.rel (0) target = $region61
  $region60: #{unsupervised_for_test_forward.1} parent=0 // pred_region
    _
  $region61: #{unsupervised_for_test_forward.1} parent=0 // pred_fallthru
    _
  // Predicated region
  $region62: #{unsupervised_for_test_forward.1} parent=0 // pred_check
    _
  $region63: #{unsupervised_for_test_forward.1} parent=0 // pred_check_branch
    %110 = sbr.rel (0) target = $region65
  $region64: #{unsupervised_for_test_forward.1} parent=0 // pred_region
    _
  $region65: #{unsupervised_for_test_forward.1} parent=0 // pred_fallthru
    _
  // Predicated region
  $region66: #{unsupervised_for_test_forward.1} parent=0 // pred_check
    _
  $region67: #{unsupervised_for_test_forward.1} parent=0 // pred_check_branch
    %112 = sbr.rel (0) target = $region69
  $region68: #{unsupervised_for_test_forward.1} parent=0 // pred_region
    _
  $region69: #{unsupervised_for_test_forward.1} parent=0 // pred_fallthru
    _
  // Predicated region
  $region70: #{unsupervised_for_test_forward.1} parent=0 // pred_check
    _
  $region71: #{unsupervised_for_test_forward.1} parent=0 // pred_check_branch
    %114 = sbr.rel (0) target = $region73
  $region72: #{unsupervised_for_test_forward.1} parent=0 // pred_region
    _
  $region73: #{unsupervised_for_test_forward.1} parent=0 // pred_fallthru
    _
  // Predicated region
  $region74: #{unsupervised_for_test_forward.1} parent=0 // pred_check
    _
  $region75: #{unsupervised_for_test_forward.1} parent=0 // pred_check_branch
    %116 = sbr.rel (0) target = $region77
  $region76: #{unsupervised_for_test_forward.1} parent=0 // pred_region
    _
  $region77: #{unsupervised_for_test_forward.1} parent=0 // pred_fallthru
    _
  // Predicated region
  $region78: #{unsupervised_for_test_forward.1} parent=0 // pred_check
    _
  $region79: #{unsupervised_for_test_forward.1} parent=0 // pred_check_branch
    %118 = sbr.rel (0) target = $region81
  $region80: #{unsupervised_for_test_forward.1} parent=0 // pred_region
    _
  $region81: #{unsupervised_for_test_forward.1} parent=0 // pred_fallthru
    _
  // Predicated region
  $region82: #{unsupervised_for_test_forward.1} parent=0 // pred_check
    _
  $region83: #{unsupervised_for_test_forward.1} parent=0 // pred_check_branch
    %120 = sbr.rel (0) target = $region85
  $region84: #{unsupervised_for_test_forward.1} parent=0 // pred_region
    _
  $region85: #{unsupervised_for_test_forward.1} parent=0 // pred_fallthru
    _
  // Predicated region
  $region86: #{unsupervised_for_test_forward.1} parent=0 // pred_check
    _
  $region87: #{unsupervised_for_test_forward.1} parent=0 // pred_check_branch
    %122 = sbr.rel (0) target = $region89
  $region88: #{unsupervised_for_test_forward.1} parent=0 // pred_region
    _
  $region89: #{unsupervised_for_test_forward.1} parent=0 // pred_fallthru
    _
  // Predicated region
  $region90: #{unsupervised_for_test_forward.1} parent=0 // pred_check
    _
  $region91: #{unsupervised_for_test_forward.1} parent=0 // pred_check_branch
    %124 = sbr.rel (0) target = $region93
  $region92: #{unsupervised_for_test_forward.1} parent=0 // pred_region
    _
  $region93: #{unsupervised_for_test_forward.1} parent=0 // pred_fallthru
    _
  // Predicated region
  $region94: #{unsupervised_for_test_forward.1} parent=0 // pred_check
    _
  $region95: #{unsupervised_for_test_forward.1} parent=0 // pred_check_branch
    %126 = sbr.rel (0) target = $region97
  $region96: #{unsupervised_for_test_forward.1} parent=0 // pred_region
    _
  $region97: #{unsupervised_for_test_forward.1} parent=0 // pred_fallthru
    _
  // Predicated region
  $region98: #{unsupervised_for_test_forward.1} parent=0 // pred_check
    _
  $region99: #{unsupervised_for_test_forward.1} parent=0 // pred_check_branch
    %128 = sbr.rel (0) target = $region101
  $region100: #{unsupervised_for_test_forward.1} parent=0 // pred_region
    _
  $region101: #{unsupervised_for_test_forward.1} parent=0 // pred_fallthru
    _
  // Predicated region
  $region102: #{unsupervised_for_test_forward.1} parent=0 // pred_check
    _
  $region103: #{unsupervised_for_test_forward.1} parent=0 // pred_check_branch
    %130 = sbr.rel (0) target = $region105
  $region104: #{unsupervised_for_test_forward.1} parent=0 // pred_region
    _
  $region105: #{unsupervised_for_test_forward.1} parent=0 // pred_fallthru
    _
  // Predicated region
  $region106: #{unsupervised_for_test_forward.1} parent=0 // pred_check
    _
  $region107: #{unsupervised_for_test_forward.1} parent=0 // pred_check_branch
    %132 = sbr.rel (0) target = $region109
  $region108: #{unsupervised_for_test_forward.1} parent=0 // pred_region
    _
  $region109: #{unsupervised_for_test_forward.1} parent=0 // pred_fallthru
    _
  // Predicated region
  $region110: #{unsupervised_for_test_forward.1} parent=0 // pred_check
    _
  $region111: #{unsupervised_for_test_forward.1} parent=0 // pred_check_branch
    %134 = sbr.rel (0) target = $region113
  $region112: #{unsupervised_for_test_forward.1} parent=0 // pred_region
    _
  $region113: #{unsupervised_for_test_forward.1} parent=0 // pred_fallthru
    _
  // Predicated region
  $region114: #{unsupervised_for_test_forward.1} parent=0 // pred_check
    _
  $region115: #{unsupervised_for_test_forward.1} parent=0 // pred_check_branch
    %136 = sbr.rel (0) target = $region117
  $region116: #{unsupervised_for_test_forward.1} parent=0 // pred_region
    _
  $region117: #{unsupervised_for_test_forward.1} parent=0 // pred_fallthru
    _
  // Predicated region
  $region118: #{unsupervised_for_test_forward.1} parent=0 // pred_check
    _
  $region119: #{unsupervised_for_test_forward.1} parent=0 // pred_check_branch
    %138 = sbr.rel (0) target = $region121
  $region120: #{unsupervised_for_test_forward.1} parent=0 // pred_region
    _
  $region121: #{unsupervised_for_test_forward.1} parent=0 // pred_fallthru
    _
  // Predicated region
  $region122: #{unsupervised_for_test_forward.1} parent=0 // pred_check
    _
  $region123: #{unsupervised_for_test_forward.1} parent=0 // pred_check_branch
    %140 = sbr.rel (0) target = $region125
  $region124: #{unsupervised_for_test_forward.1} parent=0 // pred_region
    _
  $region125: #{unsupervised_for_test_forward.1} parent=0 // pred_fallthru
    _
  // Predicated region
  $region126: #{unsupervised_for_test_forward.1} parent=0 // pred_check
    _
  $region127: #{unsupervised_for_test_forward.1} parent=0 // pred_check_branch
    %142 = sbr.rel (0) target = $region129
  $region128: #{unsupervised_for_test_forward.1} parent=0 // pred_region
    _
  $region129: #{unsupervised_for_test_forward.1} parent=0 // pred_fallthru
    _
  // Predicated region
  $region130: #{unsupervised_for_test_forward.1} parent=0 // pred_check
    _
  $region131: #{unsupervised_for_test_forward.1} parent=0 // pred_check_branch
    %144 = sbr.rel (0) target = $region133
  $region132: #{unsupervised_for_test_forward.1} parent=0 // pred_region
    _
  $region133: #{unsupervised_for_test_forward.1} parent=0 // pred_fallthru
    _
  %v145 = vld [vmem:[%s1] sm:$0x77]
  %v146 = vld [vmem:[%s1 + $0x8] sm:$0x77]
  %v147 = vld [vmem:[%s1 + $0x10] sm:$0x77]
  %v148 = vld [vmem:[%s1 + $0x18] sm:$0x77]
  %v149 = vld [vmem:[%s1 + $0x20] sm:$0x77]
  %v150 = vld [vmem:[%s1 + $0x28] sm:$0x77]
  %v151 = vld [vmem:[%s1 + $0x30] sm:$0x77]
  %v152 = vld [vmem:[%s1 + $0x38] sm:$0x77]
  %v153 = vld [vmem:[%s3] sm:$0x77]
  %v154 = vld [vmem:[%s3 + $0x8] sm:$0x77]
  %v155 = vld [vmem:[%s5] sm:$0x7]
  %v156 = vld [vmem:[%s7] sm:$0x7]
  %v157 = vld [vmem:[%s9] sm:$0xff]
  %v158 = vld [vmem:[%s11] sm:$0xff]
  %v159 = vld [vmem:[%s13] sm:$0xff]
  %v160 = vld [vmem:[%s13 + $0x8] sm:$0xff]
  %v161 = vld [vmem:[%s15] sm:$0xff]
  %v162 = vld [vmem:[%s15 + $0x8] sm:$0xff]
  %v163 = vld [vmem:[%s17] sm:$0xff]
  %v164 = vld [vmem:[%s17 + $0x8] sm:$0xff]
  %v165 = vld [vmem:[%s17 + $0x10] sm:$0xff]
  %v166 = vld [vmem:[%s17 + $0x18] sm:$0xff]
  %v167 = vld [vmem:[%s19] sm:$0xff]
  %v168 = vld [vmem:[%s19 + $0x8] sm:$0xff]
  %v169 = vld [vmem:[%s19 + $0x10] sm:$0xff]
  %v170 = vld [vmem:[%s19 + $0x18] sm:$0xff]
  %v171 = vld [vmem:[%s21] sm:$0xff]
  %v172 = vld [vmem:[%s21 + $0x8] sm:$0xff]
  %v173 = vld [vmem:[%s21 + $0x10] sm:$0xff]
  %v174 = vld [vmem:[%s21 + $0x18] sm:$0xff]
  %v175 = vld [vmem:[%s21 + $0x20] sm:$0xff]
  %v176 = vld [vmem:[%s21 + $0x28] sm:$0xff]
  %v177 = vld [vmem:[%s21 + $0x30] sm:$0xff]
  %v178 = vld [vmem:[%s21 + $0x38] sm:$0xff]
  %v179 = vld [vmem:[%s23] sm:$0xff]
  %v180 = vld [vmem:[%s23 + $0x8] sm:$0xff]
  %v181 = vld [vmem:[%s23 + $0x10] sm:$0xff]
  %v182 = vld [vmem:[%s23 + $0x18] sm:$0xff]
  %v183 = vld [vmem:[%s23 + $0x20] sm:$0xff]
  %v184 = vld [vmem:[%s23 + $0x28] sm:$0xff]
  %v185 = vld [vmem:[%s23 + $0x30] sm:$0xff]
  %v186 = vld [vmem:[%s23 + $0x38] sm:$0xff]
  %v187 = vld [vmem:[%s25] sm:$0xff]
  %v188 = vld [vmem:[%s25 + $0x8] sm:$0xff]
  %v189 = vld [vmem:[%s25 + $0x10] sm:$0xff]
  %v190 = vld [vmem:[%s25 + $0x18] sm:$0xff]
  %v191 = vld [vmem:[%s25 + $0x20] sm:$0xff]
  %v192 = vld [vmem:[%s25 + $0x28] sm:$0xff]
  %v193 = vld [vmem:[%s25 + $0x30] sm:$0xff]
  %v194 = vld [vmem:[%s25 + $0x38] sm:$0xff]
  %v195 = vld [vmem:[%s27] sm:$0xff]
  %v196 = vld [vmem:[%s27 + $0x8] sm:$0xff]
  %v197 = vld [vmem:[%s27 + $0x10] sm:$0xff]
  %v198 = vld [vmem:[%s27 + $0x18] sm:$0xff]
  %v199 = vld [vmem:[%s27 + $0x20] sm:$0xff]
  %v200 = vld [vmem:[%s27 + $0x28] sm:$0xff]
  %v201 = vld [vmem:[%s27 + $0x30] sm:$0xff]
  %v202 = vld [vmem:[%s27 + $0x38] sm:$0xff]
  %v203 = vld [vmem:[%s29] sm:$0xff]
  %v204 = vld [vmem:[%s29 + $0x8] sm:$0xff]
  %v205 = vld [vmem:[%s29 + $0x10] sm:$0xff]
  %v206 = vld [vmem:[%s29 + $0x18] sm:$0xff]
  %v207 = vld [vmem:[%s29 + $0x20] sm:$0xff]
  %v208 = vld [vmem:[%s29 + $0x28] sm:$0xff]
  %v209 = vld [vmem:[%s29 + $0x30] sm:$0xff]
  %v210 = vld [vmem:[%s29 + $0x38] sm:$0xff]
  %v211 = vld [vmem:[%s31] sm:$0xff]
  %v212 = vld [vmem:[%s31 + $0x8] sm:$0xff]
  %v213 = vld [vmem:[%s31 + $0x10] sm:$0xff]
  %v214 = vld [vmem:[%s31 + $0x18] sm:$0xff]
  %v215 = vld [vmem:[%s31 + $0x20] sm:$0xff]
  %v216 = vld [vmem:[%s31 + $0x28] sm:$0xff]
  %v217 = vld [vmem:[%s31 + $0x30] sm:$0xff]
  %v218 = vld [vmem:[%s31 + $0x38] sm:$0xff]
  %v219 = vld [vmem:[%s33] sm:$0xff]
  %v220 = vld [vmem:[%s33 + $0x8] sm:$0xff]
  %v221 = vld [vmem:[%s33 + $0x10] sm:$0xff]
  %v222 = vld [vmem:[%s33 + $0x18] sm:$0xff]
  %v223 = vld [vmem:[%s33 + $0x20] sm:$0xff]
  %v224 = vld [vmem:[%s33 + $0x28] sm:$0xff]
  %v225 = vld [vmem:[%s33 + $0x30] sm:$0xff]
  %v226 = vld [vmem:[%s33 + $0x38] sm:$0xff]
  %v227 = vld [vmem:[%s35] sm:$0xff]
  %v228 = vld [vmem:[%s35 + $0x8] sm:$0xff]
  %v229 = vld [vmem:[%s35 + $0x10] sm:$0xff]
  %v230 = vld [vmem:[%s35 + $0x18] sm:$0xff]
  %v231 = vld [vmem:[%s35 + $0x20] sm:$0xff]
  %v232 = vld [vmem:[%s35 + $0x28] sm:$0xff]
  %v233 = vld [vmem:[%s35 + $0x30] sm:$0xff]
  %v234 = vld [vmem:[%s35 + $0x38] sm:$0xff]
  %v235 = vld [vmem:[%s37] sm:$0xff]
  %v236 = vld [vmem:[%s37 + $0x8] sm:$0xff]
  %v237 = vld [vmem:[%s39] sm:$0xff]
  %v238 = vld [vmem:[%s39 + $0x8] sm:$0xff]
  %v239 = vld [vmem:[%s41] sm:$0xff]
  %v240 = vld [vmem:[%s41 + $0x8] sm:$0xff]
  %v241 = vld [vmem:[%s41 + $0x10] sm:$0xff]
  %v242 = vld [vmem:[%s41 + $0x18] sm:$0xff]
  %v243 = vld [vmem:[%s43] sm:$0xff]
  %v244 = vld [vmem:[%s43 + $0x8] sm:$0xff]
  %v245 = vld [vmem:[%s43 + $0x10] sm:$0xff]
  %v246 = vld [vmem:[%s43 + $0x18] sm:$0xff]
  %v247 = vld [vmem:[%s45] sm:$0xff]
  %v248 = vld [vmem:[%s45 + $0x8] sm:$0xff]
  %v249 = vld [vmem:[%s45 + $0x10] sm:$0xff]
  %v250 = vld [vmem:[%s45 + $0x18] sm:$0xff]
  %v251 = vld [vmem:[%s45 + $0x20] sm:$0xff]
  %v252 = vld [vmem:[%s45 + $0x28] sm:$0xff]
  %v253 = vld [vmem:[%s45 + $0x30] sm:$0xff]
  %v254 = vld [vmem:[%s45 + $0x38] sm:$0xff]
  %v255 = vld [vmem:[%s47] sm:$0xff]
  %v256 = vld [vmem:[%s47 + $0x8] sm:$0xff]
  %v257 = vld [vmem:[%s47 + $0x10] sm:$0xff]
  %v258 = vld [vmem:[%s47 + $0x18] sm:$0xff]
  %v259 = vld [vmem:[%s47 + $0x20] sm:$0xff]
  %v260 = vld [vmem:[%s47 + $0x28] sm:$0xff]
  %v261 = vld [vmem:[%s47 + $0x30] sm:$0xff]
  %v262 = vld [vmem:[%s47 + $0x38] sm:$0xff]
  %v263 = vld [vmem:[%s49] sm:$0x1]
  %v264 = vld [vmem:[%s51] sm:$0x1]
  %v265 = vld [vmem:[%s53] sm:$0x1]
  %v266 = vld [vmem:[%s55] sm:$0x1]
  %v267 = vld [vmem:[%s57] sm:$0x1]
  %v268 = vld [vmem:[%s59] sm:$0xff]
  %v269 = vld [vmem:[%s59 + $0x8] sm:$0xff]
  %v270 = vld [vmem:[%s59 + $0x10] sm:$0xff]
  %v271 = vld [vmem:[%s59 + $0x18] sm:$0xff]
  %v272 = vld [vmem:[%s59 + $0x20] sm:$0xff]
  %v273 = vld [vmem:[%s59 + $0x28] sm:$0xff]
  %v274 = vld [vmem:[%s59 + $0x30] sm:$0xff]
  %v275 = vld [vmem:[%s59 + $0x38] sm:$0xff]
  %v276 = vld [vmem:[%s59 + $0x40] sm:$0xff]
  %v277 = vld [vmem:[%s59 + $0x48] sm:$0xff]
  %v278 = vld [vmem:[%s59 + $0x50] sm:$0xff]
  %v279 = vld [vmem:[%s59 + $0x58] sm:$0xff]
  %v280 = vld [vmem:[%s59 + $0x60] sm:$0xff]
  %v281 = vld [vmem:[%s59 + $0x68] sm:$0xff]
  %v282 = vld [vmem:[%s59 + $0x70] sm:$0xff]
  %v283 = vld [vmem:[%s59 + $0x78] sm:$0xff]
  %v284 = vld [vmem:[%s59 + $0x80] sm:$0xff]
  %v285 = vld [vmem:[%s59 + $0x88] sm:$0xff]
  %v286 = vld [vmem:[%s59 + $0x90] sm:$0xff]
  %v287 = vld [vmem:[%s59 + $0x98] sm:$0xff]
  %v288 = vld [vmem:[%s59 + $0xa0] sm:$0xff]
  %v289 = vld [vmem:[%s59 + $0xa8] sm:$0xff]
  %v290 = vld [vmem:[%s59 + $0xb0] sm:$0xff]
  %v291 = vld [vmem:[%s59 + $0xb8] sm:$0xff]
  %v292 = vld [vmem:[%s59 + $0xc0] sm:$0xff]
  %v293 = vld [vmem:[%s59 + $0xc8] sm:$0xff]
  %v294 = vld [vmem:[%s59 + $0xd0] sm:$0xff]
  %v295 = vld [vmem:[%s59 + $0xd8] sm:$0xff]
  %v296 = vld [vmem:[%s59 + $0xe0] sm:$0xff]
  %v297 = vld [vmem:[%s59 + $0xe8] sm:$0xff]
  %v298 = vld [vmem:[%s59 + $0xf0] sm:$0xff]
  %v299 = vld [vmem:[%s59 + $0xf8] sm:$0xff]
  %v300 = vld [vmem:[%s59 + $0x100] sm:$0xff]
  %v301 = vld [vmem:[%s59 + $0x108] sm:$0xff]
  %v302 = vld [vmem:[%s59 + $0x110] sm:$0xff]
  %v303 = vld [vmem:[%s59 + $0x118] sm:$0xff]
  %v304 = vld [vmem:[%s59 + $0x120] sm:$0xff]
  %v305 = vld [vmem:[%s59 + $0x128] sm:$0xff]
  %v306 = vld [vmem:[%s59 + $0x130] sm:$0xff]
  %v307 = vld [vmem:[%s59 + $0x138] sm:$0xff]
  %v308 = vld [vmem:[%s59 + $0x140] sm:$0xff]
  %v309 = vld [vmem:[%s59 + $0x148] sm:$0xff]
  %v310 = vld [vmem:[%s59 + $0x150] sm:$0xff]
  %v311 = vld [vmem:[%s59 + $0x158] sm:$0xff]
  %v312 = vld [vmem:[%s59 + $0x160] sm:$0xff]
  %v313 = vld [vmem:[%s59 + $0x168] sm:$0xff]
  %v314 = vld [vmem:[%s59 + $0x170] sm:$0xff]
  %v315 = vld [vmem:[%s59 + $0x178] sm:$0xff]
  %v316 = vld [vmem:[%s59 + $0x180] sm:$0xff]
  %v317 = vld [vmem:[%s59 + $0x188] sm:$0xff]
  %v318 = vld [vmem:[%s59 + $0x190] sm:$0xff]
  %v319 = vld [vmem:[%s59 + $0x198] sm:$0xff]
  %v320 = vld [vmem:[%s59 + $0x1a0] sm:$0xff]
  %v321 = vld [vmem:[%s59 + $0x1a8] sm:$0xff]
  %v322 = vld [vmem:[%s59 + $0x1b0] sm:$0xff]
  %v323 = vld [vmem:[%s59 + $0x1b8] sm:$0xff]
  %v324 = vld [vmem:[%s59 + $0x1c0] sm:$0xff]
  %v325 = vld [vmem:[%s59 + $0x1c8] sm:$0xff]
  %v326 = vld [vmem:[%s59 + $0x1d0] sm:$0xff]
  %v327 = vld [vmem:[%s59 + $0x1d8] sm:$0xff]
  %v328 = vld [vmem:[%s59 + $0x1e0] sm:$0xff]
  %v329 = vld [vmem:[%s59 + $0x1e8] sm:$0xff]
  %v330 = vld [vmem:[%s59 + $0x1f0] sm:$0xff]
  %v331 = vld [vmem:[%s59 + $0x1f8] sm:$0xff]
  %v332 = vld [vmem:[%s61] sm:$0xff]
  %v333 = vld [vmem:[%s61 + $0x8] sm:$0xff]
  %v334 = vld [vmem:[%s61 + $0x10] sm:$0xff]
  %v335 = vld [vmem:[%s61 + $0x18] sm:$0xff]
  %v336 = vld [vmem:[%s61 + $0x20] sm:$0xff]
  %v337 = vld [vmem:[%s61 + $0x28] sm:$0xff]
  %v338 = vld [vmem:[%s61 + $0x30] sm:$0xff]
  %v339 = vld [vmem:[%s61 + $0x38] sm:$0xff]
  %v340 = vld [vmem:[%s61 + $0x40] sm:$0xff]
  %v341 = vld [vmem:[%s61 + $0x48] sm:$0xff]
  %v342 = vld [vmem:[%s61 + $0x50] sm:$0xff]
  %v343 = vld [vmem:[%s61 + $0x58] sm:$0xff]
  %v344 = vld [vmem:[%s61 + $0x60] sm:$0xff]
  %v345 = vld [vmem:[%s61 + $0x68] sm:$0xff]
  %v346 = vld [vmem:[%s61 + $0x70] sm:$0xff]
  %v347 = vld [vmem:[%s61 + $0x78] sm:$0xff]
  %v348 = vld [vmem:[%s63] sm:$0xff]
  %v349 = vld [vmem:[%s63 + $0x8] sm:$0xff]
  %v350 = vld [vmem:[%s63 + $0x10] sm:$0xff]
  %v351 = vld [vmem:[%s63 + $0x18] sm:$0xff]
  %v352 = vld [vmem:[%s63 + $0x20] sm:$0xff]
  %v353 = vld [vmem:[%s63 + $0x28] sm:$0xff]
  %v354 = vld [vmem:[%s63 + $0x30] sm:$0xff]
  %v355 = vld [vmem:[%s63 + $0x38] sm:$0xff]
  %v356 = vld [vmem:[%s63 + $0x40] sm:$0xff]
  %v357 = vld [vmem:[%s63 + $0x48] sm:$0xff]
  %v358 = vld [vmem:[%s63 + $0x50] sm:$0xff]
  %v359 = vld [vmem:[%s63 + $0x58] sm:$0xff]
  %v360 = vld [vmem:[%s63 + $0x60] sm:$0xff]
  %v361 = vld [vmem:[%s63 + $0x68] sm:$0xff]
  %v362 = vld [vmem:[%s63 + $0x70] sm:$0xff]
  %v363 = vld [vmem:[%s63 + $0x78] sm:$0xff]
  %v364 = vld [vmem:[%s65] sm:$0xff]
  %v365 = vld [vmem:[%s65 + $0x8] sm:$0xff]
  %v366 = vld [vmem:[%s65 + $0x10] sm:$0xff]
  %v367 = vld [vmem:[%s65 + $0x18] sm:$0xff]
  %369 = vset.pattern.permute.xlu0 0
  %370 = vperm.xlu0 %369, %v158
  %v371 = vpop.permute.xlu0 %370
  %v381 = vcombine.high %v145, %v145
  %v382 = vcombine.high %v146, %v146
  %v383 = vcombine.high %v147, %v147
  %v384 = vcombine.high %v148, %v148
  %v385 = vcombine.high %v149, %v149
  %v386 = vcombine.high %v150, %v150
  %v387 = vcombine.high %v151, %v151
  %v388 = vcombine.high %v152, %v152
  %vm389 = vcmask 23552
  %v391 = vsel %vm389, %v157, 0
  %vm393 = vcmask 1042432
  %v394 = vsel %vm393, %v145, 0
  %v396 = vsel %vm393, %v381, 0
  %v398 = vsel %vm393, %v146, 0
  %v400 = vsel %vm393, %v382, 0
  %v402 = vsel %vm393, %v147, 0
  %v404 = vsel %vm393, %v383, 0
  %v406 = vsel %vm393, %v148, 0
  %v408 = vsel %vm393, %v384, 0
  %v410 = vsel %vm393, %v149, 0
  %v412 = vsel %vm393, %v385, 0
  %v414 = vsel %vm393, %v150, 0
  %v416 = vsel %vm393, %v386, 0
  %v418 = vsel %vm393, %v151, 0
  %v420 = vsel %vm393, %v387, 0
  %v422 = vsel %vm393, %v152, 0
  %v424 = vsel %vm393, %v388, 0
  %426 = vmatprep.subr.mxu0 %v396
  %427 = vmatpush1.msra.mxu0 %v394
  %428 = vmatprep.subr.mxu0 0.0
  %429 = vmatpush1.msra.mxu0 0.0
  %430 = vmatprep.subr.mxu0 0.0
  %431 = vmatpush1.msra.mxu0 0.0
  %432 = vmatprep.subr.mxu0 0.0
  %433 = vmatpush1.msra.mxu0 0.0
  %434 = vmatprep.subr.mxu0 0.0
  %435 = vmatpush1.msra.mxu0 0.0
  %436 = vmatprep.subr.mxu0 0.0
  %437 = vmatpush1.msra.mxu0 0.0
  %438 = vmatprep.subr.mxu0 0.0
  %439 = vmatpush1.msra.mxu0 0.0
  %440 = vmatprep.subr.mxu0 0.0
  %441 = vmatpush1.msra.mxu0 0.0
  %442 = vmatprep.subr.mxu0 0.0
  %443 = vmatpush1.msra.mxu0 0.0
  %444 = vmatprep.subr.mxu0 0.0
  %445 = vmatpush1.msra.mxu0 0.0
  %446 = vmatprep.subr.mxu0 0.0
  %447 = vmatpush1.msra.mxu0 0.0
  %448 = vmatprep.subr.mxu0 0.0
  %449 = vmatpush1.msra.mxu0 0.0
  %450 = vmatprep.subr.mxu0 0.0
  %451 = vmatpush1.msra.mxu0 0.0
  %452 = vmatprep.subr.mxu0 0.0
  %453 = vmatpush1.msra.mxu0 0.0
  %454 = vmatprep.subr.mxu0 0.0
  %455 = vmatpush1.msra.mxu0 0.0
  %456 = vmatprep.subr.mxu0 0.0
  %457 = vmatpush1.msra.mxu0 0.0
  %458 = vmatprep.subr.mxu0 0.0
  %459 = vmatpush1.msra.mxu0 0.0
  %460 = vmatprep.subr.mxu0 0.0
  %461 = vmatpush1.msra.mxu0 0.0
  %462 = vmatprep.subr.mxu0 0.0
  %463 = vmatpush1.msra.mxu0 0.0
  %464 = vmatprep.subr.mxu0 0.0
  %465 = vmatpush1.msra.mxu0 0.0
  %466 = vmatprep.subr.mxu0 0.0
  %467 = vmatpush1.msra.mxu0 0.0
  %468 = vmatprep.subr.mxu0 0.0
  %469 = vmatpush1.msra.mxu0 0.0
  %470 = vmatprep.subr.mxu0 0.0
  %471 = vmatpush1.msra.mxu0 0.0
  %472 = vmatprep.subr.mxu0 0.0
  %473 = vmatpush1.msra.mxu0 0.0
  %474 = vmatprep.subr.mxu0 0.0
  %475 = vmatpush1.msra.mxu0 0.0
  %476 = vmatprep.subr.mxu0 0.0
  %477 = vmatpush1.msra.mxu0 0.0
  %478 = vmatprep.subr.mxu0 0.0
  %479 = vmatpush1.msra.mxu0 0.0
  %480 = vmatprep.subr.mxu0 0.0
  %481 = vmatpush1.msra.mxu0 0.0
  %482 = vmatprep.subr.mxu0 0.0
  %483 = vmatpush1.msra.mxu0 0.0
  %484 = vmatprep.subr.mxu0 0.0
  %485 = vmatpush1.msra.mxu0 0.0
  %486 = vmatprep.subr.mxu0 0.0
  %487 = vmatpush1.msra.mxu0 0.0
  %488 = vmatprep.subr.mxu0 0.0
  %489 = vmatpush1.msra.mxu0 0.0
  %490 = vmatprep.mubr.f32.mxu0 0.0
  %491 = vmatmul.mubr.f32.gmra.mrb[0].mxu0 %v391
  %v492 = vpop.f32.mrb[0].mxu0
  %v493 = vadd.f32 %v371, %v492
  %v494 = vpop.f32.mrb[0].mxu0
  %v495 = vadd.f32 %v371, %v494
  %496 = vdwg.mxu0
  %497 = vmatprep.subr.mxu0 %v400
  %498 = vmatpush1.msra.mxu0 %v398
  %499 = vmatprep.subr.mxu0 0.0
  %500 = vmatpush1.msra.mxu0 0.0
  %501 = vmatprep.subr.mxu0 0.0
  %502 = vmatpush1.msra.mxu0 0.0
  %503 = vmatprep.subr.mxu0 0.0
  %504 = vmatpush1.msra.mxu0 0.0
  %505 = vmatprep.subr.mxu0 0.0
  %506 = vmatpush1.msra.mxu0 0.0
  %507 = vmatprep.subr.mxu0 0.0
  %508 = vmatpush1.msra.mxu0 0.0
  %509 = vmatprep.subr.mxu0 0.0
  %510 = vmatpush1.msra.mxu0 0.0
  %511 = vmatprep.subr.mxu0 0.0
  %512 = vmatpush1.msra.mxu0 0.0
  %513 = vmatprep.subr.mxu0 0.0
  %514 = vmatpush1.msra.mxu0 0.0
  %515 = vmatprep.subr.mxu0 0.0
  %516 = vmatpush1.msra.mxu0 0.0
  %517 = vmatprep.subr.mxu0 0.0
  %518 = vmatpush1.msra.mxu0 0.0
  %519 = vmatprep.subr.mxu0 0.0
  %520 = vmatpush1.msra.mxu0 0.0
  %521 = vmatprep.subr.mxu0 0.0
  %522 = vmatpush1.msra.mxu0 0.0
  %523 = vmatprep.subr.mxu0 0.0
  %524 = vmatpush1.msra.mxu0 0.0
  %525 = vmatprep.subr.mxu0 0.0
  %526 = vmatpush1.msra.mxu0 0.0
  %527 = vmatprep.subr.mxu0 0.0
  %528 = vmatpush1.msra.mxu0 0.0
  %529 = vmatprep.subr.mxu0 0.0
  %530 = vmatpush1.msra.mxu0 0.0
  %531 = vmatprep.subr.mxu0 0.0
  %532 = vmatpush1.msra.mxu0 0.0
  %533 = vmatprep.subr.mxu0 0.0
  %534 = vmatpush1.msra.mxu0 0.0
  %535 = vmatprep.subr.mxu0 0.0
  %536 = vmatpush1.msra.mxu0 0.0
  %537 = vmatprep.subr.mxu0 0.0
  %538 = vmatpush1.msra.mxu0 0.0
  %539 = vmatprep.subr.mxu0 0.0
  %540 = vmatpush1.msra.mxu0 0.0
  %541 = vmatprep.subr.mxu0 0.0
  %542 = vmatpush1.msra.mxu0 0.0
  %543 = vmatprep.subr.mxu0 0.0
  %544 = vmatpush1.msra.mxu0 0.0
  %545 = vmatprep.subr.mxu0 0.0
  %546 = vmatpush1.msra.mxu0 0.0
  %547 = vmatprep.subr.mxu0 0.0
  %548 = vmatpush1.msra.mxu0 0.0
  %549 = vmatprep.subr.mxu0 0.0
  %550 = vmatpush1.msra.mxu0 0.0
  %551 = vmatprep.subr.mxu0 0.0
  %552 = vmatpush1.msra.mxu0 0.0
  %553 = vmatprep.subr.mxu0 0.0
  %554 = vmatpush1.msra.mxu0 0.0
  %555 = vmatprep.subr.mxu0 0.0
  %556 = vmatpush1.msra.mxu0 0.0
  %557 = vmatprep.subr.mxu0 0.0
  %558 = vmatpush1.msra.mxu0 0.0
  %559 = vmatprep.subr.mxu0 0.0
  %560 = vmatpush1.msra.mxu0 0.0
  %561 = vmatprep.mubr.f32.mxu0 0.0
  %562 = vmatmul.mubr.f32.gmra.mrb[0].mxu0 %v391
  %v563 = vpop.f32.mrb[0].mxu0
  %v564 = vadd.f32 %v371, %v563
  %v565 = vpop.f32.mrb[0].mxu0
  %v566 = vadd.f32 %v371, %v565
  %567 = vdwg.mxu0
  %568 = vmatprep.subr.mxu0 %v404
  %569 = vmatpush1.msra.mxu0 %v402
  %570 = vmatprep.subr.mxu0 0.0
  %571 = vmatpush1.msra.mxu0 0.0
  %572 = vmatprep.subr.mxu0 0.0
  %573 = vmatpush1.msra.mxu0 0.0
  %574 = vmatprep.subr.mxu0 0.0
  %575 = vmatpush1.msra.mxu0 0.0
  %576 = vmatprep.subr.mxu0 0.0
  %577 = vmatpush1.msra.mxu0 0.0
  %578 = vmatprep.subr.mxu0 0.0
  %579 = vmatpush1.msra.mxu0 0.0
  %580 = vmatprep.subr.mxu0 0.0
  %581 = vmatpush1.msra.mxu0 0.0
  %582 = vmatprep.subr.mxu0 0.0
  %583 = vmatpush1.msra.mxu0 0.0
  %584 = vmatprep.subr.mxu0 0.0
  %585 = vmatpush1.msra.mxu0 0.0
  %586 = vmatprep.subr.mxu0 0.0
  %587 = vmatpush1.msra.mxu0 0.0
  %588 = vmatprep.subr.mxu0 0.0
  %589 = vmatpush1.msra.mxu0 0.0
  %590 = vmatprep.subr.mxu0 0.0
  %591 = vmatpush1.msra.mxu0 0.0
  %592 = vmatprep.subr.mxu0 0.0
  %593 = vmatpush1.msra.mxu0 0.0
  %594 = vmatprep.subr.mxu0 0.0
  %595 = vmatpush1.msra.mxu0 0.0
  %596 = vmatprep.subr.mxu0 0.0
  %597 = vmatpush1.msra.mxu0 0.0
  %598 = vmatprep.subr.mxu0 0.0
  %599 = vmatpush1.msra.mxu0 0.0
  %600 = vmatprep.subr.mxu0 0.0
  %601 = vmatpush1.msra.mxu0 0.0
  %602 = vmatprep.subr.mxu0 0.0
  %603 = vmatpush1.msra.mxu0 0.0
  %604 = vmatprep.subr.mxu0 0.0
  %605 = vmatpush1.msra.mxu0 0.0
  %606 = vmatprep.subr.mxu0 0.0
  %607 = vmatpush1.msra.mxu0 0.0
  %608 = vmatprep.subr.mxu0 0.0
  %609 = vmatpush1.msra.mxu0 0.0
  %610 = vmatprep.subr.mxu0 0.0
  %611 = vmatpush1.msra.mxu0 0.0
  %612 = vmatprep.subr.mxu0 0.0
  %613 = vmatpush1.msra.mxu0 0.0
  %614 = vmatprep.subr.mxu0 0.0
  %615 = vmatpush1.msra.mxu0 0.0
  %616 = vmatprep.subr.mxu0 0.0
  %617 = vmatpush1.msra.mxu0 0.0
  %618 = vmatprep.subr.mxu0 0.0
  %619 = vmatpush1.msra.mxu0 0.0
  %620 = vmatprep.subr.mxu0 0.0
  %621 = vmatpush1.msra.mxu0 0.0
  %622 = vmatprep.subr.mxu0 0.0
  %623 = vmatpush1.msra.mxu0 0.0
  %624 = vmatprep.subr.mxu0 0.0
  %625 = vmatpush1.msra.mxu0 0.0
  %626 = vmatprep.subr.mxu0 0.0
  %627 = vmatpush1.msra.mxu0 0.0
  %628 = vmatprep.subr.mxu0 0.0
  %629 = vmatpush1.msra.mxu0 0.0
  %630 = vmatprep.subr.mxu0 0.0
  %631 = vmatpush1.msra.mxu0 0.0
  %632 = vmatprep.mubr.f32.mxu0 0.0
  %633 = vmatmul.mubr.f32.gmra.mrb[0].mxu0 %v391
  %v634 = vpop.f32.mrb[0].mxu0
  %v635 = vadd.f32 %v371, %v634
  %v636 = vpop.f32.mrb[0].mxu0
  %v637 = vadd.f32 %v371, %v636
  %638 = vdwg.mxu0
  %639 = vmatprep.subr.mxu0 %v408
  %640 = vmatpush1.msra.mxu0 %v406
  %641 = vmatprep.subr.mxu0 0.0
  %642 = vmatpush1.msra.mxu0 0.0
  %643 = vmatprep.subr.mxu0 0.0
  %644 = vmatpush1.msra.mxu0 0.0
  %645 = vmatprep.subr.mxu0 0.0
  %646 = vmatpush1.msra.mxu0 0.0
  %647 = vmatprep.subr.mxu0 0.0
  %648 = vmatpush1.msra.mxu0 0.0
  %649 = vmatprep.subr.mxu0 0.0
  %650 = vmatpush1.msra.mxu0 0.0
  %651 = vmatprep.subr.mxu0 0.0
  %652 = vmatpush1.msra.mxu0 0.0
  %653 = vmatprep.subr.mxu0 0.0
  %654 = vmatpush1.msra.mxu0 0.0
  %655 = vmatprep.subr.mxu0 0.0
  %656 = vmatpush1.msra.mxu0 0.0
  %657 = vmatprep.subr.mxu0 0.0
  %658 = vmatpush1.msra.mxu0 0.0
  %659 = vmatprep.subr.mxu0 0.0
  %660 = vmatpush1.msra.mxu0 0.0
  %661 = vmatprep.subr.mxu0 0.0
  %662 = vmatpush1.msra.mxu0 0.0
  %663 = vmatprep.subr.mxu0 0.0
  %664 = vmatpush1.msra.mxu0 0.0
  %665 = vmatprep.subr.mxu0 0.0
  %666 = vmatpush1.msra.mxu0 0.0
  %667 = vmatprep.subr.mxu0 0.0
  %668 = vmatpush1.msra.mxu0 0.0
  %669 = vmatprep.subr.mxu0 0.0
  %670 = vmatpush1.msra.mxu0 0.0
  %671 = vmatprep.subr.mxu0 0.0
  %672 = vmatpush1.msra.mxu0 0.0
  %673 = vmatprep.subr.mxu0 0.0
  %674 = vmatpush1.msra.mxu0 0.0
  %675 = vmatprep.subr.mxu0 0.0
  %676 = vmatpush1.msra.mxu0 0.0
  %677 = vmatprep.subr.mxu0 0.0
  %678 = vmatpush1.msra.mxu0 0.0
  %679 = vmatprep.subr.mxu0 0.0
  %680 = vmatpush1.msra.mxu0 0.0
  %681 = vmatprep.subr.mxu0 0.0
  %682 = vmatpush1.msra.mxu0 0.0
  %683 = vmatprep.subr.mxu0 0.0
  %684 = vmatpush1.msra.mxu0 0.0
  %685 = vmatprep.subr.mxu0 0.0
  %686 = vmatpush1.msra.mxu0 0.0
  %687 = vmatprep.subr.mxu0 0.0
  %688 = vmatpush1.msra.mxu0 0.0
  %689 = vmatprep.subr.mxu0 0.0
  %690 = vmatpush1.msra.mxu0 0.0
  %691 = vmatprep.subr.mxu0 0.0
  %692 = vmatpush1.msra.mxu0 0.0
  %693 = vmatprep.subr.mxu0 0.0
  %694 = vmatpush1.msra.mxu0 0.0
  %695 = vmatprep.subr.mxu0 0.0
  %696 = vmatpush1.msra.mxu0 0.0
  %697 = vmatprep.subr.mxu0 0.0
  %698 = vmatpush1.msra.mxu0 0.0
  %699 = vmatprep.subr.mxu0 0.0
  %700 = vmatpush1.msra.mxu0 0.0
  %701 = vmatprep.subr.mxu0 0.0
  %702 = vmatpush1.msra.mxu0 0.0
  %703 = vmatprep.mubr.f32.mxu0 0.0
  %704 = vmatmul.mubr.f32.gmra.mrb[0].mxu0 %v391
  %v705 = vpop.f32.mrb[0].mxu0
  %v706 = vadd.f32 %v371, %v705
  %v707 = vpop.f32.mrb[0].mxu0
  %v708 = vadd.f32 %v371, %v707
  %709 = vdwg.mxu0
  %710 = vmatprep.subr.mxu0 %v412
  %711 = vmatpush1.msra.mxu0 %v410
  %712 = vmatprep.subr.mxu0 0.0
  %713 = vmatpush1.msra.mxu0 0.0
  %714 = vmatprep.subr.mxu0 0.0
  %715 = vmatpush1.msra.mxu0 0.0
  %716 = vmatprep.subr.mxu0 0.0
  %717 = vmatpush1.msra.mxu0 0.0
  %718 = vmatprep.subr.mxu0 0.0
  %719 = vmatpush1.msra.mxu0 0.0
  %720 = vmatprep.subr.mxu0 0.0
  %721 = vmatpush1.msra.mxu0 0.0
  %722 = vmatprep.subr.mxu0 0.0
  %723 = vmatpush1.msra.mxu0 0.0
  %724 = vmatprep.subr.mxu0 0.0
  %725 = vmatpush1.msra.mxu0 0.0
  %726 = vmatprep.subr.mxu0 0.0
  %727 = vmatpush1.msra.mxu0 0.0
  %728 = vmatprep.subr.mxu0 0.0
  %729 = vmatpush1.msra.mxu0 0.0
  %730 = vmatprep.subr.mxu0 0.0
  %731 = vmatpush1.msra.mxu0 0.0
  %732 = vmatprep.subr.mxu0 0.0
  %733 = vmatpush1.msra.mxu0 0.0
  %734 = vmatprep.subr.mxu0 0.0
  %735 = vmatpush1.msra.mxu0 0.0
  %736 = vmatprep.subr.mxu0 0.0
  %737 = vmatpush1.msra.mxu0 0.0
  %738 = vmatprep.subr.mxu0 0.0
  %739 = vmatpush1.msra.mxu0 0.0
  %740 = vmatprep.subr.mxu0 0.0
  %741 = vmatpush1.msra.mxu0 0.0
  %742 = vmatprep.subr.mxu0 0.0
  %743 = vmatpush1.msra.mxu0 0.0
  %744 = vmatprep.subr.mxu0 0.0
  %745 = vmatpush1.msra.mxu0 0.0
  %746 = vmatprep.subr.mxu0 0.0
  %747 = vmatpush1.msra.mxu0 0.0
  %748 = vmatprep.subr.mxu0 0.0
  %749 = vmatpush1.msra.mxu0 0.0
  %750 = vmatprep.subr.mxu0 0.0
  %751 = vmatpush1.msra.mxu0 0.0
  %752 = vmatprep.subr.mxu0 0.0
  %753 = vmatpush1.msra.mxu0 0.0
  %754 = vmatprep.subr.mxu0 0.0
  %755 = vmatpush1.msra.mxu0 0.0
  %756 = vmatprep.subr.mxu0 0.0
  %757 = vmatpush1.msra.mxu0 0.0
  %758 = vmatprep.subr.mxu0 0.0
  %759 = vmatpush1.msra.mxu0 0.0
  %760 = vmatprep.subr.mxu0 0.0
  %761 = vmatpush1.msra.mxu0 0.0
  %762 = vmatprep.subr.mxu0 0.0
  %763 = vmatpush1.msra.mxu0 0.0
  %764 = vmatprep.subr.mxu0 0.0
  %765 = vmatpush1.msra.mxu0 0.0
  %766 = vmatprep.subr.mxu0 0.0
  %767 = vmatpush1.msra.mxu0 0.0
  %768 = vmatprep.subr.mxu0 0.0
  %769 = vmatpush1.msra.mxu0 0.0
  %770 = vmatprep.subr.mxu0 0.0
  %771 = vmatpush1.msra.mxu0 0.0
  %772 = vmatprep.subr.mxu0 0.0
  %773 = vmatpush1.msra.mxu0 0.0
  %774 = vmatprep.mubr.f32.mxu0 0.0
  %775 = vmatmul.mubr.f32.gmra.mrb[0].mxu0 %v391
  %v776 = vpop.f32.mrb[0].mxu0
  %v777 = vadd.f32 %v371, %v776
  %v778 = vpop.f32.mrb[0].mxu0
  %v779 = vadd.f32 %v371, %v778
  %780 = vdwg.mxu0
  %781 = vmatprep.subr.mxu0 %v416
  %782 = vmatpush1.msra.mxu0 %v414
  %783 = vmatprep.subr.mxu0 0.0
  %784 = vmatpush1.msra.mxu0 0.0
  %785 = vmatprep.subr.mxu0 0.0
  %786 = vmatpush1.msra.mxu0 0.0
  %787 = vmatprep.subr.mxu0 0.0
  %788 = vmatpush1.msra.mxu0 0.0
  %789 = vmatprep.subr.mxu0 0.0
  %790 = vmatpush1.msra.mxu0 0.0
  %791 = vmatprep.subr.mxu0 0.0
  %792 = vmatpush1.msra.mxu0 0.0
  %793 = vmatprep.subr.mxu0 0.0
  %794 = vmatpush1.msra.mxu0 0.0
  %795 = vmatprep.subr.mxu0 0.0
  %796 = vmatpush1.msra.mxu0 0.0
  %797 = vmatprep.subr.mxu0 0.0
  %798 = vmatpush1.msra.mxu0 0.0
  %799 = vmatprep.subr.mxu0 0.0
  %800 = vmatpush1.msra.mxu0 0.0
  %801 = vmatprep.subr.mxu0 0.0
  %802 = vmatpush1.msra.mxu0 0.0
  %803 = vmatprep.subr.mxu0 0.0
  %804 = vmatpush1.msra.mxu0 0.0
  %805 = vmatprep.subr.mxu0 0.0
  %806 = vmatpush1.msra.mxu0 0.0
  %807 = vmatprep.subr.mxu0 0.0
  %808 = vmatpush1.msra.mxu0 0.0
  %809 = vmatprep.subr.mxu0 0.0
  %810 = vmatpush1.msra.mxu0 0.0
  %811 = vmatprep.subr.mxu0 0.0
  %812 = vmatpush1.msra.mxu0 0.0
  %813 = vmatprep.subr.mxu0 0.0
  %814 = vmatpush1.msra.mxu0 0.0
  %815 = vmatprep.subr.mxu0 0.0
  %816 = vmatpush1.msra.mxu0 0.0
  %817 = vmatprep.subr.mxu0 0.0
  %818 = vmatpush1.msra.mxu0 0.0
  %819 = vmatprep.subr.mxu0 0.0
  %820 = vmatpush1.msra.mxu0 0.0
  %821 = vmatprep.subr.mxu0 0.0
  %822 = vmatpush1.msra.mxu0 0.0
  %823 = vmatprep.subr.mxu0 0.0
  %824 = vmatpush1.msra.mxu0 0.0
  %825 = vmatprep.subr.mxu0 0.0
  %826 = vmatpush1.msra.mxu0 0.0
  %827 = vmatprep.subr.mxu0 0.0
  %828 = vmatpush1.msra.mxu0 0.0
  %829 = vmatprep.subr.mxu0 0.0
  %830 = vmatpush1.msra.mxu0 0.0
  %831 = vmatprep.subr.mxu0 0.0
  %832 = vmatpush1.msra.mxu0 0.0
  %833 = vmatprep.subr.mxu0 0.0
  %834 = vmatpush1.msra.mxu0 0.0
  %835 = vmatprep.subr.mxu0 0.0
  %836 = vmatpush1.msra.mxu0 0.0
  %837 = vmatprep.subr.mxu0 0.0
  %838 = vmatpush1.msra.mxu0 0.0
  %839 = vmatprep.subr.mxu0 0.0
  %840 = vmatpush1.msra.mxu0 0.0
  %841 = vmatprep.subr.mxu0 0.0
  %842 = vmatpush1.msra.mxu0 0.0
  %843 = vmatprep.subr.mxu0 0.0
  %844 = vmatpush1.msra.mxu0 0.0
  %845 = vmatprep.mubr.f32.mxu0 0.0
  %846 = vmatmul.mubr.f32.gmra.mrb[0].mxu0 %v391
  %v847 = vpop.f32.mrb[0].mxu0
  %v848 = vadd.f32 %v371, %v847
  %v849 = vpop.f32.mrb[0].mxu0
  %v850 = vadd.f32 %v371, %v849
  %851 = vdwg.mxu0
  %852 = vmatprep.subr.mxu0 %v420
  %853 = vmatpush1.msra.mxu0 %v418
  %854 = vmatprep.subr.mxu0 0.0
  %855 = vmatpush1.msra.mxu0 0.0
  %856 = vmatprep.subr.mxu0 0.0
  %857 = vmatpush1.msra.mxu0 0.0
  %858 = vmatprep.subr.mxu0 0.0
  %859 = vmatpush1.msra.mxu0 0.0
  %860 = vmatprep.subr.mxu0 0.0
  %861 = vmatpush1.msra.mxu0 0.0
  %862 = vmatprep.subr.mxu0 0.0
  %863 = vmatpush1.msra.mxu0 0.0
  %864 = vmatprep.subr.mxu0 0.0
  %865 = vmatpush1.msra.mxu0 0.0
  %866 = vmatprep.subr.mxu0 0.0
  %867 = vmatpush1.msra.mxu0 0.0
  %868 = vmatprep.subr.mxu0 0.0
  %869 = vmatpush1.msra.mxu0 0.0
  %870 = vmatprep.subr.mxu0 0.0
  %871 = vmatpush1.msra.mxu0 0.0
  %872 = vmatprep.subr.mxu0 0.0
  %873 = vmatpush1.msra.mxu0 0.0
  %874 = vmatprep.subr.mxu0 0.0
  %875 = vmatpush1.msra.mxu0 0.0
  %876 = vmatprep.subr.mxu0 0.0
  %877 = vmatpush1.msra.mxu0 0.0
  %878 = vmatprep.subr.mxu0 0.0
  %879 = vmatpush1.msra.mxu0 0.0
  %880 = vmatprep.subr.mxu0 0.0
  %881 = vmatpush1.msra.mxu0 0.0
  %882 = vmatprep.subr.mxu0 0.0
  %883 = vmatpush1.msra.mxu0 0.0
  %884 = vmatprep.subr.mxu0 0.0
  %885 = vmatpush1.msra.mxu0 0.0
  %886 = vmatprep.subr.mxu0 0.0
  %887 = vmatpush1.msra.mxu0 0.0
  %888 = vmatprep.subr.mxu0 0.0
  %889 = vmatpush1.msra.mxu0 0.0
  %890 = vmatprep.subr.mxu0 0.0
  %891 = vmatpush1.msra.mxu0 0.0
  %892 = vmatprep.subr.mxu0 0.0
  %893 = vmatpush1.msra.mxu0 0.0
  %894 = vmatprep.subr.mxu0 0.0
  %895 = vmatpush1.msra.mxu0 0.0
  %896 = vmatprep.subr.mxu0 0.0
  %897 = vmatpush1.msra.mxu0 0.0
  %898 = vmatprep.subr.mxu0 0.0
  %899 = vmatpush1.msra.mxu0 0.0
  %900 = vmatprep.subr.mxu0 0.0
  %901 = vmatpush1.msra.mxu0 0.0
  %902 = vmatprep.subr.mxu0 0.0
  %903 = vmatpush1.msra.mxu0 0.0
  %904 = vmatprep.subr.mxu0 0.0
  %905 = vmatpush1.msra.mxu0 0.0
  %906 = vmatprep.subr.mxu0 0.0
  %907 = vmatpush1.msra.mxu0 0.0
  %908 = vmatprep.subr.mxu0 0.0
  %909 = vmatpush1.msra.mxu0 0.0
  %910 = vmatprep.subr.mxu0 0.0
  %911 = vmatpush1.msra.mxu0 0.0
  %912 = vmatprep.subr.mxu0 0.0
  %913 = vmatpush1.msra.mxu0 0.0
  %914 = vmatprep.subr.mxu0 0.0
  %915 = vmatpush1.msra.mxu0 0.0
  %916 = vmatprep.mubr.f32.mxu0 0.0
  %917 = vmatmul.mubr.f32.gmra.mrb[0].mxu0 %v391
  %v918 = vpop.f32.mrb[0].mxu0
  %v919 = vadd.f32 %v371, %v918
  %v920 = vpop.f32.mrb[0].mxu0
  %v921 = vadd.f32 %v371, %v920
  %922 = vdwg.mxu0
  %923 = vmatprep.subr.mxu0 %v424
  %924 = vmatpush1.msra.mxu0 %v422
  %925 = vmatprep.subr.mxu0 0.0
  %926 = vmatpush1.msra.mxu0 0.0
  %927 = vmatprep.subr.mxu0 0.0
  %928 = vmatpush1.msra.mxu0 0.0
  %929 = vmatprep.subr.mxu0 0.0
  %930 = vmatpush1.msra.mxu0 0.0
  %931 = vmatprep.subr.mxu0 0.0
  %932 = vmatpush1.msra.mxu0 0.0
  %933 = vmatprep.subr.mxu0 0.0
  %934 = vmatpush1.msra.mxu0 0.0
  %935 = vmatprep.subr.mxu0 0.0
  %936 = vmatpush1.msra.mxu0 0.0
  %937 = vmatprep.subr.mxu0 0.0
  %938 = vmatpush1.msra.mxu0 0.0
  %939 = vmatprep.subr.mxu0 0.0
  %940 = vmatpush1.msra.mxu0 0.0
  %941 = vmatprep.subr.mxu0 0.0
  %942 = vmatpush1.msra.mxu0 0.0
  %943 = vmatprep.subr.mxu0 0.0
  %944 = vmatpush1.msra.mxu0 0.0
  %945 = vmatprep.subr.mxu0 0.0
  %946 = vmatpush1.msra.mxu0 0.0
  %947 = vmatprep.subr.mxu0 0.0
  %948 = vmatpush1.msra.mxu0 0.0
  %949 = vmatprep.subr.mxu0 0.0
  %950 = vmatpush1.msra.mxu0 0.0
  %951 = vmatprep.subr.mxu0 0.0
  %952 = vmatpush1.msra.mxu0 0.0
  %953 = vmatprep.subr.mxu0 0.0
  %954 = vmatpush1.msra.mxu0 0.0
  %955 = vmatprep.subr.mxu0 0.0
  %956 = vmatpush1.msra.mxu0 0.0
  %957 = vmatprep.subr.mxu0 0.0
  %958 = vmatpush1.msra.mxu0 0.0
  %959 = vmatprep.subr.mxu0 0.0
  %960 = vmatpush1.msra.mxu0 0.0
  %961 = vmatprep.subr.mxu0 0.0
  %962 = vmatpush1.msra.mxu0 0.0
  %963 = vmatprep.subr.mxu0 0.0
  %964 = vmatpush1.msra.mxu0 0.0
  %965 = vmatprep.subr.mxu0 0.0
  %966 = vmatpush1.msra.mxu0 0.0
  %967 = vmatprep.subr.mxu0 0.0
  %968 = vmatpush1.msra.mxu0 0.0
  %969 = vmatprep.subr.mxu0 0.0
  %970 = vmatpush1.msra.mxu0 0.0
  %971 = vmatprep.subr.mxu0 0.0
  %972 = vmatpush1.msra.mxu0 0.0
  %973 = vmatprep.subr.mxu0 0.0
  %974 = vmatpush1.msra.mxu0 0.0
  %975 = vmatprep.subr.mxu0 0.0
  %976 = vmatpush1.msra.mxu0 0.0
  %977 = vmatprep.subr.mxu0 0.0
  %978 = vmatpush1.msra.mxu0 0.0
  %979 = vmatprep.subr.mxu0 0.0
  %980 = vmatpush1.msra.mxu0 0.0
  %981 = vmatprep.subr.mxu0 0.0
  %982 = vmatpush1.msra.mxu0 0.0
  %983 = vmatprep.subr.mxu0 0.0
  %984 = vmatpush1.msra.mxu0 0.0
  %985 = vmatprep.subr.mxu0 0.0
  %986 = vmatpush1.msra.mxu0 0.0
  %987 = vmatprep.mubr.f32.mxu0 0.0
  %988 = vmatmul.mubr.f32.gmra.mrb[0].mxu0 %v391
  %v989 = vpop.f32.mrb[0].mxu0
  %v990 = vadd.f32 %v371, %v989
  %v991 = vpop.f32.mrb[0].mxu0
  %v992 = vadd.f32 %v371, %v991
  %993 = vdwg.mxu0
  %v994 = vmax.f32 %v493, 0.0
  %v995 = vmax.f32 %v495, 0.0
  %v996 = vmax.f32 %v564, 0.0
  %v997 = vmax.f32 %v566, 0.0
  %v998 = vmax.f32 %v635, 0.0
  %v999 = vmax.f32 %v637, 0.0
  %v1000 = vmax.f32 %v706, 0.0
  %v1001 = vmax.f32 %v708, 0.0
  %v1002 = vmax.f32 %v777, 0.0
  %v1003 = vmax.f32 %v779, 0.0
  %v1004 = vmax.f32 %v848, 0.0
  %v1005 = vmax.f32 %v850, 0.0
  %v1006 = vmax.f32 %v919, 0.0
  %v1007 = vmax.f32 %v921, 0.0
  %v1008 = vmax.f32 %v990, 0.0
  %v1009 = vmax.f32 %v992, 0.0
  %1011 = vset.pattern.permute.xlu0 0
  %1012 = vperm.xlu0 %1011, %v161
  %v1013 = vpop.permute.xlu0 %1012
  %1016 = vset.pattern.permute.xlu0 0
  %1017 = vperm.xlu0 %1016, %v162
  %v1018 = vpop.permute.xlu0 %1017
  %v1022 = vcombine.high %v153, %v153
  %v1023 = vcombine.high %v154, %v154
  %v1025 = vsel %vm389, %v159, 0
  %v1028 = vsel %vm389, %v160, 0
  %v1030 = vsel %vm393, %v153, 0
  %v1032 = vsel %vm393, %v1022, 0
  %v1034 = vsel %vm393, %v154, 0
  %v1036 = vsel %vm393, %v1023, 0
  %1038 = vmatprep.subr.mxu0 %v1032
  %1039 = vmatpush1.msra.mxu0 %v1030
  %1040 = vmatprep.subr.mxu0 0.0
  %1041 = vmatpush1.msra.mxu0 0.0
  %1042 = vmatprep.subr.mxu0 0.0
  %1043 = vmatpush1.msra.mxu0 0.0
  %1044 = vmatprep.subr.mxu0 0.0
  %1045 = vmatpush1.msra.mxu0 0.0
  %1046 = vmatprep.subr.mxu0 0.0
  %1047 = vmatpush1.msra.mxu0 0.0
  %1048 = vmatprep.subr.mxu0 0.0
  %1049 = vmatpush1.msra.mxu0 0.0
  %1050 = vmatprep.subr.mxu0 0.0
  %1051 = vmatpush1.msra.mxu0 0.0
  %1052 = vmatprep.subr.mxu0 0.0
  %1053 = vmatpush1.msra.mxu0 0.0
  %1054 = vmatprep.subr.mxu0 0.0
  %1055 = vmatpush1.msra.mxu0 0.0
  %1056 = vmatprep.subr.mxu0 0.0
  %1057 = vmatpush1.msra.mxu0 0.0
  %1058 = vmatprep.subr.mxu0 0.0
  %1059 = vmatpush1.msra.mxu0 0.0
  %1060 = vmatprep.subr.mxu0 0.0
  %1061 = vmatpush1.msra.mxu0 0.0
  %1062 = vmatprep.subr.mxu0 0.0
  %1063 = vmatpush1.msra.mxu0 0.0
  %1064 = vmatprep.subr.mxu0 0.0
  %1065 = vmatpush1.msra.mxu0 0.0
  %1066 = vmatprep.subr.mxu0 0.0
  %1067 = vmatpush1.msra.mxu0 0.0
  %1068 = vmatprep.subr.mxu0 0.0
  %1069 = vmatpush1.msra.mxu0 0.0
  %1070 = vmatprep.subr.mxu0 0.0
  %1071 = vmatpush1.msra.mxu0 0.0
  %1072 = vmatprep.subr.mxu0 0.0
  %1073 = vmatpush1.msra.mxu0 0.0
  %1074 = vmatprep.subr.mxu0 0.0
  %1075 = vmatpush1.msra.mxu0 0.0
  %1076 = vmatprep.subr.mxu0 0.0
  %1077 = vmatpush1.msra.mxu0 0.0
  %1078 = vmatprep.subr.mxu0 0.0
  %1079 = vmatpush1.msra.mxu0 0.0
  %1080 = vmatprep.subr.mxu0 0.0
  %1081 = vmatpush1.msra.mxu0 0.0
  %1082 = vmatprep.subr.mxu0 0.0
  %1083 = vmatpush1.msra.mxu0 0.0
  %1084 = vmatprep.subr.mxu0 0.0
  %1085 = vmatpush1.msra.mxu0 0.0
  %1086 = vmatprep.subr.mxu0 0.0
  %1087 = vmatpush1.msra.mxu0 0.0
  %1088 = vmatprep.subr.mxu0 0.0
  %1089 = vmatpush1.msra.mxu0 0.0
  %1090 = vmatprep.subr.mxu0 0.0
  %1091 = vmatpush1.msra.mxu0 0.0
  %1092 = vmatprep.subr.mxu0 0.0
  %1093 = vmatpush1.msra.mxu0 0.0
  %1094 = vmatprep.subr.mxu0 0.0
  %1095 = vmatpush1.msra.mxu0 0.0
  %1096 = vmatprep.subr.mxu0 0.0
  %1097 = vmatpush1.msra.mxu0 0.0
  %1098 = vmatprep.subr.mxu0 0.0
  %1099 = vmatpush1.msra.mxu0 0.0
  %1100 = vmatprep.subr.mxu0 0.0
  %1101 = vmatpush1.msra.mxu0 0.0
  %1102 = vmatprep.mubr.f32.mxu0 0.0
  %1103 = vmatmul.mubr.f32.gmra.mrb[0].mxu0 %v1025
  %v1104 = vpop.f32.mrb[0].mxu0
  %v1105 = vadd.f32 %v1013, %v1104
  %v1106 = vpop.f32.mrb[0].mxu0
  %v1107 = vadd.f32 %v1013, %v1106
  %1108 = vmatprep.mubr.f32.mxu0 0.0
  %1109 = vmatmul.mubr.f32.gmra.mrb[0].mxu0 %v1028
  %v1110 = vpop.f32.mrb[0].mxu0
  %v1111 = vadd.f32 %v1018, %v1110
  %v1112 = vpop.f32.mrb[0].mxu0
  %v1113 = vadd.f32 %v1018, %v1112
  %1114 = vdwg.mxu0
  %1115 = vmatprep.subr.mxu0 %v1036
  %1116 = vmatpush1.msra.mxu0 %v1034
  %1117 = vmatprep.subr.mxu0 0.0
  %1118 = vmatpush1.msra.mxu0 0.0
  %1119 = vmatprep.subr.mxu0 0.0
  %1120 = vmatpush1.msra.mxu0 0.0
  %1121 = vmatprep.subr.mxu0 0.0
  %1122 = vmatpush1.msra.mxu0 0.0
  %1123 = vmatprep.subr.mxu0 0.0
  %1124 = vmatpush1.msra.mxu0 0.0
  %1125 = vmatprep.subr.mxu0 0.0
  %1126 = vmatpush1.msra.mxu0 0.0
  %1127 = vmatprep.subr.mxu0 0.0
  %1128 = vmatpush1.msra.mxu0 0.0
  %1129 = vmatprep.subr.mxu0 0.0
  %1130 = vmatpush1.msra.mxu0 0.0
  %1131 = vmatprep.subr.mxu0 0.0
  %1132 = vmatpush1.msra.mxu0 0.0
  %1133 = vmatprep.subr.mxu0 0.0
  %1134 = vmatpush1.msra.mxu0 0.0
  %1135 = vmatprep.subr.mxu0 0.0
  %1136 = vmatpush1.msra.mxu0 0.0
  %1137 = vmatprep.subr.mxu0 0.0
  %1138 = vmatpush1.msra.mxu0 0.0
  %1139 = vmatprep.subr.mxu0 0.0
  %1140 = vmatpush1.msra.mxu0 0.0
  %1141 = vmatprep.subr.mxu0 0.0
  %1142 = vmatpush1.msra.mxu0 0.0
  %1143 = vmatprep.subr.mxu0 0.0
  %1144 = vmatpush1.msra.mxu0 0.0
  %1145 = vmatprep.subr.mxu0 0.0
  %1146 = vmatpush1.msra.mxu0 0.0
  %1147 = vmatprep.subr.mxu0 0.0
  %1148 = vmatpush1.msra.mxu0 0.0
  %1149 = vmatprep.subr.mxu0 0.0
  %1150 = vmatpush1.msra.mxu0 0.0
  %1151 = vmatprep.subr.mxu0 0.0
  %1152 = vmatpush1.msra.mxu0 0.0
  %1153 = vmatprep.subr.mxu0 0.0
  %1154 = vmatpush1.msra.mxu0 0.0
  %1155 = vmatprep.subr.mxu0 0.0
  %1156 = vmatpush1.msra.mxu0 0.0
  %1157 = vmatprep.subr.mxu0 0.0
  %1158 = vmatpush1.msra.mxu0 0.0
  %1159 = vmatprep.subr.mxu0 0.0
  %1160 = vmatpush1.msra.mxu0 0.0
  %1161 = vmatprep.subr.mxu0 0.0
  %1162 = vmatpush1.msra.mxu0 0.0
  %1163 = vmatprep.subr.mxu0 0.0
  %1164 = vmatpush1.msra.mxu0 0.0
  %1165 = vmatprep.subr.mxu0 0.0
  %1166 = vmatpush1.msra.mxu0 0.0
  %1167 = vmatprep.subr.mxu0 0.0
  %1168 = vmatpush1.msra.mxu0 0.0
  %1169 = vmatprep.subr.mxu0 0.0
  %1170 = vmatpush1.msra.mxu0 0.0
  %1171 = vmatprep.subr.mxu0 0.0
  %1172 = vmatpush1.msra.mxu0 0.0
  %1173 = vmatprep.subr.mxu0 0.0
  %1174 = vmatpush1.msra.mxu0 0.0
  %1175 = vmatprep.subr.mxu0 0.0
  %1176 = vmatpush1.msra.mxu0 0.0
  %1177 = vmatprep.subr.mxu0 0.0
  %1178 = vmatpush1.msra.mxu0 0.0
  %1179 = vmatprep.mubr.f32.mxu0 0.0
  %1180 = vmatmul.mubr.f32.gmra.mrb[0].mxu0 %v1025
  %v1181 = vpop.f32.mrb[0].mxu0
  %v1182 = vadd.f32 %v1013, %v1181
  %v1183 = vpop.f32.mrb[0].mxu0
  %v1184 = vadd.f32 %v1013, %v1183
  %1185 = vmatprep.mubr.f32.mxu0 0.0
  %1186 = vmatmul.mubr.f32.gmra.mrb[0].mxu0 %v1028
  %v1187 = vpop.f32.mrb[0].mxu0
  %v1188 = vadd.f32 %v1018, %v1187
  %v1189 = vpop.f32.mrb[0].mxu0
  %v1190 = vadd.f32 %v1018, %v1189
  %1191 = vdwg.mxu0
  %v1192 = vmax.f32 %v1105, 0.0
  %v1193 = vmax.f32 %v1107, 0.0
  %v1194 = vmax.f32 %v1182, 0.0
  %v1195 = vmax.f32 %v1184, 0.0
  %v1196 = vmax.f32 %v1111, 0.0
  %v1197 = vmax.f32 %v1113, 0.0
  %v1198 = vmax.f32 %v1188, 0.0
  %v1199 = vmax.f32 %v1190, 0.0
  %1201 = vset.pattern.permute.xlu0 0
  %1202 = vperm.xlu0 %1201, %v167
  %v1203 = vpop.permute.xlu0 %1202
  %1206 = vset.pattern.permute.xlu0 0
  %1207 = vperm.xlu0 %1206, %v168
  %v1208 = vpop.permute.xlu0 %1207
  %1211 = vset.pattern.permute.xlu0 0
  %1212 = vperm.xlu0 %1211, %v169
  %v1213 = vpop.permute.xlu0 %1212
  %1216 = vset.pattern.permute.xlu0 0
  %1217 = vperm.xlu0 %1216, %v170
  %v1218 = vpop.permute.xlu0 %1217
  %v1221 = vsel %vm389, %v163, 0
  %v1224 = vsel %vm389, %v164, 0
  %v1227 = vsel %vm389, %v165, 0
  %v1230 = vsel %vm389, %v166, 0
  %v1233 = vsel %vm393, %v155, 0
  %1235 = vmatprep.subr.mxu0 0.0
  %1236 = vmatpush1.msra.mxu0 %v1233
  %1237 = vmatprep.subr.mxu0 0.0
  %1238 = vmatpush1.msra.mxu0 0.0
  %1239 = vmatprep.subr.mxu0 0.0
  %1240 = vmatpush1.msra.mxu0 0.0
  %1241 = vmatprep.subr.mxu0 0.0
  %1242 = vmatpush1.msra.mxu0 0.0
  %1243 = vmatprep.subr.mxu0 0.0
  %1244 = vmatpush1.msra.mxu0 0.0
  %1245 = vmatprep.subr.mxu0 0.0
  %1246 = vmatpush1.msra.mxu0 0.0
  %1247 = vmatprep.subr.mxu0 0.0
  %1248 = vmatpush1.msra.mxu0 0.0
  %1249 = vmatprep.subr.mxu0 0.0
  %1250 = vmatpush1.msra.mxu0 0.0
  %1251 = vmatprep.subr.mxu0 0.0
  %1252 = vmatpush1.msra.mxu0 0.0
  %1253 = vmatprep.subr.mxu0 0.0
  %1254 = vmatpush1.msra.mxu0 0.0
  %1255 = vmatprep.subr.mxu0 0.0
  %1256 = vmatpush1.msra.mxu0 0.0
  %1257 = vmatprep.subr.mxu0 0.0
  %1258 = vmatpush1.msra.mxu0 0.0
  %1259 = vmatprep.subr.mxu0 0.0
  %1260 = vmatpush1.msra.mxu0 0.0
  %1261 = vmatprep.subr.mxu0 0.0
  %1262 = vmatpush1.msra.mxu0 0.0
  %1263 = vmatprep.subr.mxu0 0.0
  %1264 = vmatpush1.msra.mxu0 0.0
  %1265 = vmatprep.subr.mxu0 0.0
  %1266 = vmatpush1.msra.mxu0 0.0
  %1267 = vmatprep.subr.mxu0 0.0
  %1268 = vmatpush1.msra.mxu0 0.0
  %1269 = vmatprep.subr.mxu0 0.0
  %1270 = vmatpush1.msra.mxu0 0.0
  %1271 = vmatprep.subr.mxu0 0.0
  %1272 = vmatpush1.msra.mxu0 0.0
  %1273 = vmatprep.subr.mxu0 0.0
  %1274 = vmatpush1.msra.mxu0 0.0
  %1275 = vmatprep.subr.mxu0 0.0
  %1276 = vmatpush1.msra.mxu0 0.0
  %1277 = vmatprep.subr.mxu0 0.0
  %1278 = vmatpush1.msra.mxu0 0.0
  %1279 = vmatprep.subr.mxu0 0.0
  %1280 = vmatpush1.msra.mxu0 0.0
  %1281 = vmatprep.subr.mxu0 0.0
  %1282 = vmatpush1.msra.mxu0 0.0
  %1283 = vmatprep.subr.mxu0 0.0
  %1284 = vmatpush1.msra.mxu0 0.0
  %1285 = vmatprep.subr.mxu0 0.0
  %1286 = vmatpush1.msra.mxu0 0.0
  %1287 = vmatprep.subr.mxu0 0.0
  %1288 = vmatpush1.msra.mxu0 0.0
  %1289 = vmatprep.subr.mxu0 0.0
  %1290 = vmatpush1.msra.mxu0 0.0
  %1291 = vmatprep.subr.mxu0 0.0
  %1292 = vmatpush1.msra.mxu0 0.0
  %1293 = vmatprep.subr.mxu0 0.0
  %1294 = vmatpush1.msra.mxu0 0.0
  %1295 = vmatprep.subr.mxu0 0.0
  %1296 = vmatpush1.msra.mxu0 0.0
  %1297 = vmatprep.subr.mxu0 0.0
  %1298 = vmatpush1.msra.mxu0 0.0
  %1299 = vmatprep.mubr.f32.mxu0 0.0
  %1300 = vmatmul.mubr.f32.gmra.mrb[0].mxu0 %v1221
  %v1301 = vpop.f32.mrb[0].mxu0
  %v1302 = vadd.f32 %v1203, %v1301
  %v1303 = vpop.f32.mrb[0].mxu0
  %1304 = vmatprep.mubr.f32.mxu0 0.0
  %1305 = vmatmul.mubr.f32.gmra.mrb[0].mxu0 %v1224
  %v1306 = vpop.f32.mrb[0].mxu0
  %v1307 = vadd.f32 %v1208, %v1306
  %v1308 = vpop.f32.mrb[0].mxu0
  %1309 = vmatprep.mubr.f32.mxu0 0.0
  %1310 = vmatmul.mubr.f32.gmra.mrb[0].mxu0 %v1227
  %v1311 = vpop.f32.mrb[0].mxu0
  %v1312 = vadd.f32 %v1213, %v1311
  %v1313 = vpop.f32.mrb[0].mxu0
  %1314 = vmatprep.mubr.f32.mxu0 0.0
  %1315 = vmatmul.mubr.f32.gmra.mrb[0].mxu0 %v1230
  %v1316 = vpop.f32.mrb[0].mxu0
  %v1317 = vadd.f32 %v1218, %v1316
  %v1318 = vpop.f32.mrb[0].mxu0
  %1319 = vdwg.mxu0
  %v1320 = vmax.f32 %v1302, 0.0
  %v1321 = vmax.f32 %v1307, 0.0
  %v1322 = vmax.f32 %v1312, 0.0
  %v1323 = vmax.f32 %v1317, 0.0
  %1325 = vset.pattern.permute.xlu0 0
  %1326 = vperm.xlu0 %1325, %v179
  %v1327 = vpop.permute.xlu0 %1326
  %1330 = vset.pattern.permute.xlu0 0
  %1331 = vperm.xlu0 %1330, %v180
  %v1332 = vpop.permute.xlu0 %1331
  %1335 = vset.pattern.permute.xlu0 0
  %1336 = vperm.xlu0 %1335, %v181
  %v1337 = vpop.permute.xlu0 %1336
  %1340 = vset.pattern.permute.xlu0 0
  %1341 = vperm.xlu0 %1340, %v182
  %v1342 = vpop.permute.xlu0 %1341
  %1345 = vset.pattern.permute.xlu0 0
  %1346 = vperm.xlu0 %1345, %v183
  %v1347 = vpop.permute.xlu0 %1346
  %1350 = vset.pattern.permute.xlu0 0
  %1351 = vperm.xlu0 %1350, %v184
  %v1352 = vpop.permute.xlu0 %1351
  %1355 = vset.pattern.permute.xlu0 0
  %1356 = vperm.xlu0 %1355, %v185
  %v1357 = vpop.permute.xlu0 %1356
  %1360 = vset.pattern.permute.xlu0 0
  %1361 = vperm.xlu0 %1360, %v186
  %v1362 = vpop.permute.xlu0 %1361
  %v1365 = vsel %vm389, %v171, 0
  %v1368 = vsel %vm389, %v172, 0
  %v1371 = vsel %vm389, %v173, 0
  %v1374 = vsel %vm389, %v174, 0
  %v1377 = vsel %vm389, %v175, 0
  %v1380 = vsel %vm389, %v176, 0
  %v1383 = vsel %vm389, %v177, 0
  %v1386 = vsel %vm389, %v178, 0
  %v1389 = vsel %vm393, %v156, 0
  %1391 = vmatprep.subr.mxu0 0.0
  %1392 = vmatpush1.msra.mxu0 %v1389
  %1393 = vmatprep.subr.mxu0 0.0
  %1394 = vmatpush1.msra.mxu0 0.0
  %1395 = vmatprep.subr.mxu0 0.0
  %1396 = vmatpush1.msra.mxu0 0.0
  %1397 = vmatprep.subr.mxu0 0.0
  %1398 = vmatpush1.msra.mxu0 0.0
  %1399 = vmatprep.subr.mxu0 0.0
  %1400 = vmatpush1.msra.mxu0 0.0
  %1401 = vmatprep.subr.mxu0 0.0
  %1402 = vmatpush1.msra.mxu0 0.0
  %1403 = vmatprep.subr.mxu0 0.0
  %1404 = vmatpush1.msra.mxu0 0.0
  %1405 = vmatprep.subr.mxu0 0.0
  %1406 = vmatpush1.msra.mxu0 0.0
  %1407 = vmatprep.subr.mxu0 0.0
  %1408 = vmatpush1.msra.mxu0 0.0
  %1409 = vmatprep.subr.mxu0 0.0
  %1410 = vmatpush1.msra.mxu0 0.0
  %1411 = vmatprep.subr.mxu0 0.0
  %1412 = vmatpush1.msra.mxu0 0.0
  %1413 = vmatprep.subr.mxu0 0.0
  %1414 = vmatpush1.msra.mxu0 0.0
  %1415 = vmatprep.subr.mxu0 0.0
  %1416 = vmatpush1.msra.mxu0 0.0
  %1417 = vmatprep.subr.mxu0 0.0
  %1418 = vmatpush1.msra.mxu0 0.0
  %1419 = vmatprep.subr.mxu0 0.0
  %1420 = vmatpush1.msra.mxu0 0.0
  %1421 = vmatprep.subr.mxu0 0.0
  %1422 = vmatpush1.msra.mxu0 0.0
  %1423 = vmatprep.subr.mxu0 0.0
  %1424 = vmatpush1.msra.mxu0 0.0
  %1425 = vmatprep.subr.mxu0 0.0
  %1426 = vmatpush1.msra.mxu0 0.0
  %1427 = vmatprep.subr.mxu0 0.0
  %1428 = vmatpush1.msra.mxu0 0.0
  %1429 = vmatprep.subr.mxu0 0.0
  %1430 = vmatpush1.msra.mxu0 0.0
  %1431 = vmatprep.subr.mxu0 0.0
  %1432 = vmatpush1.msra.mxu0 0.0
  %1433 = vmatprep.subr.mxu0 0.0
  %1434 = vmatpush1.msra.mxu0 0.0
  %1435 = vmatprep.subr.mxu0 0.0
  %1436 = vmatpush1.msra.mxu0 0.0
  %1437 = vmatprep.subr.mxu0 0.0
  %1438 = vmatpush1.msra.mxu0 0.0
  %1439 = vmatprep.subr.mxu0 0.0
  %1440 = vmatpush1.msra.mxu0 0.0
  %1441 = vmatprep.subr.mxu0 0.0
  %1442 = vmatpush1.msra.mxu0 0.0
  %1443 = vmatprep.subr.mxu0 0.0
  %1444 = vmatpush1.msra.mxu0 0.0
  %1445 = vmatprep.subr.mxu0 0.0
  %1446 = vmatpush1.msra.mxu0 0.0
  %1447 = vmatprep.subr.mxu0 0.0
  %1448 = vmatpush1.msra.mxu0 0.0
  %1449 = vmatprep.subr.mxu0 0.0
  %1450 = vmatpush1.msra.mxu0 0.0
  %1451 = vmatprep.subr.mxu0 0.0
  %1452 = vmatpush1.msra.mxu0 0.0
  %1453 = vmatprep.subr.mxu0 0.0
  %1454 = vmatpush1.msra.mxu0 0.0
  %1455 = vmatprep.mubr.f32.mxu0 0.0
  %1456 = vmatmul.mubr.f32.gmra.mrb[0].mxu0 %v1365
  %v1457 = vpop.f32.mrb[0].mxu0
  %v1458 = vadd.f32 %v1327, %v1457
  %v1459 = vpop.f32.mrb[0].mxu0
  %1460 = vmatprep.mubr.f32.mxu0 0.0
  %1461 = vmatmul.mubr.f32.gmra.mrb[0].mxu0 %v1368
  %v1462 = vpop.f32.mrb[0].mxu0
  %v1463 = vadd.f32 %v1332, %v1462
  %v1464 = vpop.f32.mrb[0].mxu0
  %1465 = vmatprep.mubr.f32.mxu0 0.0
  %1466 = vmatmul.mubr.f32.gmra.mrb[0].mxu0 %v1371
  %v1467 = vpop.f32.mrb[0].mxu0
  %v1468 = vadd.f32 %v1337, %v1467
  %v1469 = vpop.f32.mrb[0].mxu0
  %1470 = vmatprep.mubr.f32.mxu0 0.0
  %1471 = vmatmul.mubr.f32.gmra.mrb[0].mxu0 %v1374
  %v1472 = vpop.f32.mrb[0].mxu0
  %v1473 = vadd.f32 %v1342, %v1472
  %v1474 = vpop.f32.mrb[0].mxu0
  %1475 = vmatprep.mubr.f32.mxu0 0.0
  %1476 = vmatmul.mubr.f32.gmra.mrb[0].mxu0 %v1377
  %v1477 = vpop.f32.mrb[0].mxu0
  %v1478 = vadd.f32 %v1347, %v1477
  %v1479 = vpop.f32.mrb[0].mxu0
  %1480 = vmatprep.mubr.f32.mxu0 0.0
  %1481 = vmatmul.mubr.f32.gmra.mrb[0].mxu0 %v1380
  %v1482 = vpop.f32.mrb[0].mxu0
  %v1483 = vadd.f32 %v1352, %v1482
  %v1484 = vpop.f32.mrb[0].mxu0
  %1485 = vmatprep.mubr.f32.mxu0 0.0
  %1486 = vmatmul.mubr.f32.gmra.mrb[0].mxu0 %v1383
  %v1487 = vpop.f32.mrb[0].mxu0
  %v1488 = vadd.f32 %v1357, %v1487
  %v1489 = vpop.f32.mrb[0].mxu0
  %1490 = vmatprep.mubr.f32.mxu0 0.0
  %1491 = vmatmul.mubr.f32.gmra.mrb[0].mxu0 %v1386
  %v1492 = vpop.f32.mrb[0].mxu0
  %v1493 = vadd.f32 %v1362, %v1492
  %v1494 = vpop.f32.mrb[0].mxu0
  %1495 = vdwg.mxu0
  %v1496 = vmax.f32 %v1458, 0.0
  %v1497 = vmax.f32 %v1463, 0.0
  %v1498 = vmax.f32 %v1468, 0.0
  %v1499 = vmax.f32 %v1473, 0.0
  %v1500 = vmax.f32 %v1478, 0.0
  %v1501 = vmax.f32 %v1483, 0.0
  %v1502 = vmax.f32 %v1488, 0.0
  %v1503 = vmax.f32 %v1493, 0.0
  %1505 = vset.pattern.permute.xlu0 0
  %1506 = vperm.xlu0 %1505, %v195
  %v1507 = vpop.permute.xlu0 %1506
  %1510 = vset.pattern.permute.xlu0 0
  %1511 = vperm.xlu0 %1510, %v196
  %v1512 = vpop.permute.xlu0 %1511
  %1515 = vset.pattern.permute.xlu0 0
  %1516 = vperm.xlu0 %1515, %v197
  %v1517 = vpop.permute.xlu0 %1516
  %1520 = vset.pattern.permute.xlu0 0
  %1521 = vperm.xlu0 %1520, %v198
  %v1522 = vpop.permute.xlu0 %1521
  %1525 = vset.pattern.permute.xlu0 0
  %1526 = vperm.xlu0 %1525, %v199
  %v1527 = vpop.permute.xlu0 %1526
  %1530 = vset.pattern.permute.xlu0 0
  %1531 = vperm.xlu0 %1530, %v200
  %v1532 = vpop.permute.xlu0 %1531
  %1535 = vset.pattern.permute.xlu0 0
  %1536 = vperm.xlu0 %1535, %v201
  %v1537 = vpop.permute.xlu0 %1536
  %1540 = vset.pattern.permute.xlu0 0
  %1541 = vperm.xlu0 %1540, %v202
  %v1542 = vpop.permute.xlu0 %1541
  %vm1544 = vcmask 523264
  %v1546 = vsel %vm1544, %v187, 0
  %v1549 = vsel %vm1544, %v188, 0
  %v1552 = vsel %vm1544, %v189, 0
  %v1555 = vsel %vm1544, %v190, 0
  %v1558 = vsel %vm1544, %v191, 0
  %v1561 = vsel %vm1544, %v192, 0
  %v1564 = vsel %vm1544, %v193, 0
  %v1567 = vsel %vm1544, %v194, 0
  %1569 = vmatprep.subr.mxu0 0.0
  %1570 = vmatpush1.msra.mxu0 %v1496
  %1571 = vmatprep.subr.mxu0 0.0
  %1572 = vmatpush1.msra.mxu0 %v1497
  %1573 = vmatprep.subr.mxu0 0.0
  %1574 = vmatpush1.msra.mxu0 %v1498
  %1575 = vmatprep.subr.mxu0 0.0
  %1576 = vmatpush1.msra.mxu0 %v1499
  %1577 = vmatprep.subr.mxu0 0.0
  %1578 = vmatpush1.msra.mxu0 %v1500
  %1579 = vmatprep.subr.mxu0 0.0
  %1580 = vmatpush1.msra.mxu0 %v1501
  %1581 = vmatprep.subr.mxu0 0.0
  %1582 = vmatpush1.msra.mxu0 %v1502
  %1583 = vmatprep.subr.mxu0 0.0
  %1584 = vmatpush1.msra.mxu0 %v1503
  %1585 = vmatprep.subr.mxu0 0.0
  %1586 = vmatpush1.msra.mxu0 0.0
  %1587 = vmatprep.subr.mxu0 0.0
  %1588 = vmatpush1.msra.mxu0 0.0
  %1589 = vmatprep.subr.mxu0 0.0
  %1590 = vmatpush1.msra.mxu0 0.0
  %1591 = vmatprep.subr.mxu0 0.0
  %1592 = vmatpush1.msra.mxu0 0.0
  %1593 = vmatprep.subr.mxu0 0.0
  %1594 = vmatpush1.msra.mxu0 0.0
  %1595 = vmatprep.subr.mxu0 0.0
  %1596 = vmatpush1.msra.mxu0 0.0
  %1597 = vmatprep.subr.mxu0 0.0
  %1598 = vmatpush1.msra.mxu0 0.0
  %1599 = vmatprep.subr.mxu0 0.0
  %1600 = vmatpush1.msra.mxu0 0.0
  %1601 = vmatprep.subr.mxu0 0.0
  %1602 = vmatpush1.msra.mxu0 0.0
  %1603 = vmatprep.subr.mxu0 0.0
  %1604 = vmatpush1.msra.mxu0 0.0
  %1605 = vmatprep.subr.mxu0 0.0
  %1606 = vmatpush1.msra.mxu0 0.0
  %1607 = vmatprep.subr.mxu0 0.0
  %1608 = vmatpush1.msra.mxu0 0.0
  %1609 = vmatprep.subr.mxu0 0.0
  %1610 = vmatpush1.msra.mxu0 0.0
  %1611 = vmatprep.subr.mxu0 0.0
  %1612 = vmatpush1.msra.mxu0 0.0
  %1613 = vmatprep.subr.mxu0 0.0
  %1614 = vmatpush1.msra.mxu0 0.0
  %1615 = vmatprep.subr.mxu0 0.0
  %1616 = vmatpush1.msra.mxu0 0.0
  %1617 = vmatprep.subr.mxu0 0.0
  %1618 = vmatpush1.msra.mxu0 0.0
  %1619 = vmatprep.subr.mxu0 0.0
  %1620 = vmatpush1.msra.mxu0 0.0
  %1621 = vmatprep.subr.mxu0 0.0
  %1622 = vmatpush1.msra.mxu0 0.0
  %1623 = vmatprep.subr.mxu0 0.0
  %1624 = vmatpush1.msra.mxu0 0.0
  %1625 = vmatprep.subr.mxu0 0.0
  %1626 = vmatpush1.msra.mxu0 0.0
  %1627 = vmatprep.subr.mxu0 0.0
  %1628 = vmatpush1.msra.mxu0 0.0
  %1629 = vmatprep.subr.mxu0 0.0
  %1630 = vmatpush1.msra.mxu0 0.0
  %1631 = vmatprep.subr.mxu0 0.0
  %1632 = vmatpush1.msra.mxu0 0.0
  %1633 = vmatprep.mubr.f32.mxu0 0.0
  %1634 = vmatmul.mubr.f32.gmra.mrb[0].mxu0 %v1546
  %v1635 = vpop.f32.mrb[0].mxu0
  %v1636 = vadd.f32 %v1507, %v1635
  %v1637 = vpop.f32.mrb[0].mxu0
  %1638 = vmatprep.mubr.f32.mxu0 0.0
  %1639 = vmatmul.mubr.f32.gmra.mrb[0].mxu0 %v1549
  %v1640 = vpop.f32.mrb[0].mxu0
  %v1641 = vadd.f32 %v1512, %v1640
  %v1642 = vpop.f32.mrb[0].mxu0
  %1643 = vmatprep.mubr.f32.mxu0 0.0
  %1644 = vmatmul.mubr.f32.gmra.mrb[0].mxu0 %v1552
  %v1645 = vpop.f32.mrb[0].mxu0
  %v1646 = vadd.f32 %v1517, %v1645
  %v1647 = vpop.f32.mrb[0].mxu0
  %1648 = vmatprep.mubr.f32.mxu0 0.0
  %1649 = vmatmul.mubr.f32.gmra.mrb[0].mxu0 %v1555
  %v1650 = vpop.f32.mrb[0].mxu0
  %v1651 = vadd.f32 %v1522, %v1650
  %v1652 = vpop.f32.mrb[0].mxu0
  %1653 = vmatprep.mubr.f32.mxu0 0.0
  %1654 = vmatmul.mubr.f32.gmra.mrb[0].mxu0 %v1558
  %v1655 = vpop.f32.mrb[0].mxu0
  %v1656 = vadd.f32 %v1527, %v1655
  %v1657 = vpop.f32.mrb[0].mxu0
  %1658 = vmatprep.mubr.f32.mxu0 0.0
  %1659 = vmatmul.mubr.f32.gmra.mrb[0].mxu0 %v1561
  %v1660 = vpop.f32.mrb[0].mxu0
  %v1661 = vadd.f32 %v1532, %v1660
  %v1662 = vpop.f32.mrb[0].mxu0
  %1663 = vmatprep.mubr.f32.mxu0 0.0
  %1664 = vmatmul.mubr.f32.gmra.mrb[0].mxu0 %v1564
  %v1665 = vpop.f32.mrb[0].mxu0
  %v1666 = vadd.f32 %v1537, %v1665
  %v1667 = vpop.f32.mrb[0].mxu0
  %1668 = vmatprep.mubr.f32.mxu0 0.0
  %1669 = vmatmul.mubr.f32.gmra.mrb[0].mxu0 %v1567
  %v1670 = vpop.f32.mrb[0].mxu0
  %v1671 = vadd.f32 %v1542, %v1670
  %v1672 = vpop.f32.mrb[0].mxu0
  %1673 = vdwg.mxu0
  %v1674 = vmax.f32 %v1636, 0.0
  %v1675 = vmax.f32 %v1641, 0.0
  %v1676 = vmax.f32 %v1646, 0.0
  %v1677 = vmax.f32 %v1651, 0.0
  %v1678 = vmax.f32 %v1656, 0.0
  %v1679 = vmax.f32 %v1661, 0.0
  %v1680 = vmax.f32 %v1666, 0.0
  %v1681 = vmax.f32 %v1671, 0.0
  %1682 = vmatprep.subr.mxu0 0.0
  %1683 = vmatpush1.msra.mxu0 %v268
  %1684 = vmatprep.subr.mxu0 0.0
  %1685 = vmatpush1.msra.mxu0 %v269
  %1686 = vmatprep.subr.mxu0 0.0
  %1687 = vmatpush1.msra.mxu0 %v270
  %1688 = vmatprep.subr.mxu0 0.0
  %1689 = vmatpush1.msra.mxu0 %v271
  %1690 = vmatprep.subr.mxu0 0.0
  %1691 = vmatpush1.msra.mxu0 %v272
  %1692 = vmatprep.subr.mxu0 0.0
  %1693 = vmatpush1.msra.mxu0 %v273
  %1694 = vmatprep.subr.mxu0 0.0
  %1695 = vmatpush1.msra.mxu0 %v274
  %1696 = vmatprep.subr.mxu0 0.0
  %1697 = vmatpush1.msra.mxu0 %v275
  %1698 = vmatprep.subr.mxu0 0.0
  %1699 = vmatpush1.msra.mxu0 %v276
  %1700 = vmatprep.subr.mxu0 0.0
  %1701 = vmatpush1.msra.mxu0 %v277
  %1702 = vmatprep.subr.mxu0 0.0
  %1703 = vmatpush1.msra.mxu0 %v278
  %1704 = vmatprep.subr.mxu0 0.0
  %1705 = vmatpush1.msra.mxu0 %v279
  %1706 = vmatprep.subr.mxu0 0.0
  %1707 = vmatpush1.msra.mxu0 %v280
  %1708 = vmatprep.subr.mxu0 0.0
  %1709 = vmatpush1.msra.mxu0 %v281
  %1710 = vmatprep.subr.mxu0 0.0
  %1711 = vmatpush1.msra.mxu0 %v282
  %1712 = vmatprep.subr.mxu0 0.0
  %1713 = vmatpush1.msra.mxu0 %v283
  %1714 = vmatprep.subr.mxu0 0.0
  %1715 = vmatpush1.msra.mxu0 %v284
  %1716 = vmatprep.subr.mxu0 0.0
  %1717 = vmatpush1.msra.mxu0 %v285
  %1718 = vmatprep.subr.mxu0 0.0
  %1719 = vmatpush1.msra.mxu0 %v286
  %1720 = vmatprep.subr.mxu0 0.0
  %1721 = vmatpush1.msra.mxu0 %v287
  %1722 = vmatprep.subr.mxu0 0.0
  %1723 = vmatpush1.msra.mxu0 %v288
  %1724 = vmatprep.subr.mxu0 0.0
  %1725 = vmatpush1.msra.mxu0 %v289
  %1726 = vmatprep.subr.mxu0 0.0
  %1727 = vmatpush1.msra.mxu0 %v290
  %1728 = vmatprep.subr.mxu0 0.0
  %1729 = vmatpush1.msra.mxu0 %v291
  %1730 = vmatprep.subr.mxu0 0.0
  %1731 = vmatpush1.msra.mxu0 %v292
  %1732 = vmatprep.subr.mxu0 0.0
  %1733 = vmatpush1.msra.mxu0 %v293
  %1734 = vmatprep.subr.mxu0 0.0
  %1735 = vmatpush1.msra.mxu0 %v294
  %1736 = vmatprep.subr.mxu0 0.0
  %1737 = vmatpush1.msra.mxu0 %v295
  %1738 = vmatprep.subr.mxu0 0.0
  %1739 = vmatpush1.msra.mxu0 %v296
  %1740 = vmatprep.subr.mxu0 0.0
  %1741 = vmatpush1.msra.mxu0 %v297
  %1742 = vmatprep.subr.mxu0 0.0
  %1743 = vmatpush1.msra.mxu0 %v298
  %1744 = vmatprep.subr.mxu0 0.0
  %1745 = vmatpush1.msra.mxu0 %v299
  %1746 = vmatprep.mubr.f32.mxu0 %v1193
  %1747 = vmatmul.mubr.f32.gmra.mrb[0].mxu0 %v1192
  %v1748 = vpop.f32.mrb[0].mxu0
  %v1749 = vadd.f32 0.0, %v1748
  %v1750 = vpop.f32.mrb[0].mxu0
  %1751 = vmatprep.mubr.f32.mxu0 %v1197
  %1752 = vmatmul.mubr.f32.gmra.mrb[0].mxu0 %v1196
  %v1753 = vpop.f32.mrb[0].mxu0
  %v1754 = vadd.f32 0.0, %v1753
  %v1755 = vpop.f32.mrb[0].mxu0
  %1756 = vdwg.mxu0
  %1757 = vmatprep.subr.mxu0 0.0
  %1758 = vmatpush1.msra.mxu0 %v300
  %1759 = vmatprep.subr.mxu0 0.0
  %1760 = vmatpush1.msra.mxu0 %v301
  %1761 = vmatprep.subr.mxu0 0.0
  %1762 = vmatpush1.msra.mxu0 %v302
  %1763 = vmatprep.subr.mxu0 0.0
  %1764 = vmatpush1.msra.mxu0 %v303
  %1765 = vmatprep.subr.mxu0 0.0
  %1766 = vmatpush1.msra.mxu0 %v304
  %1767 = vmatprep.subr.mxu0 0.0
  %1768 = vmatpush1.msra.mxu0 %v305
  %1769 = vmatprep.subr.mxu0 0.0
  %1770 = vmatpush1.msra.mxu0 %v306
  %1771 = vmatprep.subr.mxu0 0.0
  %1772 = vmatpush1.msra.mxu0 %v307
  %1773 = vmatprep.subr.mxu0 0.0
  %1774 = vmatpush1.msra.mxu0 %v308
  %1775 = vmatprep.subr.mxu0 0.0
  %1776 = vmatpush1.msra.mxu0 %v309
  %1777 = vmatprep.subr.mxu0 0.0
  %1778 = vmatpush1.msra.mxu0 %v310
  %1779 = vmatprep.subr.mxu0 0.0
  %1780 = vmatpush1.msra.mxu0 %v311
  %1781 = vmatprep.subr.mxu0 0.0
  %1782 = vmatpush1.msra.mxu0 %v312
  %1783 = vmatprep.subr.mxu0 0.0
  %1784 = vmatpush1.msra.mxu0 %v313
  %1785 = vmatprep.subr.mxu0 0.0
  %1786 = vmatpush1.msra.mxu0 %v314
  %1787 = vmatprep.subr.mxu0 0.0
  %1788 = vmatpush1.msra.mxu0 %v315
  %1789 = vmatprep.subr.mxu0 0.0
  %1790 = vmatpush1.msra.mxu0 %v316
  %1791 = vmatprep.subr.mxu0 0.0
  %1792 = vmatpush1.msra.mxu0 %v317
  %1793 = vmatprep.subr.mxu0 0.0
  %1794 = vmatpush1.msra.mxu0 %v318
  %1795 = vmatprep.subr.mxu0 0.0
  %1796 = vmatpush1.msra.mxu0 %v319
  %1797 = vmatprep.subr.mxu0 0.0
  %1798 = vmatpush1.msra.mxu0 %v320
  %1799 = vmatprep.subr.mxu0 0.0
  %1800 = vmatpush1.msra.mxu0 %v321
  %1801 = vmatprep.subr.mxu0 0.0
  %1802 = vmatpush1.msra.mxu0 %v322
  %1803 = vmatprep.subr.mxu0 0.0
  %1804 = vmatpush1.msra.mxu0 %v323
  %1805 = vmatprep.subr.mxu0 0.0
  %1806 = vmatpush1.msra.mxu0 %v324
  %1807 = vmatprep.subr.mxu0 0.0
  %1808 = vmatpush1.msra.mxu0 %v325
  %1809 = vmatprep.subr.mxu0 0.0
  %1810 = vmatpush1.msra.mxu0 %v326
  %1811 = vmatprep.subr.mxu0 0.0
  %1812 = vmatpush1.msra.mxu0 %v327
  %1813 = vmatprep.subr.mxu0 0.0
  %1814 = vmatpush1.msra.mxu0 %v328
  %1815 = vmatprep.subr.mxu0 0.0
  %1816 = vmatpush1.msra.mxu0 %v329
  %1817 = vmatprep.subr.mxu0 0.0
  %1818 = vmatpush1.msra.mxu0 %v330
  %1819 = vmatprep.subr.mxu0 0.0
  %1820 = vmatpush1.msra.mxu0 %v331
  %1821 = vmatprep.mubr.f32.mxu0 %v1195
  %1822 = vmatmul.mubr.f32.gmra.mrb[0].mxu0 %v1194
  %v1823 = vpop.f32.mrb[0].mxu0
  %v1824 = vadd.f32 %v1749, %v1823
  %v1825 = vpop.f32.mrb[0].mxu0
  %1826 = vmatprep.mubr.f32.mxu0 %v1199
  %1827 = vmatmul.mubr.f32.gmra.mrb[0].mxu0 %v1198
  %v1828 = vpop.f32.mrb[0].mxu0
  %v1829 = vadd.f32 %v1754, %v1828
  %v1830 = vpop.f32.mrb[0].mxu0
  %1831 = vdwg.mxu0
  %1832 = vmatprep.subr.mxu0 0.0
  %1833 = vmatpush1.msra.mxu0 %v332
  %1834 = vmatprep.subr.mxu0 0.0
  %1835 = vmatpush1.msra.mxu0 %v333
  %1836 = vmatprep.subr.mxu0 0.0
  %1837 = vmatpush1.msra.mxu0 %v334
  %1838 = vmatprep.subr.mxu0 0.0
  %1839 = vmatpush1.msra.mxu0 %v335
  %1840 = vmatprep.subr.mxu0 0.0
  %1841 = vmatpush1.msra.mxu0 %v336
  %1842 = vmatprep.subr.mxu0 0.0
  %1843 = vmatpush1.msra.mxu0 %v337
  %1844 = vmatprep.subr.mxu0 0.0
  %1845 = vmatpush1.msra.mxu0 %v338
  %1846 = vmatprep.subr.mxu0 0.0
  %1847 = vmatpush1.msra.mxu0 %v339
  %1848 = vmatprep.subr.mxu0 0.0
  %1849 = vmatpush1.msra.mxu0 %v340
  %1850 = vmatprep.subr.mxu0 0.0
  %1851 = vmatpush1.msra.mxu0 %v341
  %1852 = vmatprep.subr.mxu0 0.0
  %1853 = vmatpush1.msra.mxu0 %v342
  %1854 = vmatprep.subr.mxu0 0.0
  %1855 = vmatpush1.msra.mxu0 %v343
  %1856 = vmatprep.subr.mxu0 0.0
  %1857 = vmatpush1.msra.mxu0 %v344
  %1858 = vmatprep.subr.mxu0 0.0
  %1859 = vmatpush1.msra.mxu0 %v345
  %1860 = vmatprep.subr.mxu0 0.0
  %1861 = vmatpush1.msra.mxu0 %v346
  %1862 = vmatprep.subr.mxu0 0.0
  %1863 = vmatpush1.msra.mxu0 %v347
  %1864 = vmatprep.subr.mxu0 0.0
  %1865 = vmatpush1.msra.mxu0 0.0
  %1866 = vmatprep.subr.mxu0 0.0
  %1867 = vmatpush1.msra.mxu0 0.0
  %1868 = vmatprep.subr.mxu0 0.0
  %1869 = vmatpush1.msra.mxu0 0.0
  %1870 = vmatprep.subr.mxu0 0.0
  %1871 = vmatpush1.msra.mxu0 0.0
  %1872 = vmatprep.subr.mxu0 0.0
  %1873 = vmatpush1.msra.mxu0 0.0
  %1874 = vmatprep.subr.mxu0 0.0
  %1875 = vmatpush1.msra.mxu0 0.0
  %1876 = vmatprep.subr.mxu0 0.0
  %1877 = vmatpush1.msra.mxu0 0.0
  %1878 = vmatprep.subr.mxu0 0.0
  %1879 = vmatpush1.msra.mxu0 0.0
  %1880 = vmatprep.subr.mxu0 0.0
  %1881 = vmatpush1.msra.mxu0 0.0
  %1882 = vmatprep.subr.mxu0 0.0
  %1883 = vmatpush1.msra.mxu0 0.0
  %1884 = vmatprep.subr.mxu0 0.0
  %1885 = vmatpush1.msra.mxu0 0.0
  %1886 = vmatprep.subr.mxu0 0.0
  %1887 = vmatpush1.msra.mxu0 0.0
  %1888 = vmatprep.subr.mxu0 0.0
  %1889 = vmatpush1.msra.mxu0 0.0
  %1890 = vmatprep.subr.mxu0 0.0
  %1891 = vmatpush1.msra.mxu0 0.0
  %1892 = vmatprep.subr.mxu0 0.0
  %1893 = vmatpush1.msra.mxu0 0.0
  %1894 = vmatprep.subr.mxu0 0.0
  %1895 = vmatpush1.msra.mxu0 0.0
  %1896 = vmatprep.mubr.f32.mxu0 0.0
  %1897 = vmatmul.mubr.f32.gmra.mrb[0].mxu0 %v1320
  %v1898 = vpop.f32.mrb[0].mxu0
  %v1899 = vadd.f32 0.0, %v1898
  %v1900 = vpop.f32.mrb[0].mxu0
  %1901 = vmatprep.mubr.f32.mxu0 0.0
  %1902 = vmatmul.mubr.f32.gmra.mrb[0].mxu0 %v1321
  %v1903 = vpop.f32.mrb[0].mxu0
  %v1904 = vadd.f32 0.0, %v1903
  %v1905 = vpop.f32.mrb[0].mxu0
  %1906 = vmatprep.mubr.f32.mxu0 0.0
  %1907 = vmatmul.mubr.f32.gmra.mrb[0].mxu0 %v1322
  %v1908 = vpop.f32.mrb[0].mxu0
  %v1909 = vadd.f32 0.0, %v1908
  %v1910 = vpop.f32.mrb[0].mxu0
  %1911 = vmatprep.mubr.f32.mxu0 0.0
  %1912 = vmatmul.mubr.f32.gmra.mrb[0].mxu0 %v1323
  %v1913 = vpop.f32.mrb[0].mxu0
  %v1914 = vadd.f32 0.0, %v1913
  %v1915 = vpop.f32.mrb[0].mxu0
  %1916 = vdwg.mxu0
  %vm1917 = vcmask 261120
  %v1919 = vsel %vm1917, %v211, 0
  %v1922 = vsel %vm1917, %v212, 0
  %v1925 = vsel %vm1917, %v213, 0
  %v1928 = vsel %vm1917, %v214, 0
  %v1931 = vsel %vm1917, %v215, 0
  %v1934 = vsel %vm1917, %v216, 0
  %v1937 = vsel %vm1917, %v217, 0
  %v1940 = vsel %vm1917, %v218, 0
  %1942 = vmatprep.subr.mxu0 0.0
  %1943 = vmatpush1.msra.mxu0 %v1899
  %1944 = vmatprep.subr.mxu0 0.0
  %1945 = vmatpush1.msra.mxu0 %v1904
  %1946 = vmatprep.subr.mxu0 0.0
  %1947 = vmatpush1.msra.mxu0 %v1909
  %1948 = vmatprep.subr.mxu0 0.0
  %1949 = vmatpush1.msra.mxu0 %v1914
  %1950 = vmatprep.subr.mxu0 0.0
  %1951 = vmatpush1.msra.mxu0 0.0
  %1952 = vmatprep.subr.mxu0 0.0
  %1953 = vmatpush1.msra.mxu0 0.0
  %1954 = vmatprep.subr.mxu0 0.0
  %1955 = vmatpush1.msra.mxu0 0.0
  %1956 = vmatprep.subr.mxu0 0.0
  %1957 = vmatpush1.msra.mxu0 0.0
  %1958 = vmatprep.subr.mxu0 0.0
  %1959 = vmatpush1.msra.mxu0 0.0
  %1960 = vmatprep.subr.mxu0 0.0
  %1961 = vmatpush1.msra.mxu0 0.0
  %1962 = vmatprep.subr.mxu0 0.0
  %1963 = vmatpush1.msra.mxu0 0.0
  %1964 = vmatprep.subr.mxu0 0.0
  %1965 = vmatpush1.msra.mxu0 0.0
  %1966 = vmatprep.subr.mxu0 0.0
  %1967 = vmatpush1.msra.mxu0 0.0
  %1968 = vmatprep.subr.mxu0 0.0
  %1969 = vmatpush1.msra.mxu0 0.0
  %1970 = vmatprep.subr.mxu0 0.0
  %1971 = vmatpush1.msra.mxu0 0.0
  %1972 = vmatprep.subr.mxu0 0.0
  %1973 = vmatpush1.msra.mxu0 0.0
  %1974 = vmatprep.subr.mxu0 0.0
  %1975 = vmatpush1.msra.mxu0 0.0
  %1976 = vmatprep.subr.mxu0 0.0
  %1977 = vmatpush1.msra.mxu0 0.0
  %1978 = vmatprep.subr.mxu0 0.0
  %1979 = vmatpush1.msra.mxu0 0.0
  %1980 = vmatprep.subr.mxu0 0.0
  %1981 = vmatpush1.msra.mxu0 0.0
  %1982 = vmatprep.subr.mxu0 0.0
  %1983 = vmatpush1.msra.mxu0 0.0
  %1984 = vmatprep.subr.mxu0 0.0
  %1985 = vmatpush1.msra.mxu0 0.0
  %1986 = vmatprep.subr.mxu0 0.0
  %1987 = vmatpush1.msra.mxu0 0.0
  %1988 = vmatprep.subr.mxu0 0.0
  %1989 = vmatpush1.msra.mxu0 0.0
  %1990 = vmatprep.subr.mxu0 0.0
  %1991 = vmatpush1.msra.mxu0 0.0
  %1992 = vmatprep.subr.mxu0 0.0
  %1993 = vmatpush1.msra.mxu0 0.0
  %1994 = vmatprep.subr.mxu0 0.0
  %1995 = vmatpush1.msra.mxu0 0.0
  %1996 = vmatprep.subr.mxu0 0.0
  %1997 = vmatpush1.msra.mxu0 0.0
  %1998 = vmatprep.subr.mxu0 0.0
  %1999 = vmatpush1.msra.mxu0 0.0
  %2000 = vmatprep.subr.mxu0 0.0
  %2001 = vmatpush1.msra.mxu0 0.0
  %2002 = vmatprep.subr.mxu0 0.0
  %2003 = vmatpush1.msra.mxu0 0.0
  %2004 = vmatprep.subr.mxu0 0.0
  %2005 = vmatpush1.msra.mxu0 0.0
  %2006 = vmatprep.mubr.f32.mxu0 0.0
  %2007 = vmatmul.mubr.f32.gmra.mrb[0].mxu0 %v1919
  %v2008 = vpop.f32.mrb[0].mxu0
  %v2009 = vadd.f32 0.0, %v2008
  %v2010 = vpop.f32.mrb[0].mxu0
  %2011 = vmatprep.mubr.f32.mxu0 0.0
  %2012 = vmatmul.mubr.f32.gmra.mrb[0].mxu0 %v1922
  %v2013 = vpop.f32.mrb[0].mxu0
  %v2014 = vadd.f32 0.0, %v2013
  %v2015 = vpop.f32.mrb[0].mxu0
  %2016 = vmatprep.mubr.f32.mxu0 0.0
  %2017 = vmatmul.mubr.f32.gmra.mrb[0].mxu0 %v1925
  %v2018 = vpop.f32.mrb[0].mxu0
  %v2019 = vadd.f32 0.0, %v2018
  %v2020 = vpop.f32.mrb[0].mxu0
  %2021 = vmatprep.mubr.f32.mxu0 0.0
  %2022 = vmatmul.mubr.f32.gmra.mrb[0].mxu0 %v1928
  %v2023 = vpop.f32.mrb[0].mxu0
  %v2024 = vadd.f32 0.0, %v2023
  %v2025 = vpop.f32.mrb[0].mxu0
  %2026 = vmatprep.mubr.f32.mxu0 0.0
  %2027 = vmatmul.mubr.f32.gmra.mrb[0].mxu0 %v1931
  %v2028 = vpop.f32.mrb[0].mxu0
  %v2029 = vadd.f32 0.0, %v2028
  %v2030 = vpop.f32.mrb[0].mxu0
  %2031 = vmatprep.mubr.f32.mxu0 0.0
  %2032 = vmatmul.mubr.f32.gmra.mrb[0].mxu0 %v1934
  %v2033 = vpop.f32.mrb[0].mxu0
  %v2034 = vadd.f32 0.0, %v2033
  %v2035 = vpop.f32.mrb[0].mxu0
  %2036 = vmatprep.mubr.f32.mxu0 0.0
  %2037 = vmatmul.mubr.f32.gmra.mrb[0].mxu0 %v1937
  %v2038 = vpop.f32.mrb[0].mxu0
  %v2039 = vadd.f32 0.0, %v2038
  %v2040 = vpop.f32.mrb[0].mxu0
  %2041 = vmatprep.mubr.f32.mxu0 0.0
  %2042 = vmatmul.mubr.f32.gmra.mrb[0].mxu0 %v1940
  %v2043 = vpop.f32.mrb[0].mxu0
  %v2044 = vadd.f32 0.0, %v2043
  %v2045 = vpop.f32.mrb[0].mxu0
  %2046 = vdwg.mxu0
  %vm2047 = vcmask 130048
  %v2049 = vsel %vm2047, %v203, 0
  %v2052 = vsel %vm2047, %v204, 0
  %v2055 = vsel %vm2047, %v205, 0
  %v2058 = vsel %vm2047, %v206, 0
  %v2061 = vsel %vm2047, %v207, 0
  %v2064 = vsel %vm2047, %v208, 0
  %v2067 = vsel %vm2047, %v209, 0
  %v2070 = vsel %vm2047, %v210, 0
  %2072 = vmatprep.subr.mxu0 0.0
  %2073 = vmatpush1.msra.mxu0 %v1824
  %2074 = vmatprep.subr.mxu0 0.0
  %2075 = vmatpush1.msra.mxu0 %v1829
  %2076 = vmatprep.subr.mxu0 0.0
  %2077 = vmatpush1.msra.mxu0 0.0
  %2078 = vmatprep.subr.mxu0 0.0
  %2079 = vmatpush1.msra.mxu0 0.0
  %2080 = vmatprep.subr.mxu0 0.0
  %2081 = vmatpush1.msra.mxu0 0.0
  %2082 = vmatprep.subr.mxu0 0.0
  %2083 = vmatpush1.msra.mxu0 0.0
  %2084 = vmatprep.subr.mxu0 0.0
  %2085 = vmatpush1.msra.mxu0 0.0
  %2086 = vmatprep.subr.mxu0 0.0
  %2087 = vmatpush1.msra.mxu0 0.0
  %2088 = vmatprep.subr.mxu0 0.0
  %2089 = vmatpush1.msra.mxu0 0.0
  %2090 = vmatprep.subr.mxu0 0.0
  %2091 = vmatpush1.msra.mxu0 0.0
  %2092 = vmatprep.subr.mxu0 0.0
  %2093 = vmatpush1.msra.mxu0 0.0
  %2094 = vmatprep.subr.mxu0 0.0
  %2095 = vmatpush1.msra.mxu0 0.0
  %2096 = vmatprep.subr.mxu0 0.0
  %2097 = vmatpush1.msra.mxu0 0.0
  %2098 = vmatprep.subr.mxu0 0.0
  %2099 = vmatpush1.msra.mxu0 0.0
  %2100 = vmatprep.subr.mxu0 0.0
  %2101 = vmatpush1.msra.mxu0 0.0
  %2102 = vmatprep.subr.mxu0 0.0
  %2103 = vmatpush1.msra.mxu0 0.0
  %2104 = vmatprep.subr.mxu0 0.0
  %2105 = vmatpush1.msra.mxu0 0.0
  %2106 = vmatprep.subr.mxu0 0.0
  %2107 = vmatpush1.msra.mxu0 0.0
  %2108 = vmatprep.subr.mxu0 0.0
  %2109 = vmatpush1.msra.mxu0 0.0
  %2110 = vmatprep.subr.mxu0 0.0
  %2111 = vmatpush1.msra.mxu0 0.0
  %2112 = vmatprep.subr.mxu0 0.0
  %2113 = vmatpush1.msra.mxu0 0.0
  %2114 = vmatprep.subr.mxu0 0.0
  %2115 = vmatpush1.msra.mxu0 0.0
  %2116 = vmatprep.subr.mxu0 0.0
  %2117 = vmatpush1.msra.mxu0 0.0
  %2118 = vmatprep.subr.mxu0 0.0
  %2119 = vmatpush1.msra.mxu0 0.0
  %2120 = vmatprep.subr.mxu0 0.0
  %2121 = vmatpush1.msra.mxu0 0.0
  %2122 = vmatprep.subr.mxu0 0.0
  %2123 = vmatpush1.msra.mxu0 0.0
  %2124 = vmatprep.subr.mxu0 0.0
  %2125 = vmatpush1.msra.mxu0 0.0
  %2126 = vmatprep.subr.mxu0 0.0
  %2127 = vmatpush1.msra.mxu0 0.0
  %2128 = vmatprep.subr.mxu0 0.0
  %2129 = vmatpush1.msra.mxu0 0.0
  %2130 = vmatprep.subr.mxu0 0.0
  %2131 = vmatpush1.msra.mxu0 0.0
  %2132 = vmatprep.subr.mxu0 0.0
  %2133 = vmatpush1.msra.mxu0 0.0
  %2134 = vmatprep.subr.mxu0 0.0
  %2135 = vmatpush1.msra.mxu0 0.0
  %2136 = vmatprep.mubr.f32.mxu0 0.0
  %2137 = vmatmul.mubr.f32.gmra.mrb[0].mxu0 %v2049
  %v2138 = vpop.f32.mrb[0].mxu0
  %v2139 = vadd.f32 %v2009, %v2138
  %v2140 = vpop.f32.mrb[0].mxu0
  %2141 = vmatprep.mubr.f32.mxu0 0.0
  %2142 = vmatmul.mubr.f32.gmra.mrb[0].mxu0 %v2052
  %v2143 = vpop.f32.mrb[0].mxu0
  %v2144 = vadd.f32 %v2014, %v2143
  %v2145 = vpop.f32.mrb[0].mxu0
  %2146 = vmatprep.mubr.f32.mxu0 0.0
  %2147 = vmatmul.mubr.f32.gmra.mrb[0].mxu0 %v2055
  %v2148 = vpop.f32.mrb[0].mxu0
  %v2149 = vadd.f32 %v2019, %v2148
  %v2150 = vpop.f32.mrb[0].mxu0
  %2151 = vmatprep.mubr.f32.mxu0 0.0
  %2152 = vmatmul.mubr.f32.gmra.mrb[0].mxu0 %v2058
  %v2153 = vpop.f32.mrb[0].mxu0
  %v2154 = vadd.f32 %v2024, %v2153
  %v2155 = vpop.f32.mrb[0].mxu0
  %2156 = vmatprep.mubr.f32.mxu0 0.0
  %2157 = vmatmul.mubr.f32.gmra.mrb[0].mxu0 %v2061
  %v2158 = vpop.f32.mrb[0].mxu0
  %v2159 = vadd.f32 %v2029, %v2158
  %v2160 = vpop.f32.mrb[0].mxu0
  %2161 = vmatprep.mubr.f32.mxu0 0.0
  %2162 = vmatmul.mubr.f32.gmra.mrb[0].mxu0 %v2064
  %v2163 = vpop.f32.mrb[0].mxu0
  %v2164 = vadd.f32 %v2034, %v2163
  %v2165 = vpop.f32.mrb[0].mxu0
  %2166 = vmatprep.mubr.f32.mxu0 0.0
  %2167 = vmatmul.mubr.f32.gmra.mrb[0].mxu0 %v2067
  %v2168 = vpop.f32.mrb[0].mxu0
  %v2169 = vadd.f32 %v2039, %v2168
  %v2170 = vpop.f32.mrb[0].mxu0
  %2171 = vmatprep.mubr.f32.mxu0 0.0
  %2172 = vmatmul.mubr.f32.gmra.mrb[0].mxu0 %v2070
  %v2173 = vpop.f32.mrb[0].mxu0
  %v2174 = vadd.f32 %v2044, %v2173
  %v2175 = vpop.f32.mrb[0].mxu0
  %2176 = vdwg.mxu0
  %v2178 = vsel %vm1544, %v219, 0
  %v2181 = vsel %vm1544, %v220, 0
  %v2184 = vsel %vm1544, %v221, 0
  %v2187 = vsel %vm1544, %v222, 0
  %v2190 = vsel %vm1544, %v223, 0
  %v2193 = vsel %vm1544, %v224, 0
  %v2196 = vsel %vm1544, %v225, 0
  %v2199 = vsel %vm1544, %v226, 0
  %2201 = vmatprep.subr.mxu0 0.0
  %2202 = vmatpush1.msra.mxu0 %v1496
  %2203 = vmatprep.subr.mxu0 0.0
  %2204 = vmatpush1.msra.mxu0 %v1497
  %2205 = vmatprep.subr.mxu0 0.0
  %2206 = vmatpush1.msra.mxu0 %v1498
  %2207 = vmatprep.subr.mxu0 0.0
  %2208 = vmatpush1.msra.mxu0 %v1499
  %2209 = vmatprep.subr.mxu0 0.0
  %2210 = vmatpush1.msra.mxu0 %v1500
  %2211 = vmatprep.subr.mxu0 0.0
  %2212 = vmatpush1.msra.mxu0 %v1501
  %2213 = vmatprep.subr.mxu0 0.0
  %2214 = vmatpush1.msra.mxu0 %v1502
  %2215 = vmatprep.subr.mxu0 0.0
  %2216 = vmatpush1.msra.mxu0 %v1503
  %2217 = vmatprep.subr.mxu0 0.0
  %2218 = vmatpush1.msra.mxu0 0.0
  %2219 = vmatprep.subr.mxu0 0.0
  %2220 = vmatpush1.msra.mxu0 0.0
  %2221 = vmatprep.subr.mxu0 0.0
  %2222 = vmatpush1.msra.mxu0 0.0
  %2223 = vmatprep.subr.mxu0 0.0
  %2224 = vmatpush1.msra.mxu0 0.0
  %2225 = vmatprep.subr.mxu0 0.0
  %2226 = vmatpush1.msra.mxu0 0.0
  %2227 = vmatprep.subr.mxu0 0.0
  %2228 = vmatpush1.msra.mxu0 0.0
  %2229 = vmatprep.subr.mxu0 0.0
  %2230 = vmatpush1.msra.mxu0 0.0
  %2231 = vmatprep.subr.mxu0 0.0
  %2232 = vmatpush1.msra.mxu0 0.0
  %2233 = vmatprep.subr.mxu0 0.0
  %2234 = vmatpush1.msra.mxu0 0.0
  %2235 = vmatprep.subr.mxu0 0.0
  %2236 = vmatpush1.msra.mxu0 0.0
  %2237 = vmatprep.subr.mxu0 0.0
  %2238 = vmatpush1.msra.mxu0 0.0
  %2239 = vmatprep.subr.mxu0 0.0
  %2240 = vmatpush1.msra.mxu0 0.0
  %2241 = vmatprep.subr.mxu0 0.0
  %2242 = vmatpush1.msra.mxu0 0.0
  %2243 = vmatprep.subr.mxu0 0.0
  %2244 = vmatpush1.msra.mxu0 0.0
  %2245 = vmatprep.subr.mxu0 0.0
  %2246 = vmatpush1.msra.mxu0 0.0
  %2247 = vmatprep.subr.mxu0 0.0
  %2248 = vmatpush1.msra.mxu0 0.0
  %2249 = vmatprep.subr.mxu0 0.0
  %2250 = vmatpush1.msra.mxu0 0.0
  %2251 = vmatprep.subr.mxu0 0.0
  %2252 = vmatpush1.msra.mxu0 0.0
  %2253 = vmatprep.subr.mxu0 0.0
  %2254 = vmatpush1.msra.mxu0 0.0
  %2255 = vmatprep.subr.mxu0 0.0
  %2256 = vmatpush1.msra.mxu0 0.0
  %2257 = vmatprep.subr.mxu0 0.0
  %2258 = vmatpush1.msra.mxu0 0.0
  %2259 = vmatprep.subr.mxu0 0.0
  %2260 = vmatpush1.msra.mxu0 0.0
  %2261 = vmatprep.subr.mxu0 0.0
  %2262 = vmatpush1.msra.mxu0 0.0
  %2263 = vmatprep.subr.mxu0 0.0
  %2264 = vmatpush1.msra.mxu0 0.0
  %2265 = vmatprep.mubr.f32.mxu0 0.0
  %2266 = vmatmul.mubr.f32.gmra.mrb[0].mxu0 %v2178
  %v2267 = vpop.f32.mrb[0].mxu0
  %v2268 = vadd.f32 0.0, %v2267
  %v2269 = vpop.f32.mrb[0].mxu0
  %2270 = vmatprep.mubr.f32.mxu0 0.0
  %2271 = vmatmul.mubr.f32.gmra.mrb[0].mxu0 %v2181
  %v2272 = vpop.f32.mrb[0].mxu0
  %v2273 = vadd.f32 0.0, %v2272
  %v2274 = vpop.f32.mrb[0].mxu0
  %2275 = vmatprep.mubr.f32.mxu0 0.0
  %2276 = vmatmul.mubr.f32.gmra.mrb[0].mxu0 %v2184
  %v2277 = vpop.f32.mrb[0].mxu0
  %v2278 = vadd.f32 0.0, %v2277
  %v2279 = vpop.f32.mrb[0].mxu0
  %2280 = vmatprep.mubr.f32.mxu0 0.0
  %2281 = vmatmul.mubr.f32.gmra.mrb[0].mxu0 %v2187
  %v2282 = vpop.f32.mrb[0].mxu0
  %v2283 = vadd.f32 0.0, %v2282
  %v2284 = vpop.f32.mrb[0].mxu0
  %2285 = vmatprep.mubr.f32.mxu0 0.0
  %2286 = vmatmul.mubr.f32.gmra.mrb[0].mxu0 %v2190
  %v2287 = vpop.f32.mrb[0].mxu0
  %v2288 = vadd.f32 0.0, %v2287
  %v2289 = vpop.f32.mrb[0].mxu0
  %2290 = vmatprep.mubr.f32.mxu0 0.0
  %2291 = vmatmul.mubr.f32.gmra.mrb[0].mxu0 %v2193
  %v2292 = vpop.f32.mrb[0].mxu0
  %v2293 = vadd.f32 0.0, %v2292
  %v2294 = vpop.f32.mrb[0].mxu0
  %2295 = vmatprep.mubr.f32.mxu0 0.0
  %2296 = vmatmul.mubr.f32.gmra.mrb[0].mxu0 %v2196
  %v2297 = vpop.f32.mrb[0].mxu0
  %v2298 = vadd.f32 0.0, %v2297
  %v2299 = vpop.f32.mrb[0].mxu0
  %2300 = vmatprep.mubr.f32.mxu0 0.0
  %2301 = vmatmul.mubr.f32.gmra.mrb[0].mxu0 %v2199
  %v2302 = vpop.f32.mrb[0].mxu0
  %v2303 = vadd.f32 0.0, %v2302
  %v2304 = vpop.f32.mrb[0].mxu0
  %2305 = vdwg.mxu0
  %v2306 = vadd.f32 %v2139, %v2268
  %v2307 = vadd.f32 %v2144, %v2273
  %v2308 = vadd.f32 %v2149, %v2278
  %v2309 = vadd.f32 %v2154, %v2283
  %v2310 = vadd.f32 %v2159, %v2288
  %v2311 = vadd.f32 %v2164, %v2293
  %v2312 = vadd.f32 %v2169, %v2298
  %v2313 = vadd.f32 %v2174, %v2303
  %2315 = vset.pattern.permute.xlu0 0
  %2316 = vperm.xlu0 %2315, %v227
  %v2317 = vpop.permute.xlu0 %2316
  %2320 = vset.pattern.permute.xlu0 0
  %2321 = vperm.xlu0 %2320, %v228
  %v2322 = vpop.permute.xlu0 %2321
  %2325 = vset.pattern.permute.xlu0 0
  %2326 = vperm.xlu0 %2325, %v229
  %v2327 = vpop.permute.xlu0 %2326
  %2330 = vset.pattern.permute.xlu0 0
  %2331 = vperm.xlu0 %2330, %v230
  %v2332 = vpop.permute.xlu0 %2331
  %2335 = vset.pattern.permute.xlu0 0
  %2336 = vperm.xlu0 %2335, %v231
  %v2337 = vpop.permute.xlu0 %2336
  %2340 = vset.pattern.permute.xlu0 0
  %2341 = vperm.xlu0 %2340, %v232
  %v2342 = vpop.permute.xlu0 %2341
  %2345 = vset.pattern.permute.xlu0 0
  %2346 = vperm.xlu0 %2345, %v233
  %v2347 = vpop.permute.xlu0 %2346
  %2350 = vset.pattern.permute.xlu0 0
  %2351 = vperm.xlu0 %2350, %v234
  %v2352 = vpop.permute.xlu0 %2351
  %v2354 = vadd.f32 %v2306, %v2317
  %v2355 = vadd.f32 %v2307, %v2322
  %v2356 = vadd.f32 %v2308, %v2327
  %v2357 = vadd.f32 %v2309, %v2332
  %v2358 = vadd.f32 %v2310, %v2337
  %v2359 = vadd.f32 %v2311, %v2342
  %v2360 = vadd.f32 %v2312, %v2347
  %v2361 = vadd.f32 %v2313, %v2352
  %v2362 = vmax.f32 %v2354, 0.0
  %v2363 = vmax.f32 %v2355, 0.0
  %v2364 = vmax.f32 %v2356, 0.0
  %v2365 = vmax.f32 %v2357, 0.0
  %v2366 = vmax.f32 %v2358, 0.0
  %v2367 = vmax.f32 %v2359, 0.0
  %v2368 = vmax.f32 %v2360, 0.0
  %v2369 = vmax.f32 %v2361, 0.0
  %2371 = vset.pattern.permute.xlu0 0
  %2372 = vperm.xlu0 %2371, %v237
  %v2373 = vpop.permute.xlu0 %2372
  %2376 = vset.pattern.permute.xlu0 0
  %2377 = vperm.xlu0 %2376, %v238
  %v2378 = vpop.permute.xlu0 %2377
  %v2381 = vsel %vm1544, %v235, 0
  %v2384 = vsel %vm1544, %v236, 0
  %2386 = vmatprep.subr.mxu0 0.0
  %2387 = vmatpush1.msra.mxu0 %v2362
  %2388 = vmatprep.subr.mxu0 0.0
  %2389 = vmatpush1.msra.mxu0 %v2363
  %2390 = vmatprep.subr.mxu0 0.0
  %2391 = vmatpush1.msra.mxu0 %v2364
  %2392 = vmatprep.subr.mxu0 0.0
  %2393 = vmatpush1.msra.mxu0 %v2365
  %2394 = vmatprep.subr.mxu0 0.0
  %2395 = vmatpush1.msra.mxu0 %v2366
  %2396 = vmatprep.subr.mxu0 0.0
  %2397 = vmatpush1.msra.mxu0 %v2367
  %2398 = vmatprep.subr.mxu0 0.0
  %2399 = vmatpush1.msra.mxu0 %v2368
  %2400 = vmatprep.subr.mxu0 0.0
  %2401 = vmatpush1.msra.mxu0 %v2369
  %2402 = vmatprep.subr.mxu0 0.0
  %2403 = vmatpush1.msra.mxu0 0.0
  %2404 = vmatprep.subr.mxu0 0.0
  %2405 = vmatpush1.msra.mxu0 0.0
  %2406 = vmatprep.subr.mxu0 0.0
  %2407 = vmatpush1.msra.mxu0 0.0
  %2408 = vmatprep.subr.mxu0 0.0
  %2409 = vmatpush1.msra.mxu0 0.0
  %2410 = vmatprep.subr.mxu0 0.0
  %2411 = vmatpush1.msra.mxu0 0.0
  %2412 = vmatprep.subr.mxu0 0.0
  %2413 = vmatpush1.msra.mxu0 0.0
  %2414 = vmatprep.subr.mxu0 0.0
  %2415 = vmatpush1.msra.mxu0 0.0
  %2416 = vmatprep.subr.mxu0 0.0
  %2417 = vmatpush1.msra.mxu0 0.0
  %2418 = vmatprep.subr.mxu0 0.0
  %2419 = vmatpush1.msra.mxu0 0.0
  %2420 = vmatprep.subr.mxu0 0.0
  %2421 = vmatpush1.msra.mxu0 0.0
  %2422 = vmatprep.subr.mxu0 0.0
  %2423 = vmatpush1.msra.mxu0 0.0
  %2424 = vmatprep.subr.mxu0 0.0
  %2425 = vmatpush1.msra.mxu0 0.0
  %2426 = vmatprep.subr.mxu0 0.0
  %2427 = vmatpush1.msra.mxu0 0.0
  %2428 = vmatprep.subr.mxu0 0.0
  %2429 = vmatpush1.msra.mxu0 0.0
  %2430 = vmatprep.subr.mxu0 0.0
  %2431 = vmatpush1.msra.mxu0 0.0
  %2432 = vmatprep.subr.mxu0 0.0
  %2433 = vmatpush1.msra.mxu0 0.0
  %2434 = vmatprep.subr.mxu0 0.0
  %2435 = vmatpush1.msra.mxu0 0.0
  %2436 = vmatprep.subr.mxu0 0.0
  %2437 = vmatpush1.msra.mxu0 0.0
  %2438 = vmatprep.subr.mxu0 0.0
  %2439 = vmatpush1.msra.mxu0 0.0
  %2440 = vmatprep.subr.mxu0 0.0
  %2441 = vmatpush1.msra.mxu0 0.0
  %2442 = vmatprep.subr.mxu0 0.0
  %2443 = vmatpush1.msra.mxu0 0.0
  %2444 = vmatprep.subr.mxu0 0.0
  %2445 = vmatpush1.msra.mxu0 0.0
  %2446 = vmatprep.subr.mxu0 0.0
  %2447 = vmatpush1.msra.mxu0 0.0
  %2448 = vmatprep.subr.mxu0 0.0
  %2449 = vmatpush1.msra.mxu0 0.0
  %2450 = vmatprep.mubr.f32.mxu0 0.0
  %2451 = vmatmul.mubr.f32.gmra.mrb[0].mxu0 %v2381
  %v2452 = vpop.f32.mrb[0].mxu0
  %v2453 = vadd.f32 %v2373, %v2452
  %v2454 = vpop.f32.mrb[0].mxu0
  %2455 = vmatprep.mubr.f32.mxu0 0.0
  %2456 = vmatmul.mubr.f32.gmra.mrb[0].mxu0 %v2384
  %v2457 = vpop.f32.mrb[0].mxu0
  %v2458 = vadd.f32 %v2378, %v2457
  %v2459 = vpop.f32.mrb[0].mxu0
  %2460 = vdwg.mxu0
  %v2462 = vsel %vm1917, %v2453, 0
  %v2465 = vsel %vm1917, %v2458, 0
  %2467 = vmatprep.subr.mxu0 %v349
  %2468 = vmatpush1.msra.mxu0 %v348
  %2469 = vmatprep.subr.mxu0 %v353
  %2470 = vmatpush1.msra.mxu0 %v352
  %2471 = vmatprep.subr.mxu0 %v357
  %2472 = vmatpush1.msra.mxu0 %v356
  %2473 = vmatprep.subr.mxu0 %v361
  %2474 = vmatpush1.msra.mxu0 %v360
  %2475 = vmatprep.subr.mxu0 0.0
  %2476 = vmatpush1.msra.mxu0 0.0
  %2477 = vmatprep.subr.mxu0 0.0
  %2478 = vmatpush1.msra.mxu0 0.0
  %2479 = vmatprep.subr.mxu0 0.0
  %2480 = vmatpush1.msra.mxu0 0.0
  %2481 = vmatprep.subr.mxu0 0.0
  %2482 = vmatpush1.msra.mxu0 0.0
  %2483 = vmatprep.subr.mxu0 0.0
  %2484 = vmatpush1.msra.mxu0 0.0
  %2485 = vmatprep.subr.mxu0 0.0
  %2486 = vmatpush1.msra.mxu0 0.0
  %2487 = vmatprep.subr.mxu0 0.0
  %2488 = vmatpush1.msra.mxu0 0.0
  %2489 = vmatprep.subr.mxu0 0.0
  %2490 = vmatpush1.msra.mxu0 0.0
  %2491 = vmatprep.subr.mxu0 0.0
  %2492 = vmatpush1.msra.mxu0 0.0
  %2493 = vmatprep.subr.mxu0 0.0
  %2494 = vmatpush1.msra.mxu0 0.0
  %2495 = vmatprep.subr.mxu0 0.0
  %2496 = vmatpush1.msra.mxu0 0.0
  %2497 = vmatprep.subr.mxu0 0.0
  %2498 = vmatpush1.msra.mxu0 0.0
  %2499 = vmatprep.subr.mxu0 0.0
  %2500 = vmatpush1.msra.mxu0 0.0
  %2501 = vmatprep.subr.mxu0 0.0
  %2502 = vmatpush1.msra.mxu0 0.0
  %2503 = vmatprep.subr.mxu0 0.0
  %2504 = vmatpush1.msra.mxu0 0.0
  %2505 = vmatprep.subr.mxu0 0.0
  %2506 = vmatpush1.msra.mxu0 0.0
  %2507 = vmatprep.subr.mxu0 0.0
  %2508 = vmatpush1.msra.mxu0 0.0
  %2509 = vmatprep.subr.mxu0 0.0
  %2510 = vmatpush1.msra.mxu0 0.0
  %2511 = vmatprep.subr.mxu0 0.0
  %2512 = vmatpush1.msra.mxu0 0.0
  %2513 = vmatprep.subr.mxu0 0.0
  %2514 = vmatpush1.msra.mxu0 0.0
  %2515 = vmatprep.subr.mxu0 0.0
  %2516 = vmatpush1.msra.mxu0 0.0
  %2517 = vmatprep.subr.mxu0 0.0
  %2518 = vmatpush1.msra.mxu0 0.0
  %2519 = vmatprep.subr.mxu0 0.0
  %2520 = vmatpush1.msra.mxu0 0.0
  %2521 = vmatprep.subr.mxu0 0.0
  %2522 = vmatpush1.msra.mxu0 0.0
  %2523 = vmatprep.subr.mxu0 0.0
  %2524 = vmatpush1.msra.mxu0 0.0
  %2525 = vmatprep.subr.mxu0 0.0
  %2526 = vmatpush1.msra.mxu0 0.0
  %2527 = vmatprep.subr.mxu0 0.0
  %2528 = vmatpush1.msra.mxu0 0.0
  %2529 = vmatprep.subr.mxu0 0.0
  %2530 = vmatpush1.msra.mxu0 0.0
  %2531 = vmatprep.mubr.f32.mxu0 0.0
  %2532 = vmatmul.mubr.f32.gmra.mrb[0].mxu0 %v2462
  %v2533 = vpop.f32.mrb[0].mxu0
  %v2534 = vadd.f32 0.0, %v2533
  %v2535 = vpop.f32.mrb[0].mxu0
  %v2536 = vadd.f32 0.0, %v2535
  %2537 = vmatprep.mubr.f32.mxu0 0.0
  %2538 = vmatmul.mubr.f32.gmra.mrb[0].mxu0 %v2465
  %v2539 = vpop.f32.mrb[0].mxu0
  %v2540 = vadd.f32 0.0, %v2539
  %v2541 = vpop.f32.mrb[0].mxu0
  %v2542 = vadd.f32 0.0, %v2541
  %2543 = vdwg.mxu0
  %2544 = vmatprep.subr.mxu0 %v351
  %2545 = vmatpush1.msra.mxu0 %v350
  %2546 = vmatprep.subr.mxu0 %v355
  %2547 = vmatpush1.msra.mxu0 %v354
  %2548 = vmatprep.subr.mxu0 %v359
  %2549 = vmatpush1.msra.mxu0 %v358
  %2550 = vmatprep.subr.mxu0 %v363
  %2551 = vmatpush1.msra.mxu0 %v362
  %2552 = vmatprep.subr.mxu0 0.0
  %2553 = vmatpush1.msra.mxu0 0.0
  %2554 = vmatprep.subr.mxu0 0.0
  %2555 = vmatpush1.msra.mxu0 0.0
  %2556 = vmatprep.subr.mxu0 0.0
  %2557 = vmatpush1.msra.mxu0 0.0
  %2558 = vmatprep.subr.mxu0 0.0
  %2559 = vmatpush1.msra.mxu0 0.0
  %2560 = vmatprep.subr.mxu0 0.0
  %2561 = vmatpush1.msra.mxu0 0.0
  %2562 = vmatprep.subr.mxu0 0.0
  %2563 = vmatpush1.msra.mxu0 0.0
  %2564 = vmatprep.subr.mxu0 0.0
  %2565 = vmatpush1.msra.mxu0 0.0
  %2566 = vmatprep.subr.mxu0 0.0
  %2567 = vmatpush1.msra.mxu0 0.0
  %2568 = vmatprep.subr.mxu0 0.0
  %2569 = vmatpush1.msra.mxu0 0.0
  %2570 = vmatprep.subr.mxu0 0.0
  %2571 = vmatpush1.msra.mxu0 0.0
  %2572 = vmatprep.subr.mxu0 0.0
  %2573 = vmatpush1.msra.mxu0 0.0
  %2574 = vmatprep.subr.mxu0 0.0
  %2575 = vmatpush1.msra.mxu0 0.0
  %2576 = vmatprep.subr.mxu0 0.0
  %2577 = vmatpush1.msra.mxu0 0.0
  %2578 = vmatprep.subr.mxu0 0.0
  %2579 = vmatpush1.msra.mxu0 0.0
  %2580 = vmatprep.subr.mxu0 0.0
  %2581 = vmatpush1.msra.mxu0 0.0
  %2582 = vmatprep.subr.mxu0 0.0
  %2583 = vmatpush1.msra.mxu0 0.0
  %2584 = vmatprep.subr.mxu0 0.0
  %2585 = vmatpush1.msra.mxu0 0.0
  %2586 = vmatprep.subr.mxu0 0.0
  %2587 = vmatpush1.msra.mxu0 0.0
  %2588 = vmatprep.subr.mxu0 0.0
  %2589 = vmatpush1.msra.mxu0 0.0
  %2590 = vmatprep.subr.mxu0 0.0
  %2591 = vmatpush1.msra.mxu0 0.0
  %2592 = vmatprep.subr.mxu0 0.0
  %2593 = vmatpush1.msra.mxu0 0.0
  %2594 = vmatprep.subr.mxu0 0.0
  %2595 = vmatpush1.msra.mxu0 0.0
  %2596 = vmatprep.subr.mxu0 0.0
  %2597 = vmatpush1.msra.mxu0 0.0
  %2598 = vmatprep.subr.mxu0 0.0
  %2599 = vmatpush1.msra.mxu0 0.0
  %2600 = vmatprep.subr.mxu0 0.0
  %2601 = vmatpush1.msra.mxu0 0.0
  %2602 = vmatprep.subr.mxu0 0.0
  %2603 = vmatpush1.msra.mxu0 0.0
  %2604 = vmatprep.subr.mxu0 0.0
  %2605 = vmatpush1.msra.mxu0 0.0
  %2606 = vmatprep.subr.mxu0 0.0
  %2607 = vmatpush1.msra.mxu0 0.0
  %2608 = vmatprep.mubr.f32.mxu0 0.0
  %2609 = vmatmul.mubr.f32.gmra.mrb[0].mxu0 %v2462
  %v2610 = vpop.f32.mrb[0].mxu0
  %v2611 = vadd.f32 0.0, %v2610
  %v2612 = vpop.f32.mrb[0].mxu0
  %v2613 = vadd.f32 0.0, %v2612
  %2614 = vmatprep.mubr.f32.mxu0 0.0
  %2615 = vmatmul.mubr.f32.gmra.mrb[0].mxu0 %v2465
  %v2616 = vpop.f32.mrb[0].mxu0
  %v2617 = vadd.f32 0.0, %v2616
  %v2618 = vpop.f32.mrb[0].mxu0
  %v2619 = vadd.f32 0.0, %v2618
  %2620 = vdwg.mxu0
  %2622 = vset.pattern.permute.xlu0 0
  %2623 = vperm.xlu0 %2622, %v243
  %v2624 = vpop.permute.xlu0 %2623
  %2627 = vset.pattern.permute.xlu0 0
  %2628 = vperm.xlu0 %2627, %v244
  %v2629 = vpop.permute.xlu0 %2628
  %2632 = vset.pattern.permute.xlu0 0
  %2633 = vperm.xlu0 %2632, %v245
  %v2634 = vpop.permute.xlu0 %2633
  %2637 = vset.pattern.permute.xlu0 0
  %2638 = vperm.xlu0 %2637, %v246
  %v2639 = vpop.permute.xlu0 %2638
  %v2642 = vsel %vm1544, %v239, 0
  %v2645 = vsel %vm1544, %v240, 0
  %v2648 = vsel %vm1544, %v241, 0
  %v2651 = vsel %vm1544, %v242, 0
  %2653 = vmatprep.subr.mxu0 0.0
  %2654 = vmatpush1.msra.mxu0 %v2362
  %2655 = vmatprep.subr.mxu0 0.0
  %2656 = vmatpush1.msra.mxu0 %v2363
  %2657 = vmatprep.subr.mxu0 0.0
  %2658 = vmatpush1.msra.mxu0 %v2364
  %2659 = vmatprep.subr.mxu0 0.0
  %2660 = vmatpush1.msra.mxu0 %v2365
  %2661 = vmatprep.subr.mxu0 0.0
  %2662 = vmatpush1.msra.mxu0 %v2366
  %2663 = vmatprep.subr.mxu0 0.0
  %2664 = vmatpush1.msra.mxu0 %v2367
  %2665 = vmatprep.subr.mxu0 0.0
  %2666 = vmatpush1.msra.mxu0 %v2368
  %2667 = vmatprep.subr.mxu0 0.0
  %2668 = vmatpush1.msra.mxu0 %v2369
  %2669 = vmatprep.subr.mxu0 0.0
  %2670 = vmatpush1.msra.mxu0 0.0
  %2671 = vmatprep.subr.mxu0 0.0
  %2672 = vmatpush1.msra.mxu0 0.0
  %2673 = vmatprep.subr.mxu0 0.0
  %2674 = vmatpush1.msra.mxu0 0.0
  %2675 = vmatprep.subr.mxu0 0.0
  %2676 = vmatpush1.msra.mxu0 0.0
  %2677 = vmatprep.subr.mxu0 0.0
  %2678 = vmatpush1.msra.mxu0 0.0
  %2679 = vmatprep.subr.mxu0 0.0
  %2680 = vmatpush1.msra.mxu0 0.0
  %2681 = vmatprep.subr.mxu0 0.0
  %2682 = vmatpush1.msra.mxu0 0.0
  %2683 = vmatprep.subr.mxu0 0.0
  %2684 = vmatpush1.msra.mxu0 0.0
  %2685 = vmatprep.subr.mxu0 0.0
  %2686 = vmatpush1.msra.mxu0 0.0
  %2687 = vmatprep.subr.mxu0 0.0
  %2688 = vmatpush1.msra.mxu0 0.0
  %2689 = vmatprep.subr.mxu0 0.0
  %2690 = vmatpush1.msra.mxu0 0.0
  %2691 = vmatprep.subr.mxu0 0.0
  %2692 = vmatpush1.msra.mxu0 0.0
  %2693 = vmatprep.subr.mxu0 0.0
  %2694 = vmatpush1.msra.mxu0 0.0
  %2695 = vmatprep.subr.mxu0 0.0
  %2696 = vmatpush1.msra.mxu0 0.0
  %2697 = vmatprep.subr.mxu0 0.0
  %2698 = vmatpush1.msra.mxu0 0.0
  %2699 = vmatprep.subr.mxu0 0.0
  %2700 = vmatpush1.msra.mxu0 0.0
  %2701 = vmatprep.subr.mxu0 0.0
  %2702 = vmatpush1.msra.mxu0 0.0
  %2703 = vmatprep.subr.mxu0 0.0
  %2704 = vmatpush1.msra.mxu0 0.0
  %2705 = vmatprep.subr.mxu0 0.0
  %2706 = vmatpush1.msra.mxu0 0.0
  %2707 = vmatprep.subr.mxu0 0.0
  %2708 = vmatpush1.msra.mxu0 0.0
  %2709 = vmatprep.subr.mxu0 0.0
  %2710 = vmatpush1.msra.mxu0 0.0
  %2711 = vmatprep.subr.mxu0 0.0
  %2712 = vmatpush1.msra.mxu0 0.0
  %2713 = vmatprep.subr.mxu0 0.0
  %2714 = vmatpush1.msra.mxu0 0.0
  %2715 = vmatprep.subr.mxu0 0.0
  %2716 = vmatpush1.msra.mxu0 0.0
  %2717 = vmatprep.mubr.f32.mxu0 0.0
  %2718 = vmatmul.mubr.f32.gmra.mrb[0].mxu0 %v2642
  %v2719 = vpop.f32.mrb[0].mxu0
  %v2720 = vadd.f32 %v2624, %v2719
  %v2721 = vpop.f32.mrb[0].mxu0
  %2722 = vmatprep.mubr.f32.mxu0 0.0
  %2723 = vmatmul.mubr.f32.gmra.mrb[0].mxu0 %v2645
  %v2724 = vpop.f32.mrb[0].mxu0
  %v2725 = vadd.f32 %v2629, %v2724
  %v2726 = vpop.f32.mrb[0].mxu0
  %2727 = vmatprep.mubr.f32.mxu0 0.0
  %2728 = vmatmul.mubr.f32.gmra.mrb[0].mxu0 %v2648
  %v2729 = vpop.f32.mrb[0].mxu0
  %v2730 = vadd.f32 %v2634, %v2729
  %v2731 = vpop.f32.mrb[0].mxu0
  %2732 = vmatprep.mubr.f32.mxu0 0.0
  %2733 = vmatmul.mubr.f32.gmra.mrb[0].mxu0 %v2651
  %v2734 = vpop.f32.mrb[0].mxu0
  %v2735 = vadd.f32 %v2639, %v2734
  %v2736 = vpop.f32.mrb[0].mxu0
  %2737 = vdwg.mxu0
  %v2739 = vsel %vm1917, %v2720, 0
  %v2742 = vsel %vm1917, %v2725, 0
  %v2745 = vsel %vm1917, %v2730, 0
  %v2748 = vsel %vm1917, %v2735, 0
  %2750 = vmatprep.subr.mxu0 0.0
  %2751 = vmatpush1.msra.mxu0 %v364
  %2752 = vmatprep.subr.mxu0 0.0
  %2753 = vmatpush1.msra.mxu0 %v365
  %2754 = vmatprep.subr.mxu0 0.0
  %2755 = vmatpush1.msra.mxu0 %v366
  %2756 = vmatprep.subr.mxu0 0.0
  %2757 = vmatpush1.msra.mxu0 %v367
  %2758 = vmatprep.subr.mxu0 0.0
  %2759 = vmatpush1.msra.mxu0 0.0
  %2760 = vmatprep.subr.mxu0 0.0
  %2761 = vmatpush1.msra.mxu0 0.0
  %2762 = vmatprep.subr.mxu0 0.0
  %2763 = vmatpush1.msra.mxu0 0.0
  %2764 = vmatprep.subr.mxu0 0.0
  %2765 = vmatpush1.msra.mxu0 0.0
  %2766 = vmatprep.subr.mxu0 0.0
  %2767 = vmatpush1.msra.mxu0 0.0
  %2768 = vmatprep.subr.mxu0 0.0
  %2769 = vmatpush1.msra.mxu0 0.0
  %2770 = vmatprep.subr.mxu0 0.0
  %2771 = vmatpush1.msra.mxu0 0.0
  %2772 = vmatprep.subr.mxu0 0.0
  %2773 = vmatpush1.msra.mxu0 0.0
  %2774 = vmatprep.subr.mxu0 0.0
  %2775 = vmatpush1.msra.mxu0 0.0
  %2776 = vmatprep.subr.mxu0 0.0
  %2777 = vmatpush1.msra.mxu0 0.0
  %2778 = vmatprep.subr.mxu0 0.0
  %2779 = vmatpush1.msra.mxu0 0.0
  %2780 = vmatprep.subr.mxu0 0.0
  %2781 = vmatpush1.msra.mxu0 0.0
  %2782 = vmatprep.subr.mxu0 0.0
  %2783 = vmatpush1.msra.mxu0 0.0
  %2784 = vmatprep.subr.mxu0 0.0
  %2785 = vmatpush1.msra.mxu0 0.0
  %2786 = vmatprep.subr.mxu0 0.0
  %2787 = vmatpush1.msra.mxu0 0.0
  %2788 = vmatprep.subr.mxu0 0.0
  %2789 = vmatpush1.msra.mxu0 0.0
  %2790 = vmatprep.subr.mxu0 0.0
  %2791 = vmatpush1.msra.mxu0 0.0
  %2792 = vmatprep.subr.mxu0 0.0
  %2793 = vmatpush1.msra.mxu0 0.0
  %2794 = vmatprep.subr.mxu0 0.0
  %2795 = vmatpush1.msra.mxu0 0.0
  %2796 = vmatprep.subr.mxu0 0.0
  %2797 = vmatpush1.msra.mxu0 0.0
  %2798 = vmatprep.subr.mxu0 0.0
  %2799 = vmatpush1.msra.mxu0 0.0
  %2800 = vmatprep.subr.mxu0 0.0
  %2801 = vmatpush1.msra.mxu0 0.0
  %2802 = vmatprep.subr.mxu0 0.0
  %2803 = vmatpush1.msra.mxu0 0.0
  %2804 = vmatprep.subr.mxu0 0.0
  %2805 = vmatpush1.msra.mxu0 0.0
  %2806 = vmatprep.subr.mxu0 0.0
  %2807 = vmatpush1.msra.mxu0 0.0
  %2808 = vmatprep.subr.mxu0 0.0
  %2809 = vmatpush1.msra.mxu0 0.0
  %2810 = vmatprep.subr.mxu0 0.0
  %2811 = vmatpush1.msra.mxu0 0.0
  %2812 = vmatprep.subr.mxu0 0.0
  %2813 = vmatpush1.msra.mxu0 0.0
  %2814 = vmatprep.mubr.f32.mxu0 0.0
  %2815 = vmatmul.mubr.f32.gmra.mrb[0].mxu0 %v2739
  %v2816 = vpop.f32.mrb[0].mxu0
  %v2817 = vadd.f32 0.0, %v2816
  %v2818 = vpop.f32.mrb[0].mxu0
  %2819 = vmatprep.mubr.f32.mxu0 0.0
  %2820 = vmatmul.mubr.f32.gmra.mrb[0].mxu0 %v2742
  %v2821 = vpop.f32.mrb[0].mxu0
  %v2822 = vadd.f32 0.0, %v2821
  %v2823 = vpop.f32.mrb[0].mxu0
  %2824 = vmatprep.mubr.f32.mxu0 0.0
  %2825 = vmatmul.mubr.f32.gmra.mrb[0].mxu0 %v2745
  %v2826 = vpop.f32.mrb[0].mxu0
  %v2827 = vadd.f32 0.0, %v2826
  %v2828 = vpop.f32.mrb[0].mxu0
  %2829 = vmatprep.mubr.f32.mxu0 0.0
  %2830 = vmatmul.mubr.f32.gmra.mrb[0].mxu0 %v2748
  %v2831 = vpop.f32.mrb[0].mxu0
  %v2832 = vadd.f32 0.0, %v2831
  %v2833 = vpop.f32.mrb[0].mxu0
  %2834 = vdwg.mxu0
  %2836 = vset.pattern.permute.xlu0 0
  %2837 = vperm.xlu0 %2836, %v255
  %v2838 = vpop.permute.xlu0 %2837
  %2841 = vset.pattern.permute.xlu0 0
  %2842 = vperm.xlu0 %2841, %v256
  %v2843 = vpop.permute.xlu0 %2842
  %2846 = vset.pattern.permute.xlu0 0
  %2847 = vperm.xlu0 %2846, %v257
  %v2848 = vpop.permute.xlu0 %2847
  %2851 = vset.pattern.permute.xlu0 0
  %2852 = vperm.xlu0 %2851, %v258
  %v2853 = vpop.permute.xlu0 %2852
  %2856 = vset.pattern.permute.xlu0 0
  %2857 = vperm.xlu0 %2856, %v259
  %v2858 = vpop.permute.xlu0 %2857
  %2861 = vset.pattern.permute.xlu0 0
  %2862 = vperm.xlu0 %2861, %v260
  %v2863 = vpop.permute.xlu0 %2862
  %2866 = vset.pattern.permute.xlu0 0
  %2867 = vperm.xlu0 %2866, %v261
  %v2868 = vpop.permute.xlu0 %2867
  %2871 = vset.pattern.permute.xlu0 0
  %2872 = vperm.xlu0 %2871, %v262
  %v2873 = vpop.permute.xlu0 %2872
  %v2876 = vsel %vm1544, %v247, 0
  %v2879 = vsel %vm1544, %v248, 0
  %v2882 = vsel %vm1544, %v249, 0
  %v2885 = vsel %vm1544, %v250, 0
  %v2888 = vsel %vm1544, %v251, 0
  %v2891 = vsel %vm1544, %v252, 0
  %v2894 = vsel %vm1544, %v253, 0
  %v2897 = vsel %vm1544, %v254, 0
  %2899 = vmatprep.subr.mxu0 0.0
  %2900 = vmatpush1.msra.mxu0 %v2362
  %2901 = vmatprep.subr.mxu0 0.0
  %2902 = vmatpush1.msra.mxu0 %v2363
  %2903 = vmatprep.subr.mxu0 0.0
  %2904 = vmatpush1.msra.mxu0 %v2364
  %2905 = vmatprep.subr.mxu0 0.0
  %2906 = vmatpush1.msra.mxu0 %v2365
  %2907 = vmatprep.subr.mxu0 0.0
  %2908 = vmatpush1.msra.mxu0 %v2366
  %2909 = vmatprep.subr.mxu0 0.0
  %2910 = vmatpush1.msra.mxu0 %v2367
  %2911 = vmatprep.subr.mxu0 0.0
  %2912 = vmatpush1.msra.mxu0 %v2368
  %2913 = vmatprep.subr.mxu0 0.0
  %2914 = vmatpush1.msra.mxu0 %v2369
  %2915 = vmatprep.subr.mxu0 0.0
  %2916 = vmatpush1.msra.mxu0 0.0
  %2917 = vmatprep.subr.mxu0 0.0
  %2918 = vmatpush1.msra.mxu0 0.0
  %2919 = vmatprep.subr.mxu0 0.0
  %2920 = vmatpush1.msra.mxu0 0.0
  %2921 = vmatprep.subr.mxu0 0.0
  %2922 = vmatpush1.msra.mxu0 0.0
  %2923 = vmatprep.subr.mxu0 0.0
  %2924 = vmatpush1.msra.mxu0 0.0
  %2925 = vmatprep.subr.mxu0 0.0
  %2926 = vmatpush1.msra.mxu0 0.0
  %2927 = vmatprep.subr.mxu0 0.0
  %2928 = vmatpush1.msra.mxu0 0.0
  %2929 = vmatprep.subr.mxu0 0.0
  %2930 = vmatpush1.msra.mxu0 0.0
  %2931 = vmatprep.subr.mxu0 0.0
  %2932 = vmatpush1.msra.mxu0 0.0
  %2933 = vmatprep.subr.mxu0 0.0
  %2934 = vmatpush1.msra.mxu0 0.0
  %2935 = vmatprep.subr.mxu0 0.0
  %2936 = vmatpush1.msra.mxu0 0.0
  %2937 = vmatprep.subr.mxu0 0.0
  %2938 = vmatpush1.msra.mxu0 0.0
  %2939 = vmatprep.subr.mxu0 0.0
  %2940 = vmatpush1.msra.mxu0 0.0
  %2941 = vmatprep.subr.mxu0 0.0
  %2942 = vmatpush1.msra.mxu0 0.0
  %2943 = vmatprep.subr.mxu0 0.0
  %2944 = vmatpush1.msra.mxu0 0.0
  %2945 = vmatprep.subr.mxu0 0.0
  %2946 = vmatpush1.msra.mxu0 0.0
  %2947 = vmatprep.subr.mxu0 0.0
  %2948 = vmatpush1.msra.mxu0 0.0
  %2949 = vmatprep.subr.mxu0 0.0
  %2950 = vmatpush1.msra.mxu0 0.0
  %2951 = vmatprep.subr.mxu0 0.0
  %2952 = vmatpush1.msra.mxu0 0.0
  %2953 = vmatprep.subr.mxu0 0.0
  %2954 = vmatpush1.msra.mxu0 0.0
  %2955 = vmatprep.subr.mxu0 0.0
  %2956 = vmatpush1.msra.mxu0 0.0
  %2957 = vmatprep.subr.mxu0 0.0
  %2958 = vmatpush1.msra.mxu0 0.0
  %2959 = vmatprep.subr.mxu0 0.0
  %2960 = vmatpush1.msra.mxu0 0.0
  %2961 = vmatprep.subr.mxu0 0.0
  %2962 = vmatpush1.msra.mxu0 0.0
  %2963 = vmatprep.mubr.f32.mxu0 0.0
  %2964 = vmatmul.mubr.f32.gmra.mrb[0].mxu0 %v2876
  %v2965 = vpop.f32.mrb[0].mxu0
  %v2966 = vadd.f32 %v2838, %v2965
  %v2967 = vpop.f32.mrb[0].mxu0
  %2968 = vmatprep.mubr.f32.mxu0 0.0
  %2969 = vmatmul.mubr.f32.gmra.mrb[0].mxu0 %v2879
  %v2970 = vpop.f32.mrb[0].mxu0
  %v2971 = vadd.f32 %v2843, %v2970
  %v2972 = vpop.f32.mrb[0].mxu0
  %2973 = vmatprep.mubr.f32.mxu0 0.0
  %2974 = vmatmul.mubr.f32.gmra.mrb[0].mxu0 %v2882
  %v2975 = vpop.f32.mrb[0].mxu0
  %v2976 = vadd.f32 %v2848, %v2975
  %v2977 = vpop.f32.mrb[0].mxu0
  %2978 = vmatprep.mubr.f32.mxu0 0.0
  %2979 = vmatmul.mubr.f32.gmra.mrb[0].mxu0 %v2885
  %v2980 = vpop.f32.mrb[0].mxu0
  %v2981 = vadd.f32 %v2853, %v2980
  %v2982 = vpop.f32.mrb[0].mxu0
  %2983 = vmatprep.mubr.f32.mxu0 0.0
  %2984 = vmatmul.mubr.f32.gmra.mrb[0].mxu0 %v2888
  %v2985 = vpop.f32.mrb[0].mxu0
  %v2986 = vadd.f32 %v2858, %v2985
  %v2987 = vpop.f32.mrb[0].mxu0
  %2988 = vmatprep.mubr.f32.mxu0 0.0
  %2989 = vmatmul.mubr.f32.gmra.mrb[0].mxu0 %v2891
  %v2990 = vpop.f32.mrb[0].mxu0
  %v2991 = vadd.f32 %v2863, %v2990
  %v2992 = vpop.f32.mrb[0].mxu0
  %2993 = vmatprep.mubr.f32.mxu0 0.0
  %2994 = vmatmul.mubr.f32.gmra.mrb[0].mxu0 %v2894
  %v2995 = vpop.f32.mrb[0].mxu0
  %v2996 = vadd.f32 %v2868, %v2995
  %v2997 = vpop.f32.mrb[0].mxu0
  %2998 = vmatprep.mubr.f32.mxu0 0.0
  %2999 = vmatmul.mubr.f32.gmra.mrb[0].mxu0 %v2897
  %v3000 = vpop.f32.mrb[0].mxu0
  %v3001 = vadd.f32 %v2873, %v3000
  %v3002 = vpop.f32.mrb[0].mxu0
  %3003 = vdwg.mxu0
  %v3004 = vmul.f32 %v1192, %v1192
  %v3005 = vmul.f32 %v1193, %v1193
  %v3006 = vmul.f32 %v1194, %v1194
  %v3007 = vmul.f32 %v1195, %v1195
  %v3008 = vmul.f32 %v1196, %v1196
  %v3009 = vmul.f32 %v1197, %v1197
  %v3010 = vmul.f32 %v1198, %v1198
  %v3011 = vmul.f32 %v1199, %v1199
  %v3012 = vadd.f32 %v3004, %v3008
  %v3013 = vrot.slane %v3012, 4
  %v3014 = vadd.f32 %v3012, %v3013
  %v3015 = vrot.slane %v3014, 2
  %v3016 = vadd.f32 %v3014, %v3015
  %v3017 = vrot.slane %v3016, 1
  %v3018 = vadd.f32 %v3016, %v3017
  %v3019 = vadd.f32 %v3005, %v3009
  %v3020 = vrot.slane %v3019, 4
  %v3021 = vadd.f32 %v3019, %v3020
  %v3022 = vrot.slane %v3021, 2
  %v3023 = vadd.f32 %v3021, %v3022
  %v3024 = vrot.slane %v3023, 1
  %v3025 = vadd.f32 %v3023, %v3024
  %v3026 = vadd.f32 %v3006, %v3010
  %v3027 = vrot.slane %v3026, 4
  %v3028 = vadd.f32 %v3026, %v3027
  %v3029 = vrot.slane %v3028, 2
  %v3030 = vadd.f32 %v3028, %v3029
  %v3031 = vrot.slane %v3030, 1
  %v3032 = vadd.f32 %v3030, %v3031
  %v3033 = vadd.f32 %v3007, %v3011
  %v3034 = vrot.slane %v3033, 4
  %v3035 = vadd.f32 %v3033, %v3034
  %v3036 = vrot.slane %v3035, 2
  %v3037 = vadd.f32 %v3035, %v3036
  %v3038 = vrot.slane %v3037, 1
  %v3039 = vadd.f32 %v3037, %v3038
  %v3040 = vmax.f32 %v3018, 1e-24
  %v3041 = vmax.f32 %v3025, 1e-24
  %v3042 = vmax.f32 %v3032, 1e-24
  %v3043 = vmax.f32 %v3039, 1e-24
  %v3044 = vrsqrt.pop %v3040
  %v3045 = vrsqrt.pop %v3041
  %v3046 = vrsqrt.pop %v3042
  %v3047 = vrsqrt.pop %v3043
  %v3048 = vmul.f32 %v1192, %v3044
  %v3049 = vmul.f32 %v1193, %v3045
  %v3050 = vmul.f32 %v1194, %v3046
  %v3051 = vmul.f32 %v1195, %v3047
  %v3052 = vmul.f32 %v1196, %v3044
  %v3053 = vmul.f32 %v1197, %v3045
  %v3054 = vmul.f32 %v1198, %v3046
  %v3055 = vmul.f32 %v1199, %v3047
  %v3056 = vmul.f32 %v2534, %v2534
  %v3057 = vmul.f32 %v2536, %v2536
  %v3058 = vmul.f32 %v2611, %v2611
  %v3059 = vmul.f32 %v2613, %v2613
  %v3060 = vmul.f32 %v2540, %v2540
  %v3061 = vmul.f32 %v2542, %v2542
  %v3062 = vmul.f32 %v2617, %v2617
  %v3063 = vmul.f32 %v2619, %v2619
  %v3064 = vadd.f32 %v3056, %v3060
  %v3065 = vrot.slane %v3064, 4
  %v3066 = vadd.f32 %v3064, %v3065
  %v3067 = vrot.slane %v3066, 2
  %v3068 = vadd.f32 %v3066, %v3067
  %v3069 = vrot.slane %v3068, 1
  %v3070 = vadd.f32 %v3068, %v3069
  %v3071 = vadd.f32 %v3057, %v3061
  %v3072 = vrot.slane %v3071, 4
  %v3073 = vadd.f32 %v3071, %v3072
  %v3074 = vrot.slane %v3073, 2
  %v3075 = vadd.f32 %v3073, %v3074
  %v3076 = vrot.slane %v3075, 1
  %v3077 = vadd.f32 %v3075, %v3076
  %v3078 = vadd.f32 %v3058, %v3062
  %v3079 = vrot.slane %v3078, 4
  %v3080 = vadd.f32 %v3078, %v3079
  %v3081 = vrot.slane %v3080, 2
  %v3082 = vadd.f32 %v3080, %v3081
  %v3083 = vrot.slane %v3082, 1
  %v3084 = vadd.f32 %v3082, %v3083
  %v3085 = vadd.f32 %v3059, %v3063
  %v3086 = vrot.slane %v3085, 4
  %v3087 = vadd.f32 %v3085, %v3086
  %v3088 = vrot.slane %v3087, 2
  %v3089 = vadd.f32 %v3087, %v3088
  %v3090 = vrot.slane %v3089, 1
  %v3091 = vadd.f32 %v3089, %v3090
  %v3092 = vmax.f32 %v3070, 1e-24
  %v3093 = vmax.f32 %v3077, 1e-24
  %v3094 = vmax.f32 %v3084, 1e-24
  %v3095 = vmax.f32 %v3091, 1e-24
  %v3096 = vrsqrt.pop %v3092
  %v3097 = vrsqrt.pop %v3093
  %v3098 = vrsqrt.pop %v3094
  %v3099 = vrsqrt.pop %v3095
  %v3100 = vmul.f32 %v2534, %v3096
  %v3101 = vmul.f32 %v2536, %v3097
  %v3102 = vmul.f32 %v2611, %v3098
  %v3103 = vmul.f32 %v2613, %v3099
  %v3104 = vmul.f32 %v2540, %v3096
  %v3105 = vmul.f32 %v2542, %v3097
  %v3106 = vmul.f32 %v2617, %v3098
  %v3107 = vmul.f32 %v2619, %v3099
  %v3108 = vsub.f32 %v3048, %v3100
  %v3109 = vsub.f32 %v3049, %v3101
  %v3110 = vsub.f32 %v3050, %v3102
  %v3111 = vsub.f32 %v3051, %v3103
  %v3112 = vsub.f32 %v3052, %v3104
  %v3113 = vsub.f32 %v3053, %v3105
  %v3114 = vsub.f32 %v3054, %v3106
  %v3115 = vsub.f32 %v3055, %v3107
  %v3116 = vmul.f32 %v3108, %v3108
  %v3117 = vmul.f32 %v3109, %v3109
  %v3118 = vmul.f32 %v3110, %v3110
  %v3119 = vmul.f32 %v3111, %v3111
  %v3120 = vmul.f32 %v3112, %v3112
  %v3121 = vmul.f32 %v3113, %v3113
  %v3122 = vmul.f32 %v3114, %v3114
  %v3123 = vmul.f32 %v3115, %v3115
  %v3124 = vmul.f32 %v1320, %v1320
  %v3125 = vmul.f32 %v1321, %v1321
  %v3126 = vmul.f32 %v1322, %v1322
  %v3127 = vmul.f32 %v1323, %v1323
  %v3128 = vadd.f32 %v3124, %v3125
  %v3129 = vadd.f32 %v3128, %v3126
  %v3130 = vadd.f32 %v3129, %v3127
  %v3131 = vrot.slane %v3130, 4
  %v3132 = vadd.f32 %v3130, %v3131
  %v3133 = vrot.slane %v3132, 2
  %v3134 = vadd.f32 %v3132, %v3133
  %v3135 = vrot.slane %v3134, 1
  %v3136 = vadd.f32 %v3134, %v3135
  %v3137 = vmax.f32 %v3136, 1e-24
  %v3138 = vrsqrt.pop %v3137
  %v3139 = vmul.f32 %v1320, %v3138
  %v3140 = vmul.f32 %v1321, %v3138
  %v3141 = vmul.f32 %v1322, %v3138
  %v3142 = vmul.f32 %v1323, %v3138
  %v3143 = vmul.f32 %v2817, %v2817
  %v3144 = vmul.f32 %v2822, %v2822
  %v3145 = vmul.f32 %v2827, %v2827
  %v3146 = vmul.f32 %v2832, %v2832
  %v3147 = vadd.f32 %v3143, %v3144
  %v3148 = vadd.f32 %v3147, %v3145
  %v3149 = vadd.f32 %v3148, %v3146
  %v3150 = vrot.slane %v3149, 4
  %v3151 = vadd.f32 %v3149, %v3150
  %v3152 = vrot.slane %v3151, 2
  %v3153 = vadd.f32 %v3151, %v3152
  %v3154 = vrot.slane %v3153, 1
  %v3155 = vadd.f32 %v3153, %v3154
  %v3156 = vmax.f32 %v3155, 1e-24
  %v3157 = vrsqrt.pop %v3156
  %v3158 = vmul.f32 %v2817, %v3157
  %v3159 = vmul.f32 %v2822, %v3157
  %v3160 = vmul.f32 %v2827, %v3157
  %v3161 = vmul.f32 %v2832, %v3157
  %v3162 = vsub.f32 %v3139, %v3158
  %v3163 = vsub.f32 %v3140, %v3159
  %v3164 = vsub.f32 %v3141, %v3160
  %v3165 = vsub.f32 %v3142, %v3161
  %v3166 = vmul.f32 %v3162, %v3162
  %v3167 = vmul.f32 %v3163, %v3163
  %v3168 = vmul.f32 %v3164, %v3164
  %v3169 = vmul.f32 %v3165, %v3165
  %v3170 = vmul.f32 %v1496, %v1496
  %v3171 = vmul.f32 %v1497, %v1497
  %v3172 = vmul.f32 %v1498, %v1498
  %v3173 = vmul.f32 %v1499, %v1499
  %v3174 = vmul.f32 %v1500, %v1500
  %v3175 = vmul.f32 %v1501, %v1501
  %v3176 = vmul.f32 %v1502, %v1502
  %v3177 = vmul.f32 %v1503, %v1503
  %v3178 = vsel %vm1917, %v3170, 0.0
  %v3179 = vsel %vm1917, %v3171, 0.0
  %v3180 = vadd.f32 %v3178, %v3179
  %v3181 = vsel %vm1917, %v3172, 0.0
  %v3182 = vadd.f32 %v3180, %v3181
  %v3183 = vsel %vm1917, %v3173, 0.0
  %v3184 = vadd.f32 %v3182, %v3183
  %v3185 = vsel %vm1917, %v3174, 0.0
  %v3186 = vadd.f32 %v3184, %v3185
  %v3187 = vsel %vm1917, %v3175, 0.0
  %v3188 = vadd.f32 %v3186, %v3187
  %v3189 = vsel %vm1917, %v3176, 0.0
  %v3190 = vadd.f32 %v3188, %v3189
  %v3191 = vsel %vm1917, %v3177, 0.0
  %v3192 = vadd.f32 %v3190, %v3191
  %v3193 = vrot.slane %v3192, 4
  %v3194 = vadd.f32 %v3192, %v3193
  %v3195 = vrot.slane %v3194, 2
  %v3196 = vadd.f32 %v3194, %v3195
  %v3197 = vrot.slane %v3196, 1
  %v3198 = vadd.f32 %v3196, %v3197
  %v3199 = vmax.f32 %v3198, 1e-24
  %v3200 = vrsqrt.pop %v3199
  %v3201 = vmul.f32 %v1496, %v3200
  %v3202 = vmul.f32 %v1497, %v3200
  %v3203 = vmul.f32 %v1498, %v3200
  %v3204 = vmul.f32 %v1499, %v3200
  %v3205 = vmul.f32 %v1500, %v3200
  %v3206 = vmul.f32 %v1501, %v3200
  %v3207 = vmul.f32 %v1502, %v3200
  %v3208 = vmul.f32 %v1503, %v3200
  %v3209 = vmul.f32 %v2966, %v2966
  %v3210 = vmul.f32 %v2971, %v2971
  %v3211 = vmul.f32 %v2976, %v2976
  %v3212 = vmul.f32 %v2981, %v2981
  %v3213 = vmul.f32 %v2986, %v2986
  %v3214 = vmul.f32 %v2991, %v2991
  %v3215 = vmul.f32 %v2996, %v2996
  %v3216 = vmul.f32 %v3001, %v3001
  %v3217 = vsel %vm1917, %v3209, 0.0
  %v3218 = vsel %vm1917, %v3210, 0.0
  %v3219 = vadd.f32 %v3217, %v3218
  %v3220 = vsel %vm1917, %v3211, 0.0
  %v3221 = vadd.f32 %v3219, %v3220
  %v3222 = vsel %vm1917, %v3212, 0.0
  %v3223 = vadd.f32 %v3221, %v3222
  %v3224 = vsel %vm1917, %v3213, 0.0
  %v3225 = vadd.f32 %v3223, %v3224
  %v3226 = vsel %vm1917, %v3214, 0.0
  %v3227 = vadd.f32 %v3225, %v3226
  %v3228 = vsel %vm1917, %v3215, 0.0
  %v3229 = vadd.f32 %v3227, %v3228
  %v3230 = vsel %vm1917, %v3216, 0.0
  %v3231 = vadd.f32 %v3229, %v3230
  %v3232 = vrot.slane %v3231, 4
  %v3233 = vadd.f32 %v3231, %v3232
  %v3234 = vrot.slane %v3233, 2
  %v3235 = vadd.f32 %v3233, %v3234
  %v3236 = vrot.slane %v3235, 1
  %v3237 = vadd.f32 %v3235, %v3236
  %v3238 = vmax.f32 %v3237, 1e-24
  %v3239 = vrsqrt.pop %v3238
  %v3240 = vmul.f32 %v2966, %v3239
  %v3241 = vmul.f32 %v2971, %v3239
  %v3242 = vmul.f32 %v2976, %v3239
  %v3243 = vmul.f32 %v2981, %v3239
  %v3244 = vmul.f32 %v2986, %v3239
  %v3245 = vmul.f32 %v2991, %v3239
  %v3246 = vmul.f32 %v2996, %v3239
  %v3247 = vmul.f32 %v3001, %v3239
  %v3248 = vsub.f32 %v3201, %v3240
  %v3249 = vsub.f32 %v3202, %v3241
  %v3250 = vsub.f32 %v3203, %v3242
  %v3251 = vsub.f32 %v3204, %v3243
  %v3252 = vsub.f32 %v3205, %v3244
  %v3253 = vsub.f32 %v3206, %v3245
  %v3254 = vsub.f32 %v3207, %v3246
  %v3255 = vsub.f32 %v3208, %v3247
  %v3256 = vmul.f32 %v3248, %v3248
  %v3257 = vmul.f32 %v3249, %v3249
  %v3258 = vmul.f32 %v3250, %v3250
  %v3259 = vmul.f32 %v3251, %v3251
  %v3260 = vmul.f32 %v3252, %v3252
  %v3261 = vmul.f32 %v3253, %v3253
  %v3262 = vmul.f32 %v3254, %v3254
  %v3263 = vmul.f32 %v3255, %v3255
  %vm3264 = vcmask 64512
  %v3266 = vsel %vm3264, %v264, 0
  %3268 = vmatprep.subr.mxu0 %v995
  %3269 = vmatpush1.msra.mxu0 %v994
  %3270 = vmatprep.subr.mxu0 0.0
  %3271 = vmatpush1.msra.mxu0 0.0
  %3272 = vmatprep.subr.mxu0 0.0
  %3273 = vmatpush1.msra.mxu0 0.0
  %3274 = vmatprep.subr.mxu0 0.0
  %3275 = vmatpush1.msra.mxu0 0.0
  %3276 = vmatprep.subr.mxu0 0.0
  %3277 = vmatpush1.msra.mxu0 0.0
  %3278 = vmatprep.subr.mxu0 0.0
  %3279 = vmatpush1.msra.mxu0 0.0
  %3280 = vmatprep.subr.mxu0 0.0
  %3281 = vmatpush1.msra.mxu0 0.0
  %3282 = vmatprep.subr.mxu0 0.0
  %3283 = vmatpush1.msra.mxu0 0.0
  %3284 = vmatprep.subr.mxu0 0.0
  %3285 = vmatpush1.msra.mxu0 0.0
  %3286 = vmatprep.subr.mxu0 0.0
  %3287 = vmatpush1.msra.mxu0 0.0
  %3288 = vmatprep.subr.mxu0 0.0
  %3289 = vmatpush1.msra.mxu0 0.0
  %3290 = vmatprep.subr.mxu0 0.0
  %3291 = vmatpush1.msra.mxu0 0.0
  %3292 = vmatprep.subr.mxu0 0.0
  %3293 = vmatpush1.msra.mxu0 0.0
  %3294 = vmatprep.subr.mxu0 0.0
  %3295 = vmatpush1.msra.mxu0 0.0
  %3296 = vmatprep.subr.mxu0 0.0
  %3297 = vmatpush1.msra.mxu0 0.0
  %3298 = vmatprep.subr.mxu0 0.0
  %3299 = vmatpush1.msra.mxu0 0.0
  %3300 = vmatprep.subr.mxu0 0.0
  %3301 = vmatpush1.msra.mxu0 0.0
  %3302 = vmatprep.subr.mxu0 0.0
  %3303 = vmatpush1.msra.mxu0 0.0
  %3304 = vmatprep.subr.mxu0 0.0
  %3305 = vmatpush1.msra.mxu0 0.0
  %3306 = vmatprep.subr.mxu0 0.0
  %3307 = vmatpush1.msra.mxu0 0.0
  %3308 = vmatprep.subr.mxu0 0.0
  %3309 = vmatpush1.msra.mxu0 0.0
  %3310 = vmatprep.subr.mxu0 0.0
  %3311 = vmatpush1.msra.mxu0 0.0
  %3312 = vmatprep.subr.mxu0 0.0
  %3313 = vmatpush1.msra.mxu0 0.0
  %3314 = vmatprep.subr.mxu0 0.0
  %3315 = vmatpush1.msra.mxu0 0.0
  %3316 = vmatprep.subr.mxu0 0.0
  %3317 = vmatpush1.msra.mxu0 0.0
  %3318 = vmatprep.subr.mxu0 0.0
  %3319 = vmatpush1.msra.mxu0 0.0
  %3320 = vmatprep.subr.mxu0 0.0
  %3321 = vmatpush1.msra.mxu0 0.0
  %3322 = vmatprep.subr.mxu0 0.0
  %3323 = vmatpush1.msra.mxu0 0.0
  %3324 = vmatprep.subr.mxu0 0.0
  %3325 = vmatpush1.msra.mxu0 0.0
  %3326 = vmatprep.subr.mxu0 0.0
  %3327 = vmatpush1.msra.mxu0 0.0
  %3328 = vmatprep.subr.mxu0 0.0
  %3329 = vmatpush1.msra.mxu0 0.0
  %3330 = vmatprep.subr.mxu0 0.0
  %3331 = vmatpush1.msra.mxu0 0.0
  %3332 = vmatprep.mubr.f32.mxu0 0.0
  %3333 = vmatmul.mubr.f32.gmra.mrb[0].mxu0 %v3266
  %v3334 = vpop.f32.mrb[0].mxu0
  %v3335 = vadd.f32 0.0, %v3334
  %v3336 = vpop.f32.mrb[0].mxu0
  %v3337 = vadd.f32 0.0, %v3336
  %3338 = vdwg.mxu0
  %3339 = vmatprep.subr.mxu0 %v997
  %3340 = vmatpush1.msra.mxu0 %v996
  %3341 = vmatprep.subr.mxu0 0.0
  %3342 = vmatpush1.msra.mxu0 0.0
  %3343 = vmatprep.subr.mxu0 0.0
  %3344 = vmatpush1.msra.mxu0 0.0
  %3345 = vmatprep.subr.mxu0 0.0
  %3346 = vmatpush1.msra.mxu0 0.0
  %3347 = vmatprep.subr.mxu0 0.0
  %3348 = vmatpush1.msra.mxu0 0.0
  %3349 = vmatprep.subr.mxu0 0.0
  %3350 = vmatpush1.msra.mxu0 0.0
  %3351 = vmatprep.subr.mxu0 0.0
  %3352 = vmatpush1.msra.mxu0 0.0
  %3353 = vmatprep.subr.mxu0 0.0
  %3354 = vmatpush1.msra.mxu0 0.0
  %3355 = vmatprep.subr.mxu0 0.0
  %3356 = vmatpush1.msra.mxu0 0.0
  %3357 = vmatprep.subr.mxu0 0.0
  %3358 = vmatpush1.msra.mxu0 0.0
  %3359 = vmatprep.subr.mxu0 0.0
  %3360 = vmatpush1.msra.mxu0 0.0
  %3361 = vmatprep.subr.mxu0 0.0
  %3362 = vmatpush1.msra.mxu0 0.0
  %3363 = vmatprep.subr.mxu0 0.0
  %3364 = vmatpush1.msra.mxu0 0.0
  %3365 = vmatprep.subr.mxu0 0.0
  %3366 = vmatpush1.msra.mxu0 0.0
  %3367 = vmatprep.subr.mxu0 0.0
  %3368 = vmatpush1.msra.mxu0 0.0
  %3369 = vmatprep.subr.mxu0 0.0
  %3370 = vmatpush1.msra.mxu0 0.0
  %3371 = vmatprep.subr.mxu0 0.0
  %3372 = vmatpush1.msra.mxu0 0.0
  %3373 = vmatprep.subr.mxu0 0.0
  %3374 = vmatpush1.msra.mxu0 0.0
  %3375 = vmatprep.subr.mxu0 0.0
  %3376 = vmatpush1.msra.mxu0 0.0
  %3377 = vmatprep.subr.mxu0 0.0
  %3378 = vmatpush1.msra.mxu0 0.0
  %3379 = vmatprep.subr.mxu0 0.0
  %3380 = vmatpush1.msra.mxu0 0.0
  %3381 = vmatprep.subr.mxu0 0.0
  %3382 = vmatpush1.msra.mxu0 0.0
  %3383 = vmatprep.subr.mxu0 0.0
  %3384 = vmatpush1.msra.mxu0 0.0
  %3385 = vmatprep.subr.mxu0 0.0
  %3386 = vmatpush1.msra.mxu0 0.0
  %3387 = vmatprep.subr.mxu0 0.0
  %3388 = vmatpush1.msra.mxu0 0.0
  %3389 = vmatprep.subr.mxu0 0.0
  %3390 = vmatpush1.msra.mxu0 0.0
  %3391 = vmatprep.subr.mxu0 0.0
  %3392 = vmatpush1.msra.mxu0 0.0
  %3393 = vmatprep.subr.mxu0 0.0
  %3394 = vmatpush1.msra.mxu0 0.0
  %3395 = vmatprep.subr.mxu0 0.0
  %3396 = vmatpush1.msra.mxu0 0.0
  %3397 = vmatprep.subr.mxu0 0.0
  %3398 = vmatpush1.msra.mxu0 0.0
  %3399 = vmatprep.subr.mxu0 0.0
  %3400 = vmatpush1.msra.mxu0 0.0
  %3401 = vmatprep.subr.mxu0 0.0
  %3402 = vmatpush1.msra.mxu0 0.0
  %3403 = vmatprep.mubr.f32.mxu0 0.0
  %3404 = vmatmul.mubr.f32.gmra.mrb[0].mxu0 %v3266
  %v3405 = vpop.f32.mrb[0].mxu0
  %v3406 = vadd.f32 0.0, %v3405
  %v3407 = vpop.f32.mrb[0].mxu0
  %v3408 = vadd.f32 0.0, %v3407
  %3409 = vdwg.mxu0
  %3410 = vmatprep.subr.mxu0 %v999
  %3411 = vmatpush1.msra.mxu0 %v998
  %3412 = vmatprep.subr.mxu0 0.0
  %3413 = vmatpush1.msra.mxu0 0.0
  %3414 = vmatprep.subr.mxu0 0.0
  %3415 = vmatpush1.msra.mxu0 0.0
  %3416 = vmatprep.subr.mxu0 0.0
  %3417 = vmatpush1.msra.mxu0 0.0
  %3418 = vmatprep.subr.mxu0 0.0
  %3419 = vmatpush1.msra.mxu0 0.0
  %3420 = vmatprep.subr.mxu0 0.0
  %3421 = vmatpush1.msra.mxu0 0.0
  %3422 = vmatprep.subr.mxu0 0.0
  %3423 = vmatpush1.msra.mxu0 0.0
  %3424 = vmatprep.subr.mxu0 0.0
  %3425 = vmatpush1.msra.mxu0 0.0
  %3426 = vmatprep.subr.mxu0 0.0
  %3427 = vmatpush1.msra.mxu0 0.0
  %3428 = vmatprep.subr.mxu0 0.0
  %3429 = vmatpush1.msra.mxu0 0.0
  %3430 = vmatprep.subr.mxu0 0.0
  %3431 = vmatpush1.msra.mxu0 0.0
  %3432 = vmatprep.subr.mxu0 0.0
  %3433 = vmatpush1.msra.mxu0 0.0
  %3434 = vmatprep.subr.mxu0 0.0
  %3435 = vmatpush1.msra.mxu0 0.0
  %3436 = vmatprep.subr.mxu0 0.0
  %3437 = vmatpush1.msra.mxu0 0.0
  %3438 = vmatprep.subr.mxu0 0.0
  %3439 = vmatpush1.msra.mxu0 0.0
  %3440 = vmatprep.subr.mxu0 0.0
  %3441 = vmatpush1.msra.mxu0 0.0
  %3442 = vmatprep.subr.mxu0 0.0
  %3443 = vmatpush1.msra.mxu0 0.0
  %3444 = vmatprep.subr.mxu0 0.0
  %3445 = vmatpush1.msra.mxu0 0.0
  %3446 = vmatprep.subr.mxu0 0.0
  %3447 = vmatpush1.msra.mxu0 0.0
  %3448 = vmatprep.subr.mxu0 0.0
  %3449 = vmatpush1.msra.mxu0 0.0
  %3450 = vmatprep.subr.mxu0 0.0
  %3451 = vmatpush1.msra.mxu0 0.0
  %3452 = vmatprep.subr.mxu0 0.0
  %3453 = vmatpush1.msra.mxu0 0.0
  %3454 = vmatprep.subr.mxu0 0.0
  %3455 = vmatpush1.msra.mxu0 0.0
  %3456 = vmatprep.subr.mxu0 0.0
  %3457 = vmatpush1.msra.mxu0 0.0
  %3458 = vmatprep.subr.mxu0 0.0
  %3459 = vmatpush1.msra.mxu0 0.0
  %3460 = vmatprep.subr.mxu0 0.0
  %3461 = vmatpush1.msra.mxu0 0.0
  %3462 = vmatprep.subr.mxu0 0.0
  %3463 = vmatpush1.msra.mxu0 0.0
  %3464 = vmatprep.subr.mxu0 0.0
  %3465 = vmatpush1.msra.mxu0 0.0
  %3466 = vmatprep.subr.mxu0 0.0
  %3467 = vmatpush1.msra.mxu0 0.0
  %3468 = vmatprep.subr.mxu0 0.0
  %3469 = vmatpush1.msra.mxu0 0.0
  %3470 = vmatprep.subr.mxu0 0.0
  %3471 = vmatpush1.msra.mxu0 0.0
  %3472 = vmatprep.subr.mxu0 0.0
  %3473 = vmatpush1.msra.mxu0 0.0
  %3474 = vmatprep.mubr.f32.mxu0 0.0
  %3475 = vmatmul.mubr.f32.gmra.mrb[0].mxu0 %v3266
  %v3476 = vpop.f32.mrb[0].mxu0
  %v3477 = vadd.f32 0.0, %v3476
  %v3478 = vpop.f32.mrb[0].mxu0
  %v3479 = vadd.f32 0.0, %v3478
  %3480 = vdwg.mxu0
  %3481 = vmatprep.subr.mxu0 %v1001
  %3482 = vmatpush1.msra.mxu0 %v1000
  %3483 = vmatprep.subr.mxu0 0.0
  %3484 = vmatpush1.msra.mxu0 0.0
  %3485 = vmatprep.subr.mxu0 0.0
  %3486 = vmatpush1.msra.mxu0 0.0
  %3487 = vmatprep.subr.mxu0 0.0
  %3488 = vmatpush1.msra.mxu0 0.0
  %3489 = vmatprep.subr.mxu0 0.0
  %3490 = vmatpush1.msra.mxu0 0.0
  %3491 = vmatprep.subr.mxu0 0.0
  %3492 = vmatpush1.msra.mxu0 0.0
  %3493 = vmatprep.subr.mxu0 0.0
  %3494 = vmatpush1.msra.mxu0 0.0
  %3495 = vmatprep.subr.mxu0 0.0
  %3496 = vmatpush1.msra.mxu0 0.0
  %3497 = vmatprep.subr.mxu0 0.0
  %3498 = vmatpush1.msra.mxu0 0.0
  %3499 = vmatprep.subr.mxu0 0.0
  %3500 = vmatpush1.msra.mxu0 0.0
  %3501 = vmatprep.subr.mxu0 0.0
  %3502 = vmatpush1.msra.mxu0 0.0
  %3503 = vmatprep.subr.mxu0 0.0
  %3504 = vmatpush1.msra.mxu0 0.0
  %3505 = vmatprep.subr.mxu0 0.0
  %3506 = vmatpush1.msra.mxu0 0.0
  %3507 = vmatprep.subr.mxu0 0.0
  %3508 = vmatpush1.msra.mxu0 0.0
  %3509 = vmatprep.subr.mxu0 0.0
  %3510 = vmatpush1.msra.mxu0 0.0
  %3511 = vmatprep.subr.mxu0 0.0
  %3512 = vmatpush1.msra.mxu0 0.0
  %3513 = vmatprep.subr.mxu0 0.0
  %3514 = vmatpush1.msra.mxu0 0.0
  %3515 = vmatprep.subr.mxu0 0.0
  %3516 = vmatpush1.msra.mxu0 0.0
  %3517 = vmatprep.subr.mxu0 0.0
  %3518 = vmatpush1.msra.mxu0 0.0
  %3519 = vmatprep.subr.mxu0 0.0
  %3520 = vmatpush1.msra.mxu0 0.0
  %3521 = vmatprep.subr.mxu0 0.0
  %3522 = vmatpush1.msra.mxu0 0.0
  %3523 = vmatprep.subr.mxu0 0.0
  %3524 = vmatpush1.msra.mxu0 0.0
  %3525 = vmatprep.subr.mxu0 0.0
  %3526 = vmatpush1.msra.mxu0 0.0
  %3527 = vmatprep.subr.mxu0 0.0
  %3528 = vmatpush1.msra.mxu0 0.0
  %3529 = vmatprep.subr.mxu0 0.0
  %3530 = vmatpush1.msra.mxu0 0.0
  %3531 = vmatprep.subr.mxu0 0.0
  %3532 = vmatpush1.msra.mxu0 0.0
  %3533 = vmatprep.subr.mxu0 0.0
  %3534 = vmatpush1.msra.mxu0 0.0
  %3535 = vmatprep.subr.mxu0 0.0
  %3536 = vmatpush1.msra.mxu0 0.0
  %3537 = vmatprep.subr.mxu0 0.0
  %3538 = vmatpush1.msra.mxu0 0.0
  %3539 = vmatprep.subr.mxu0 0.0
  %3540 = vmatpush1.msra.mxu0 0.0
  %3541 = vmatprep.subr.mxu0 0.0
  %3542 = vmatpush1.msra.mxu0 0.0
  %3543 = vmatprep.subr.mxu0 0.0
  %3544 = vmatpush1.msra.mxu0 0.0
  %3545 = vmatprep.mubr.f32.mxu0 0.0
  %3546 = vmatmul.mubr.f32.gmra.mrb[0].mxu0 %v3266
  %v3547 = vpop.f32.mrb[0].mxu0
  %v3548 = vadd.f32 0.0, %v3547
  %v3549 = vpop.f32.mrb[0].mxu0
  %v3550 = vadd.f32 0.0, %v3549
  %3551 = vdwg.mxu0
  %3552 = vmatprep.subr.mxu0 %v1003
  %3553 = vmatpush1.msra.mxu0 %v1002
  %3554 = vmatprep.subr.mxu0 0.0
  %3555 = vmatpush1.msra.mxu0 0.0
  %3556 = vmatprep.subr.mxu0 0.0
  %3557 = vmatpush1.msra.mxu0 0.0
  %3558 = vmatprep.subr.mxu0 0.0
  %3559 = vmatpush1.msra.mxu0 0.0
  %3560 = vmatprep.subr.mxu0 0.0
  %3561 = vmatpush1.msra.mxu0 0.0
  %3562 = vmatprep.subr.mxu0 0.0
  %3563 = vmatpush1.msra.mxu0 0.0
  %3564 = vmatprep.subr.mxu0 0.0
  %3565 = vmatpush1.msra.mxu0 0.0
  %3566 = vmatprep.subr.mxu0 0.0
  %3567 = vmatpush1.msra.mxu0 0.0
  %3568 = vmatprep.subr.mxu0 0.0
  %3569 = vmatpush1.msra.mxu0 0.0
  %3570 = vmatprep.subr.mxu0 0.0
  %3571 = vmatpush1.msra.mxu0 0.0
  %3572 = vmatprep.subr.mxu0 0.0
  %3573 = vmatpush1.msra.mxu0 0.0
  %3574 = vmatprep.subr.mxu0 0.0
  %3575 = vmatpush1.msra.mxu0 0.0
  %3576 = vmatprep.subr.mxu0 0.0
  %3577 = vmatpush1.msra.mxu0 0.0
  %3578 = vmatprep.subr.mxu0 0.0
  %3579 = vmatpush1.msra.mxu0 0.0
  %3580 = vmatprep.subr.mxu0 0.0
  %3581 = vmatpush1.msra.mxu0 0.0
  %3582 = vmatprep.subr.mxu0 0.0
  %3583 = vmatpush1.msra.mxu0 0.0
  %3584 = vmatprep.subr.mxu0 0.0
  %3585 = vmatpush1.msra.mxu0 0.0
  %3586 = vmatprep.subr.mxu0 0.0
  %3587 = vmatpush1.msra.mxu0 0.0
  %3588 = vmatprep.subr.mxu0 0.0
  %3589 = vmatpush1.msra.mxu0 0.0
  %3590 = vmatprep.subr.mxu0 0.0
  %3591 = vmatpush1.msra.mxu0 0.0
  %3592 = vmatprep.subr.mxu0 0.0
  %3593 = vmatpush1.msra.mxu0 0.0
  %3594 = vmatprep.subr.mxu0 0.0
  %3595 = vmatpush1.msra.mxu0 0.0
  %3596 = vmatprep.subr.mxu0 0.0
  %3597 = vmatpush1.msra.mxu0 0.0
  %3598 = vmatprep.subr.mxu0 0.0
  %3599 = vmatpush1.msra.mxu0 0.0
  %3600 = vmatprep.subr.mxu0 0.0
  %3601 = vmatpush1.msra.mxu0 0.0
  %3602 = vmatprep.subr.mxu0 0.0
  %3603 = vmatpush1.msra.mxu0 0.0
  %3604 = vmatprep.subr.mxu0 0.0
  %3605 = vmatpush1.msra.mxu0 0.0
  %3606 = vmatprep.subr.mxu0 0.0
  %3607 = vmatpush1.msra.mxu0 0.0
  %3608 = vmatprep.subr.mxu0 0.0
  %3609 = vmatpush1.msra.mxu0 0.0
  %3610 = vmatprep.subr.mxu0 0.0
  %3611 = vmatpush1.msra.mxu0 0.0
  %3612 = vmatprep.subr.mxu0 0.0
  %3613 = vmatpush1.msra.mxu0 0.0
  %3614 = vmatprep.subr.mxu0 0.0
  %3615 = vmatpush1.msra.mxu0 0.0
  %3616 = vmatprep.mubr.f32.mxu0 0.0
  %3617 = vmatmul.mubr.f32.gmra.mrb[0].mxu0 %v3266
  %v3618 = vpop.f32.mrb[0].mxu0
  %v3619 = vadd.f32 0.0, %v3618
  %v3620 = vpop.f32.mrb[0].mxu0
  %v3621 = vadd.f32 0.0, %v3620
  %3622 = vdwg.mxu0
  %3623 = vmatprep.subr.mxu0 %v1005
  %3624 = vmatpush1.msra.mxu0 %v1004
  %3625 = vmatprep.subr.mxu0 0.0
  %3626 = vmatpush1.msra.mxu0 0.0
  %3627 = vmatprep.subr.mxu0 0.0
  %3628 = vmatpush1.msra.mxu0 0.0
  %3629 = vmatprep.subr.mxu0 0.0
  %3630 = vmatpush1.msra.mxu0 0.0
  %3631 = vmatprep.subr.mxu0 0.0
  %3632 = vmatpush1.msra.mxu0 0.0
  %3633 = vmatprep.subr.mxu0 0.0
  %3634 = vmatpush1.msra.mxu0 0.0
  %3635 = vmatprep.subr.mxu0 0.0
  %3636 = vmatpush1.msra.mxu0 0.0
  %3637 = vmatprep.subr.mxu0 0.0
  %3638 = vmatpush1.msra.mxu0 0.0
  %3639 = vmatprep.subr.mxu0 0.0
  %3640 = vmatpush1.msra.mxu0 0.0
  %3641 = vmatprep.subr.mxu0 0.0
  %3642 = vmatpush1.msra.mxu0 0.0
  %3643 = vmatprep.subr.mxu0 0.0
  %3644 = vmatpush1.msra.mxu0 0.0
  %3645 = vmatprep.subr.mxu0 0.0
  %3646 = vmatpush1.msra.mxu0 0.0
  %3647 = vmatprep.subr.mxu0 0.0
  %3648 = vmatpush1.msra.mxu0 0.0
  %3649 = vmatprep.subr.mxu0 0.0
  %3650 = vmatpush1.msra.mxu0 0.0
  %3651 = vmatprep.subr.mxu0 0.0
  %3652 = vmatpush1.msra.mxu0 0.0
  %3653 = vmatprep.subr.mxu0 0.0
  %3654 = vmatpush1.msra.mxu0 0.0
  %3655 = vmatprep.subr.mxu0 0.0
  %3656 = vmatpush1.msra.mxu0 0.0
  %3657 = vmatprep.subr.mxu0 0.0
  %3658 = vmatpush1.msra.mxu0 0.0
  %3659 = vmatprep.subr.mxu0 0.0
  %3660 = vmatpush1.msra.mxu0 0.0
  %3661 = vmatprep.subr.mxu0 0.0
  %3662 = vmatpush1.msra.mxu0 0.0
  %3663 = vmatprep.subr.mxu0 0.0
  %3664 = vmatpush1.msra.mxu0 0.0
  %3665 = vmatprep.subr.mxu0 0.0
  %3666 = vmatpush1.msra.mxu0 0.0
  %3667 = vmatprep.subr.mxu0 0.0
  %3668 = vmatpush1.msra.mxu0 0.0
  %3669 = vmatprep.subr.mxu0 0.0
  %3670 = vmatpush1.msra.mxu0 0.0
  %3671 = vmatprep.subr.mxu0 0.0
  %3672 = vmatpush1.msra.mxu0 0.0
  %3673 = vmatprep.subr.mxu0 0.0
  %3674 = vmatpush1.msra.mxu0 0.0
  %3675 = vmatprep.subr.mxu0 0.0
  %3676 = vmatpush1.msra.mxu0 0.0
  %3677 = vmatprep.subr.mxu0 0.0
  %3678 = vmatpush1.msra.mxu0 0.0
  %3679 = vmatprep.subr.mxu0 0.0
  %3680 = vmatpush1.msra.mxu0 0.0
  %3681 = vmatprep.subr.mxu0 0.0
  %3682 = vmatpush1.msra.mxu0 0.0
  %3683 = vmatprep.subr.mxu0 0.0
  %3684 = vmatpush1.msra.mxu0 0.0
  %3685 = vmatprep.subr.mxu0 0.0
  %3686 = vmatpush1.msra.mxu0 0.0
  %3687 = vmatprep.mubr.f32.mxu0 0.0
  %3688 = vmatmul.mubr.f32.gmra.mrb[0].mxu0 %v3266
  %v3689 = vpop.f32.mrb[0].mxu0
  %v3690 = vadd.f32 0.0, %v3689
  %v3691 = vpop.f32.mrb[0].mxu0
  %v3692 = vadd.f32 0.0, %v3691
  %3693 = vdwg.mxu0
  %3694 = vmatprep.subr.mxu0 %v1007
  %3695 = vmatpush1.msra.mxu0 %v1006
  %3696 = vmatprep.subr.mxu0 0.0
  %3697 = vmatpush1.msra.mxu0 0.0
  %3698 = vmatprep.subr.mxu0 0.0
  %3699 = vmatpush1.msra.mxu0 0.0
  %3700 = vmatprep.subr.mxu0 0.0
  %3701 = vmatpush1.msra.mxu0 0.0
  %3702 = vmatprep.subr.mxu0 0.0
  %3703 = vmatpush1.msra.mxu0 0.0
  %3704 = vmatprep.subr.mxu0 0.0
  %3705 = vmatpush1.msra.mxu0 0.0
  %3706 = vmatprep.subr.mxu0 0.0
  %3707 = vmatpush1.msra.mxu0 0.0
  %3708 = vmatprep.subr.mxu0 0.0
  %3709 = vmatpush1.msra.mxu0 0.0
  %3710 = vmatprep.subr.mxu0 0.0
  %3711 = vmatpush1.msra.mxu0 0.0
  %3712 = vmatprep.subr.mxu0 0.0
  %3713 = vmatpush1.msra.mxu0 0.0
  %3714 = vmatprep.subr.mxu0 0.0
  %3715 = vmatpush1.msra.mxu0 0.0
  %3716 = vmatprep.subr.mxu0 0.0
  %3717 = vmatpush1.msra.mxu0 0.0
  %3718 = vmatprep.subr.mxu0 0.0
  %3719 = vmatpush1.msra.mxu0 0.0
  %3720 = vmatprep.subr.mxu0 0.0
  %3721 = vmatpush1.msra.mxu0 0.0
  %3722 = vmatprep.subr.mxu0 0.0
  %3723 = vmatpush1.msra.mxu0 0.0
  %3724 = vmatprep.subr.mxu0 0.0
  %3725 = vmatpush1.msra.mxu0 0.0
  %3726 = vmatprep.subr.mxu0 0.0
  %3727 = vmatpush1.msra.mxu0 0.0
  %3728 = vmatprep.subr.mxu0 0.0
  %3729 = vmatpush1.msra.mxu0 0.0
  %3730 = vmatprep.subr.mxu0 0.0
  %3731 = vmatpush1.msra.mxu0 0.0
  %3732 = vmatprep.subr.mxu0 0.0
  %3733 = vmatpush1.msra.mxu0 0.0
  %3734 = vmatprep.subr.mxu0 0.0
  %3735 = vmatpush1.msra.mxu0 0.0
  %3736 = vmatprep.subr.mxu0 0.0
  %3737 = vmatpush1.msra.mxu0 0.0
  %3738 = vmatprep.subr.mxu0 0.0
  %3739 = vmatpush1.msra.mxu0 0.0
  %3740 = vmatprep.subr.mxu0 0.0
  %3741 = vmatpush1.msra.mxu0 0.0
  %3742 = vmatprep.subr.mxu0 0.0
  %3743 = vmatpush1.msra.mxu0 0.0
  %3744 = vmatprep.subr.mxu0 0.0
  %3745 = vmatpush1.msra.mxu0 0.0
  %3746 = vmatprep.subr.mxu0 0.0
  %3747 = vmatpush1.msra.mxu0 0.0
  %3748 = vmatprep.subr.mxu0 0.0
  %3749 = vmatpush1.msra.mxu0 0.0
  %3750 = vmatprep.subr.mxu0 0.0
  %3751 = vmatpush1.msra.mxu0 0.0
  %3752 = vmatprep.subr.mxu0 0.0
  %3753 = vmatpush1.msra.mxu0 0.0
  %3754 = vmatprep.subr.mxu0 0.0
  %3755 = vmatpush1.msra.mxu0 0.0
  %3756 = vmatprep.subr.mxu0 0.0
  %3757 = vmatpush1.msra.mxu0 0.0
  %3758 = vmatprep.mubr.f32.mxu0 0.0
  %3759 = vmatmul.mubr.f32.gmra.mrb[0].mxu0 %v3266
  %v3760 = vpop.f32.mrb[0].mxu0
  %v3761 = vadd.f32 0.0, %v3760
  %v3762 = vpop.f32.mrb[0].mxu0
  %v3763 = vadd.f32 0.0, %v3762
  %3764 = vdwg.mxu0
  %3765 = vmatprep.subr.mxu0 %v1009
  %3766 = vmatpush1.msra.mxu0 %v1008
  %3767 = vmatprep.subr.mxu0 0.0
  %3768 = vmatpush1.msra.mxu0 0.0
  %3769 = vmatprep.subr.mxu0 0.0
  %3770 = vmatpush1.msra.mxu0 0.0
  %3771 = vmatprep.subr.mxu0 0.0
  %3772 = vmatpush1.msra.mxu0 0.0
  %3773 = vmatprep.subr.mxu0 0.0
  %3774 = vmatpush1.msra.mxu0 0.0
  %3775 = vmatprep.subr.mxu0 0.0
  %3776 = vmatpush1.msra.mxu0 0.0
  %3777 = vmatprep.subr.mxu0 0.0
  %3778 = vmatpush1.msra.mxu0 0.0
  %3779 = vmatprep.subr.mxu0 0.0
  %3780 = vmatpush1.msra.mxu0 0.0
  %3781 = vmatprep.subr.mxu0 0.0
  %3782 = vmatpush1.msra.mxu0 0.0
  %3783 = vmatprep.subr.mxu0 0.0
  %3784 = vmatpush1.msra.mxu0 0.0
  %3785 = vmatprep.subr.mxu0 0.0
  %3786 = vmatpush1.msra.mxu0 0.0
  %3787 = vmatprep.subr.mxu0 0.0
  %3788 = vmatpush1.msra.mxu0 0.0
  %3789 = vmatprep.subr.mxu0 0.0
  %3790 = vmatpush1.msra.mxu0 0.0
  %3791 = vmatprep.subr.mxu0 0.0
  %3792 = vmatpush1.msra.mxu0 0.0
  %3793 = vmatprep.subr.mxu0 0.0
  %3794 = vmatpush1.msra.mxu0 0.0
  %3795 = vmatprep.subr.mxu0 0.0
  %3796 = vmatpush1.msra.mxu0 0.0
  %3797 = vmatprep.subr.mxu0 0.0
  %3798 = vmatpush1.msra.mxu0 0.0
  %3799 = vmatprep.subr.mxu0 0.0
  %3800 = vmatpush1.msra.mxu0 0.0
  %3801 = vmatprep.subr.mxu0 0.0
  %3802 = vmatpush1.msra.mxu0 0.0
  %3803 = vmatprep.subr.mxu0 0.0
  %3804 = vmatpush1.msra.mxu0 0.0
  %3805 = vmatprep.subr.mxu0 0.0
  %3806 = vmatpush1.msra.mxu0 0.0
  %3807 = vmatprep.subr.mxu0 0.0
  %3808 = vmatpush1.msra.mxu0 0.0
  %3809 = vmatprep.subr.mxu0 0.0
  %3810 = vmatpush1.msra.mxu0 0.0
  %3811 = vmatprep.subr.mxu0 0.0
  %3812 = vmatpush1.msra.mxu0 0.0
  %3813 = vmatprep.subr.mxu0 0.0
  %3814 = vmatpush1.msra.mxu0 0.0
  %3815 = vmatprep.subr.mxu0 0.0
  %3816 = vmatpush1.msra.mxu0 0.0
  %3817 = vmatprep.subr.mxu0 0.0
  %3818 = vmatpush1.msra.mxu0 0.0
  %3819 = vmatprep.subr.mxu0 0.0
  %3820 = vmatpush1.msra.mxu0 0.0
  %3821 = vmatprep.subr.mxu0 0.0
  %3822 = vmatpush1.msra.mxu0 0.0
  %3823 = vmatprep.subr.mxu0 0.0
  %3824 = vmatpush1.msra.mxu0 0.0
  %3825 = vmatprep.subr.mxu0 0.0
  %3826 = vmatpush1.msra.mxu0 0.0
  %3827 = vmatprep.subr.mxu0 0.0
  %3828 = vmatpush1.msra.mxu0 0.0
  %3829 = vmatprep.mubr.f32.mxu0 0.0
  %3830 = vmatmul.mubr.f32.gmra.mrb[0].mxu0 %v3266
  %v3831 = vpop.f32.mrb[0].mxu0
  %v3832 = vadd.f32 0.0, %v3831
  %v3833 = vpop.f32.mrb[0].mxu0
  %v3834 = vadd.f32 0.0, %v3833
  %3835 = vdwg.mxu0
  %v3837 = vsel %vm2047, %v265, 0
  %3839 = vmatprep.subr.mxu0 %v3117
  %3840 = vmatpush1.msra.mxu0 %v3116
  %3841 = vmatprep.subr.mxu0 %v3121
  %3842 = vmatpush1.msra.mxu0 %v3120
  %3843 = vmatprep.subr.mxu0 0.0
  %3844 = vmatpush1.msra.mxu0 0.0
  %3845 = vmatprep.subr.mxu0 0.0
  %3846 = vmatpush1.msra.mxu0 0.0
  %3847 = vmatprep.subr.mxu0 0.0
  %3848 = vmatpush1.msra.mxu0 0.0
  %3849 = vmatprep.subr.mxu0 0.0
  %3850 = vmatpush1.msra.mxu0 0.0
  %3851 = vmatprep.subr.mxu0 0.0
  %3852 = vmatpush1.msra.mxu0 0.0
  %3853 = vmatprep.subr.mxu0 0.0
  %3854 = vmatpush1.msra.mxu0 0.0
  %3855 = vmatprep.subr.mxu0 0.0
  %3856 = vmatpush1.msra.mxu0 0.0
  %3857 = vmatprep.subr.mxu0 0.0
  %3858 = vmatpush1.msra.mxu0 0.0
  %3859 = vmatprep.subr.mxu0 0.0
  %3860 = vmatpush1.msra.mxu0 0.0
  %3861 = vmatprep.subr.mxu0 0.0
  %3862 = vmatpush1.msra.mxu0 0.0
  %3863 = vmatprep.subr.mxu0 0.0
  %3864 = vmatpush1.msra.mxu0 0.0
  %3865 = vmatprep.subr.mxu0 0.0
  %3866 = vmatpush1.msra.mxu0 0.0
  %3867 = vmatprep.subr.mxu0 0.0
  %3868 = vmatpush1.msra.mxu0 0.0
  %3869 = vmatprep.subr.mxu0 0.0
  %3870 = vmatpush1.msra.mxu0 0.0
  %3871 = vmatprep.subr.mxu0 0.0
  %3872 = vmatpush1.msra.mxu0 0.0
  %3873 = vmatprep.subr.mxu0 0.0
  %3874 = vmatpush1.msra.mxu0 0.0
  %3875 = vmatprep.subr.mxu0 0.0
  %3876 = vmatpush1.msra.mxu0 0.0
  %3877 = vmatprep.subr.mxu0 0.0
  %3878 = vmatpush1.msra.mxu0 0.0
  %3879 = vmatprep.subr.mxu0 0.0
  %3880 = vmatpush1.msra.mxu0 0.0
  %3881 = vmatprep.subr.mxu0 0.0
  %3882 = vmatpush1.msra.mxu0 0.0
  %3883 = vmatprep.subr.mxu0 0.0
  %3884 = vmatpush1.msra.mxu0 0.0
  %3885 = vmatprep.subr.mxu0 0.0
  %3886 = vmatpush1.msra.mxu0 0.0
  %3887 = vmatprep.subr.mxu0 0.0
  %3888 = vmatpush1.msra.mxu0 0.0
  %3889 = vmatprep.subr.mxu0 0.0
  %3890 = vmatpush1.msra.mxu0 0.0
  %3891 = vmatprep.subr.mxu0 0.0
  %3892 = vmatpush1.msra.mxu0 0.0
  %3893 = vmatprep.subr.mxu0 0.0
  %3894 = vmatpush1.msra.mxu0 0.0
  %3895 = vmatprep.subr.mxu0 0.0
  %3896 = vmatpush1.msra.mxu0 0.0
  %3897 = vmatprep.subr.mxu0 0.0
  %3898 = vmatpush1.msra.mxu0 0.0
  %3899 = vmatprep.subr.mxu0 0.0
  %3900 = vmatpush1.msra.mxu0 0.0
  %3901 = vmatprep.subr.mxu0 0.0
  %3902 = vmatpush1.msra.mxu0 0.0
  %3903 = vmatprep.mubr.f32.mxu0 0.0
  %3904 = vmatmul.mubr.f32.gmra.mrb[0].mxu0 %v3837
  %v3905 = vpop.f32.mrb[0].mxu0
  %v3906 = vadd.f32 0.0, %v3905
  %v3907 = vpop.f32.mrb[0].mxu0
  %v3908 = vadd.f32 0.0, %v3907
  %3909 = vdwg.mxu0
  %3910 = vmatprep.subr.mxu0 %v3119
  %3911 = vmatpush1.msra.mxu0 %v3118
  %3912 = vmatprep.subr.mxu0 %v3123
  %3913 = vmatpush1.msra.mxu0 %v3122
  %3914 = vmatprep.subr.mxu0 0.0
  %3915 = vmatpush1.msra.mxu0 0.0
  %3916 = vmatprep.subr.mxu0 0.0
  %3917 = vmatpush1.msra.mxu0 0.0
  %3918 = vmatprep.subr.mxu0 0.0
  %3919 = vmatpush1.msra.mxu0 0.0
  %3920 = vmatprep.subr.mxu0 0.0
  %3921 = vmatpush1.msra.mxu0 0.0
  %3922 = vmatprep.subr.mxu0 0.0
  %3923 = vmatpush1.msra.mxu0 0.0
  %3924 = vmatprep.subr.mxu0 0.0
  %3925 = vmatpush1.msra.mxu0 0.0
  %3926 = vmatprep.subr.mxu0 0.0
  %3927 = vmatpush1.msra.mxu0 0.0
  %3928 = vmatprep.subr.mxu0 0.0
  %3929 = vmatpush1.msra.mxu0 0.0
  %3930 = vmatprep.subr.mxu0 0.0
  %3931 = vmatpush1.msra.mxu0 0.0
  %3932 = vmatprep.subr.mxu0 0.0
  %3933 = vmatpush1.msra.mxu0 0.0
  %3934 = vmatprep.subr.mxu0 0.0
  %3935 = vmatpush1.msra.mxu0 0.0
  %3936 = vmatprep.subr.mxu0 0.0
  %3937 = vmatpush1.msra.mxu0 0.0
  %3938 = vmatprep.subr.mxu0 0.0
  %3939 = vmatpush1.msra.mxu0 0.0
  %3940 = vmatprep.subr.mxu0 0.0
  %3941 = vmatpush1.msra.mxu0 0.0
  %3942 = vmatprep.subr.mxu0 0.0
  %3943 = vmatpush1.msra.mxu0 0.0
  %3944 = vmatprep.subr.mxu0 0.0
  %3945 = vmatpush1.msra.mxu0 0.0
  %3946 = vmatprep.subr.mxu0 0.0
  %3947 = vmatpush1.msra.mxu0 0.0
  %3948 = vmatprep.subr.mxu0 0.0
  %3949 = vmatpush1.msra.mxu0 0.0
  %3950 = vmatprep.subr.mxu0 0.0
  %3951 = vmatpush1.msra.mxu0 0.0
  %3952 = vmatprep.subr.mxu0 0.0
  %3953 = vmatpush1.msra.mxu0 0.0
  %3954 = vmatprep.subr.mxu0 0.0
  %3955 = vmatpush1.msra.mxu0 0.0
  %3956 = vmatprep.subr.mxu0 0.0
  %3957 = vmatpush1.msra.mxu0 0.0
  %3958 = vmatprep.subr.mxu0 0.0
  %3959 = vmatpush1.msra.mxu0 0.0
  %3960 = vmatprep.subr.mxu0 0.0
  %3961 = vmatpush1.msra.mxu0 0.0
  %3962 = vmatprep.subr.mxu0 0.0
  %3963 = vmatpush1.msra.mxu0 0.0
  %3964 = vmatprep.subr.mxu0 0.0
  %3965 = vmatpush1.msra.mxu0 0.0
  %3966 = vmatprep.subr.mxu0 0.0
  %3967 = vmatpush1.msra.mxu0 0.0
  %3968 = vmatprep.subr.mxu0 0.0
  %3969 = vmatpush1.msra.mxu0 0.0
  %3970 = vmatprep.subr.mxu0 0.0
  %3971 = vmatpush1.msra.mxu0 0.0
  %3972 = vmatprep.subr.mxu0 0.0
  %3973 = vmatpush1.msra.mxu0 0.0
  %3974 = vmatprep.mubr.f32.mxu0 0.0
  %3975 = vmatmul.mubr.f32.gmra.mrb[0].mxu0 %v3837
  %v3976 = vpop.f32.mrb[0].mxu0
  %v3977 = vadd.f32 0.0, %v3976
  %v3978 = vpop.f32.mrb[0].mxu0
  %v3979 = vadd.f32 0.0, %v3978
  %3980 = vdwg.mxu0
  %v3982 = vsel %vm1917, %v266, 0
  %3984 = vmatprep.subr.mxu0 0.0
  %3985 = vmatpush1.msra.mxu0 %v3166
  %3986 = vmatprep.subr.mxu0 0.0
  %3987 = vmatpush1.msra.mxu0 %v3167
  %3988 = vmatprep.subr.mxu0 0.0
  %3989 = vmatpush1.msra.mxu0 %v3168
  %3990 = vmatprep.subr.mxu0 0.0
  %3991 = vmatpush1.msra.mxu0 %v3169
  %3992 = vmatprep.subr.mxu0 0.0
  %3993 = vmatpush1.msra.mxu0 0.0
  %3994 = vmatprep.subr.mxu0 0.0
  %3995 = vmatpush1.msra.mxu0 0.0
  %3996 = vmatprep.subr.mxu0 0.0
  %3997 = vmatpush1.msra.mxu0 0.0
  %3998 = vmatprep.subr.mxu0 0.0
  %3999 = vmatpush1.msra.mxu0 0.0
  %4000 = vmatprep.subr.mxu0 0.0
  %4001 = vmatpush1.msra.mxu0 0.0
  %4002 = vmatprep.subr.mxu0 0.0
  %4003 = vmatpush1.msra.mxu0 0.0
  %4004 = vmatprep.subr.mxu0 0.0
  %4005 = vmatpush1.msra.mxu0 0.0
  %4006 = vmatprep.subr.mxu0 0.0
  %4007 = vmatpush1.msra.mxu0 0.0
  %4008 = vmatprep.subr.mxu0 0.0
  %4009 = vmatpush1.msra.mxu0 0.0
  %4010 = vmatprep.subr.mxu0 0.0
  %4011 = vmatpush1.msra.mxu0 0.0
  %4012 = vmatprep.subr.mxu0 0.0
  %4013 = vmatpush1.msra.mxu0 0.0
  %4014 = vmatprep.subr.mxu0 0.0
  %4015 = vmatpush1.msra.mxu0 0.0
  %4016 = vmatprep.subr.mxu0 0.0
  %4017 = vmatpush1.msra.mxu0 0.0
  %4018 = vmatprep.subr.mxu0 0.0
  %4019 = vmatpush1.msra.mxu0 0.0
  %4020 = vmatprep.subr.mxu0 0.0
  %4021 = vmatpush1.msra.mxu0 0.0
  %4022 = vmatprep.subr.mxu0 0.0
  %4023 = vmatpush1.msra.mxu0 0.0
  %4024 = vmatprep.subr.mxu0 0.0
  %4025 = vmatpush1.msra.mxu0 0.0
  %4026 = vmatprep.subr.mxu0 0.0
  %4027 = vmatpush1.msra.mxu0 0.0
  %4028 = vmatprep.subr.mxu0 0.0
  %4029 = vmatpush1.msra.mxu0 0.0
  %4030 = vmatprep.subr.mxu0 0.0
  %4031 = vmatpush1.msra.mxu0 0.0
  %4032 = vmatprep.subr.mxu0 0.0
  %4033 = vmatpush1.msra.mxu0 0.0
  %4034 = vmatprep.subr.mxu0 0.0
  %4035 = vmatpush1.msra.mxu0 0.0
  %4036 = vmatprep.subr.mxu0 0.0
  %4037 = vmatpush1.msra.mxu0 0.0
  %4038 = vmatprep.subr.mxu0 0.0
  %4039 = vmatpush1.msra.mxu0 0.0
  %4040 = vmatprep.subr.mxu0 0.0
  %4041 = vmatpush1.msra.mxu0 0.0
  %4042 = vmatprep.subr.mxu0 0.0
  %4043 = vmatpush1.msra.mxu0 0.0
  %4044 = vmatprep.subr.mxu0 0.0
  %4045 = vmatpush1.msra.mxu0 0.0
  %4046 = vmatprep.subr.mxu0 0.0
  %4047 = vmatpush1.msra.mxu0 0.0
  %4048 = vmatprep.mubr.f32.mxu0 0.0
  %4049 = vmatmul.mubr.f32.gmra.mrb[0].mxu0 %v3982
  %v4050 = vpop.f32.mrb[0].mxu0
  %v4051 = vadd.f32 0.0, %v4050
  %v4052 = vpop.f32.mrb[0].mxu0
  %4053 = vdwg.mxu0
  %v4055 = vsel %vm1544, %v267, 0
  %4057 = vmatprep.subr.mxu0 0.0
  %4058 = vmatpush1.msra.mxu0 %v3256
  %4059 = vmatprep.subr.mxu0 0.0
  %4060 = vmatpush1.msra.mxu0 %v3257
  %4061 = vmatprep.subr.mxu0 0.0
  %4062 = vmatpush1.msra.mxu0 %v3258
  %4063 = vmatprep.subr.mxu0 0.0
  %4064 = vmatpush1.msra.mxu0 %v3259
  %4065 = vmatprep.subr.mxu0 0.0
  %4066 = vmatpush1.msra.mxu0 %v3260
  %4067 = vmatprep.subr.mxu0 0.0
  %4068 = vmatpush1.msra.mxu0 %v3261
  %4069 = vmatprep.subr.mxu0 0.0
  %4070 = vmatpush1.msra.mxu0 %v3262
  %4071 = vmatprep.subr.mxu0 0.0
  %4072 = vmatpush1.msra.mxu0 %v3263
  %4073 = vmatprep.subr.mxu0 0.0
  %4074 = vmatpush1.msra.mxu0 0.0
  %4075 = vmatprep.subr.mxu0 0.0
  %4076 = vmatpush1.msra.mxu0 0.0
  %4077 = vmatprep.subr.mxu0 0.0
  %4078 = vmatpush1.msra.mxu0 0.0
  %4079 = vmatprep.subr.mxu0 0.0
  %4080 = vmatpush1.msra.mxu0 0.0
  %4081 = vmatprep.subr.mxu0 0.0
  %4082 = vmatpush1.msra.mxu0 0.0
  %4083 = vmatprep.subr.mxu0 0.0
  %4084 = vmatpush1.msra.mxu0 0.0
  %4085 = vmatprep.subr.mxu0 0.0
  %4086 = vmatpush1.msra.mxu0 0.0
  %4087 = vmatprep.subr.mxu0 0.0
  %4088 = vmatpush1.msra.mxu0 0.0
  %4089 = vmatprep.subr.mxu0 0.0
  %4090 = vmatpush1.msra.mxu0 0.0
  %4091 = vmatprep.subr.mxu0 0.0
  %4092 = vmatpush1.msra.mxu0 0.0
  %4093 = vmatprep.subr.mxu0 0.0
  %4094 = vmatpush1.msra.mxu0 0.0
  %4095 = vmatprep.subr.mxu0 0.0
  %4096 = vmatpush1.msra.mxu0 0.0
  %4097 = vmatprep.subr.mxu0 0.0
  %4098 = vmatpush1.msra.mxu0 0.0
  %4099 = vmatprep.subr.mxu0 0.0
  %4100 = vmatpush1.msra.mxu0 0.0
  %4101 = vmatprep.subr.mxu0 0.0
  %4102 = vmatpush1.msra.mxu0 0.0
  %4103 = vmatprep.subr.mxu0 0.0
  %4104 = vmatpush1.msra.mxu0 0.0
  %4105 = vmatprep.subr.mxu0 0.0
  %4106 = vmatpush1.msra.mxu0 0.0
  %4107 = vmatprep.subr.mxu0 0.0
  %4108 = vmatpush1.msra.mxu0 0.0
  %4109 = vmatprep.subr.mxu0 0.0
  %4110 = vmatpush1.msra.mxu0 0.0
  %4111 = vmatprep.subr.mxu0 0.0
  %4112 = vmatpush1.msra.mxu0 0.0
  %4113 = vmatprep.subr.mxu0 0.0
  %4114 = vmatpush1.msra.mxu0 0.0
  %4115 = vmatprep.subr.mxu0 0.0
  %4116 = vmatpush1.msra.mxu0 0.0
  %4117 = vmatprep.subr.mxu0 0.0
  %4118 = vmatpush1.msra.mxu0 0.0
  %4119 = vmatprep.subr.mxu0 0.0
  %4120 = vmatpush1.msra.mxu0 0.0
  %4121 = vmatprep.mubr.f32.mxu0 0.0
  %4122 = vmatmul.mubr.f32.gmra.mrb[0].mxu0 %v4055
  %v4123 = vpop.f32.mrb[0].mxu0
  %v4124 = vadd.f32 0.0, %v4123
  %v4125 = vpop.f32.mrb[0].mxu0
  %4126 = vdwg.mxu0
  %v4128 = vsel %vm1544, %v263, 0
  %4130 = vmatprep.subr.mxu0 0.0
  %4131 = vmatpush1.msra.mxu0 %v1674
  %4132 = vmatprep.subr.mxu0 0.0
  %4133 = vmatpush1.msra.mxu0 %v1675
  %4134 = vmatprep.subr.mxu0 0.0
  %4135 = vmatpush1.msra.mxu0 %v1676
  %4136 = vmatprep.subr.mxu0 0.0
  %4137 = vmatpush1.msra.mxu0 %v1677
  %4138 = vmatprep.subr.mxu0 0.0
  %4139 = vmatpush1.msra.mxu0 %v1678
  %4140 = vmatprep.subr.mxu0 0.0
  %4141 = vmatpush1.msra.mxu0 %v1679
  %4142 = vmatprep.subr.mxu0 0.0
  %4143 = vmatpush1.msra.mxu0 %v1680
  %4144 = vmatprep.subr.mxu0 0.0
  %4145 = vmatpush1.msra.mxu0 %v1681
  %4146 = vmatprep.subr.mxu0 0.0
  %4147 = vmatpush1.msra.mxu0 0.0
  %4148 = vmatprep.subr.mxu0 0.0
  %4149 = vmatpush1.msra.mxu0 0.0
  %4150 = vmatprep.subr.mxu0 0.0
  %4151 = vmatpush1.msra.mxu0 0.0
  %4152 = vmatprep.subr.mxu0 0.0
  %4153 = vmatpush1.msra.mxu0 0.0
  %4154 = vmatprep.subr.mxu0 0.0
  %4155 = vmatpush1.msra.mxu0 0.0
  %4156 = vmatprep.subr.mxu0 0.0
  %4157 = vmatpush1.msra.mxu0 0.0
  %4158 = vmatprep.subr.mxu0 0.0
  %4159 = vmatpush1.msra.mxu0 0.0
  %4160 = vmatprep.subr.mxu0 0.0
  %4161 = vmatpush1.msra.mxu0 0.0
  %4162 = vmatprep.subr.mxu0 0.0
  %4163 = vmatpush1.msra.mxu0 0.0
  %4164 = vmatprep.subr.mxu0 0.0
  %4165 = vmatpush1.msra.mxu0 0.0
  %4166 = vmatprep.subr.mxu0 0.0
  %4167 = vmatpush1.msra.mxu0 0.0
  %4168 = vmatprep.subr.mxu0 0.0
  %4169 = vmatpush1.msra.mxu0 0.0
  %4170 = vmatprep.subr.mxu0 0.0
  %4171 = vmatpush1.msra.mxu0 0.0
  %4172 = vmatprep.subr.mxu0 0.0
  %4173 = vmatpush1.msra.mxu0 0.0
  %4174 = vmatprep.subr.mxu0 0.0
  %4175 = vmatpush1.msra.mxu0 0.0
  %4176 = vmatprep.subr.mxu0 0.0
  %4177 = vmatpush1.msra.mxu0 0.0
  %4178 = vmatprep.subr.mxu0 0.0
  %4179 = vmatpush1.msra.mxu0 0.0
  %4180 = vmatprep.subr.mxu0 0.0
  %4181 = vmatpush1.msra.mxu0 0.0
  %4182 = vmatprep.subr.mxu0 0.0
  %4183 = vmatpush1.msra.mxu0 0.0
  %4184 = vmatprep.subr.mxu0 0.0
  %4185 = vmatpush1.msra.mxu0 0.0
  %4186 = vmatprep.subr.mxu0 0.0
  %4187 = vmatpush1.msra.mxu0 0.0
  %4188 = vmatprep.subr.mxu0 0.0
  %4189 = vmatpush1.msra.mxu0 0.0
  %4190 = vmatprep.subr.mxu0 0.0
  %4191 = vmatpush1.msra.mxu0 0.0
  %4192 = vmatprep.subr.mxu0 0.0
  %4193 = vmatpush1.msra.mxu0 0.0
  %4194 = vmatprep.mubr.f32.mxu0 0.0
  %4195 = vmatmul.mubr.f32.gmra.mrb[0].mxu0 %v4128
  %v4196 = vpop.f32.mrb[0].mxu0
  %v4197 = vadd.f32 %v4124, %v4196
  %v4198 = vpop.f32.mrb[0].mxu0
  %4199 = vdwg.mxu0
  %v4216 = vcombine.low %v3335, %v3337
  %v4217 = vcombine.low %v3406, %v3408
  %v4218 = vcombine.low %v3477, %v3479
  %v4219 = vcombine.low %v3548, %v3550
  %v4221 = vunpack.c.l.s4 1966171168
  %v4222 = vunpack.c.0.s8 %v4221
  %v4223 = vlaneseq
  %v4224 = vshrl.u32 %v4223, 7
  %v4225 = vsub.s32 %v4222, %v4224
  %v4226 = vrot.slane %v4216, %v4225
  %v4228 = vunpack.c.l.s4 1966171168
  %v4229 = vunpack.c.0.s8 %v4228
  %v4230 = vlaneseq
  %v4231 = vshrl.u32 %v4230, 7
  %v4232 = vsub.s32 %v4229, %v4231
  %v4233 = vrot.slane %v4217, %v4232
  %v4235 = vunpack.c.l.s4 1966171168
  %v4236 = vunpack.c.0.s8 %v4235
  %v4237 = vlaneseq
  %v4238 = vshrl.u32 %v4237, 7
  %v4239 = vsub.s32 %v4236, %v4238
  %v4240 = vrot.slane %v4218, %v4239
  %v4242 = vunpack.c.l.s4 1966171168
  %v4243 = vunpack.c.0.s8 %v4242
  %v4244 = vlaneseq
  %v4245 = vshrl.u32 %v4244, 7
  %v4246 = vsub.s32 %v4243, %v4245
  %v4247 = vrot.slane %v4219, %v4246
  %v4248 = vcombine.low %v4226, %v4233
  %v4249 = vcombine.low %v4240, %v4247
  %v4251 = vunpack.c.l.s4 1966171168
  %v4252 = vunpack.c.0.s8 %v4251
  %v4253 = vlaneseq
  %v4254 = vshrl.u32 %v4253, 7
  %v4255 = vsub.s32 %v4252, %v4254
  %v4256 = vrot.slane %v4248, %v4255
  %v4258 = vunpack.c.l.s4 1966171168
  %v4259 = vunpack.c.0.s8 %v4258
  %v4260 = vlaneseq
  %v4261 = vshrl.u32 %v4260, 7
  %v4262 = vsub.s32 %v4259, %v4261
  %v4263 = vrot.slane %v4249, %v4262
  %v4264 = vcombine.low %v4256, %v4263
  %v4265 = vcombine.low %v3619, %v3621
  %v4266 = vcombine.low %v3690, %v3692
  %v4267 = vcombine.low %v3761, %v3763
  %v4268 = vcombine.low %v3832, %v3834
  %v4270 = vunpack.c.l.s4 1966171168
  %v4271 = vunpack.c.0.s8 %v4270
  %v4272 = vlaneseq
  %v4273 = vshrl.u32 %v4272, 7
  %v4274 = vsub.s32 %v4271, %v4273
  %v4275 = vrot.slane %v4265, %v4274
  %v4277 = vunpack.c.l.s4 1966171168
  %v4278 = vunpack.c.0.s8 %v4277
  %v4279 = vlaneseq
  %v4280 = vshrl.u32 %v4279, 7
  %v4281 = vsub.s32 %v4278, %v4280
  %v4282 = vrot.slane %v4266, %v4281
  %v4284 = vunpack.c.l.s4 1966171168
  %v4285 = vunpack.c.0.s8 %v4284
  %v4286 = vlaneseq
  %v4287 = vshrl.u32 %v4286, 7
  %v4288 = vsub.s32 %v4285, %v4287
  %v4289 = vrot.slane %v4267, %v4288
  %v4291 = vunpack.c.l.s4 1966171168
  %v4292 = vunpack.c.0.s8 %v4291
  %v4293 = vlaneseq
  %v4294 = vshrl.u32 %v4293, 7
  %v4295 = vsub.s32 %v4292, %v4294
  %v4296 = vrot.slane %v4268, %v4295
  %v4297 = vcombine.low %v4275, %v4282
  %v4298 = vcombine.low %v4289, %v4296
  %v4300 = vunpack.c.l.s4 1966171168
  %v4301 = vunpack.c.0.s8 %v4300
  %v4302 = vlaneseq
  %v4303 = vshrl.u32 %v4302, 7
  %v4304 = vsub.s32 %v4301, %v4303
  %v4305 = vrot.slane %v4297, %v4304
  %v4307 = vunpack.c.l.s4 1966171168
  %v4308 = vunpack.c.0.s8 %v4307
  %v4309 = vlaneseq
  %v4310 = vshrl.u32 %v4309, 7
  %v4311 = vsub.s32 %v4308, %v4310
  %v4312 = vrot.slane %v4298, %v4311
  %v4313 = vcombine.low %v4305, %v4312
  %4316 = vst [vmem:[%s67] sm:$0xff] %v4264
  %4317 = vst [vmem:[%s67 + $0x8] sm:$0xff] %v4313
  %v4322 = vcombine.low %v3906, %v3908
  %v4323 = vcombine.low %v3977, %v3979
  %v4325 = vunpack.c.l.s4 1966171168
  %v4326 = vunpack.c.0.s8 %v4325
  %v4327 = vlaneseq
  %v4328 = vshrl.u32 %v4327, 7
  %v4329 = vsub.s32 %v4326, %v4328
  %v4330 = vrot.slane %v4322, %v4329
  %v4332 = vunpack.c.l.s4 1966171168
  %v4333 = vunpack.c.0.s8 %v4332
  %v4334 = vlaneseq
  %v4335 = vshrl.u32 %v4334, 7
  %v4336 = vsub.s32 %v4333, %v4335
  %v4337 = vrot.slane %v4323, %v4336
  %v4338 = vcombine.low %v4330, %v4337
  %v4340 = vunpack.c.l.s4 1966171168
  %v4341 = vunpack.c.0.s8 %v4340
  %v4342 = vlaneseq
  %v4343 = vshrl.u32 %v4342, 7
  %v4344 = vsub.s32 %v4341, %v4343
  %v4345 = vrot.slane %v4338, %v4344
  %v4347 = vlaneseq
  %vm4348 = vcmp.ge.s32.totalorder %v4347, 0
  %vm4349 = vcmp.lt.s32.totalorder %v4347, 512
  %vm4350 = vmand %vm4348, %vm4349
  %4351 = vst.msk [vmem:[%s69] sm:$0xf] %vm4350, %v4345
  %4352 = vst [vmem:[%s71] sm:$0x1] %v4051
  %vm4353 = vcmask 253952
  %4354 = vst.msk [vmem:[%s73] sm:$0x1] %vm4353, %v4197
  // Predicated region
  $region134: #{unsupervised_for_test_forward.1} parent=0 // pred_check
    _
  $region135: #{unsupervised_for_test_forward.1} parent=0 // pred_check_branch
    %4356 = sbr.rel (0) target = $region137
  $region136: #{unsupervised_for_test_forward.1} parent=0 // pred_region
    _
  $region137: #{unsupervised_for_test_forward.1} parent=0 // pred_fallthru
    _
  // Predicated region
  $region138: #{unsupervised_for_test_forward.1} parent=0 // pred_check
    _
  $region139: #{unsupervised_for_test_forward.1} parent=0 // pred_check_branch
    %4358 = sbr.rel (0) target = $region141
  $region140: #{unsupervised_for_test_forward.1} parent=0 // pred_region
    _
  $region141: #{unsupervised_for_test_forward.1} parent=0 // pred_fallthru
    _
  // Predicated region
  $region142: #{unsupervised_for_test_forward.1} parent=0 // pred_check
    _
  $region143: #{unsupervised_for_test_forward.1} parent=0 // pred_check_branch
    %4360 = sbr.rel (0) target = $region145
  $region144: #{unsupervised_for_test_forward.1} parent=0 // pred_region
    _
  $region145: #{unsupervised_for_test_forward.1} parent=0 // pred_fallthru
    _
  // Predicated region
  $region146: #{unsupervised_for_test_forward.1} parent=0 // pred_check
    _
  $region147: #{unsupervised_for_test_forward.1} parent=0 // pred_check_branch
    %4362 = sbr.rel (0) target = $region149
  $region148: #{unsupervised_for_test_forward.1} parent=0 // pred_region
    _
  $region149: #{unsupervised_for_test_forward.1} parent=0 // pred_fallthru
    _
  // Predicated region
  $region150: #{unsupervised_for_test_forward.1} parent=0 // pred_check
    _
  $region151: #{unsupervised_for_test_forward.1} parent=0 // pred_check_branch
    %4364 = sbr.rel (0) target = $region153
  $region152: #{unsupervised_for_test_forward.1} parent=0 // pred_region
    _
  $region153: #{unsupervised_for_test_forward.1} parent=0 // pred_fallthru
    _
  // Predicated region
  $region154: #{unsupervised_for_test_forward.1} parent=0 // pred_check
    _
  $region155: #{unsupervised_for_test_forward.1} parent=0 // pred_check_branch
    %4366 = sbr.rel (0) target = $region157
  $region156: #{unsupervised_for_test_forward.1} parent=0 // pred_region
    _
  $region157: #{unsupervised_for_test_forward.1} parent=0 // pred_fallthru
    _
  // Predicated region
  $region158: #{unsupervised_for_test_forward.1} parent=0 // pred_check
    _
  $region159: #{unsupervised_for_test_forward.1} parent=0 // pred_check_branch
    %4368 = sbr.rel (0) target = $region161
  $region160: #{unsupervised_for_test_forward.1} parent=0 // pred_region
    _
  $region161: #{unsupervised_for_test_forward.1} parent=0 // pred_fallthru
    _
  // Predicated region
  $region162: #{unsupervised_for_test_forward.1} parent=0 // pred_check
    _
  $region163: #{unsupervised_for_test_forward.1} parent=0 // pred_check_branch
    %4370 = sbr.rel (0) target = $region165
  $region164: #{unsupervised_for_test_forward.1} parent=0 // pred_region
    _
  $region165: #{unsupervised_for_test_forward.1} parent=0 // pred_fallthru
    _

</llo_original>
